<compile_context>
chip_gen: v5e
topology: v5e:2x2
jax: 0.10.0
libtpu: 0.0.40
codegen_flags: <defaults>
</compile_context>

<pallas_src>
import math
import numpy as np

import jax
import jax.numpy as jnp
from jax.experimental import pallas as pl
from jax.experimental.pallas import tpu as pltpu

# -------------------- "module parameters" (deterministic, computed in-script) ------------
MAX_DEPTH_REPLACEMENT_VALUE = 10000.0  # only used on the (disabled) hint path
HINT_IN_FRAME = False                  # config.AGENT.POLICY.hint_in_frame
HFOV = 79.0                            # config.ENVIRONMENT.hfov         (unused: hint path off)
FRAME_WIDTH = 160                      # config.ENVIRONMENT.frame_width  (unused: hint path off)

PAD = 10                 # radius of dilate_explored_kernel = skimage.morphology.disk(10)


def _disk(radius):
    """skimage.morphology.disk(radius): 1 where x^2 + y^2 <= radius^2."""
    r = np.arange(-radius, radius + 1)
    yy, xx = np.meshgrid(r, r, indexing="ij")
    return (yy * yy + xx * xx <= radius * radius).astype(np.float32)


def _disk10_groups():
    """Group the 21 row offsets of disk(10) by their horizontal half-width.

    w(dy) = isqrt(100 - dy^2) takes only 7 distinct values: 10, 9, 8, 7, 6, 4, 0.
    Row offsets sharing a width can be summed first (VPU adds of 0/1 rows) and hit the MXU
    with one band contraction per width.  The w == 0 group (dy = +-10) needs no matmul.
    """
    groups = {}
    for dy in range(-PAD, PAD + 1):
        w = math.isqrt(PAD * PAD - dy * dy)
        groups.setdefault(w, []).append(dy)
    mm = tuple(sorted(((w, tuple(dys)) for w, dys in groups.items() if w > 0),
                      reverse=True))
    zero = tuple(groups.get(0, []))
    return mm, zero


_MM_GROUPS, _ZERO_GROUP = _disk10_groups()   # 6 matmul groups + the (-10, 10) add-only group
NG = len(_MM_GROUPS)                         # 6


def _disk10_bands_stacked(M):
    """(NG*M, M) bf16 stacked band matrices, one (M, M) block per distinct width.

    band_w[c, x] = 1 iff |c - x| <= w.  Horizontal zero-padding of the "same" convolution is
    folded into the finite matrix.  Stacking along the contraction dim lets the kernel issue a
    single (M, NG*M) @ (NG*M, M) bf16 matmul that sums all width groups at once (keeps the
    256x256 MXU of v6e/v7x streaming; on v5e it is simply NG sequential 128x128 passes).
    0/1 values are exact in bf16.
    """
    idx = np.arange(M)
    d = np.abs(idx[:, None] - idx[None, :])
    bands = np.zeros((NG * M, M), np.float32)
    for g, (w, _) in enumerate(_MM_GROUPS):
        bands[g * M:(g + 1) * M] = (d <= w).astype(np.float32)
    return jnp.asarray(bands, dtype=jnp.bfloat16)


def _cross3_matrix(M):
    """(M, M) bf16 matrix T with ones on the +-1 off-diagonals.

    T @ img + img @ T + img is the zero-padded "same" convolution with skimage disk(1) (the
    3x3 cross).  bf16 operands with f32 accumulation are exact because the semantic maps this
    policy consumes are binary / small-integer valued (documented assumption).
    """
    idx = np.arange(M)
    return jnp.asarray((np.abs(idx[:, None] - idx[None, :]) == 1).astype(np.float32),
                       dtype=jnp.bfloat16)


# ----------------------------------- Pallas kernel ---------------------------------------
def _policy_kernel(gc_ref, sa_ref, sb_ref,
                   cat_ref, expl_ref, sub_a_ref, sub_b_ref, bands_ref, cross_ref,
                   goal_ref, found_ref,
                   cat_scr, pad_scr, lhs_scr):
    """One grid step == one batch element.

    gc/sa/sb_ref : SMEM (B,) int32     -- scalar-prefetched goal category and subtraction-
                                          channel indices (sa/sb only used by the index_maps)
    cat_ref      : VMEM (1,1,M,M) f32  -- channel (goal_category + 8), via index_map
    expl_ref     : VMEM (1,1,M,M) f32  -- channel 1 (explored map)
    sub_a/b_ref  : VMEM (1,1,M,M) f32  -- goal-dependent subtraction channels, via index_maps
    bands_ref    : VMEM (6*M, M) bf16  -- stacked disk(10) band matrices (constant)
    cross_ref    : VMEM (M, M)   bf16  -- tridiagonal disk(1) matrix (constant)
    goal_ref     : VMEM (1, M, M) f32  -- output goal map
    found_ref    : VMEM (1, 1, 128)    -- found_goal flag broadcast across one lane row
    cat_scr      : VMEM (M, M) f32     -- working category map (written inside pl.when)
    pad_scr      : VMEM (M+2*PAD, M) bf16 -- vertically zero-padded image for the disk(10) conv
    lhs_scr      : VMEM (M, 6*M) bf16  -- grouped row sums staged for the wide matmul
    """
    del sa_ref, sb_ref                       # consumed by the index_maps only
    e = pl.program_id(0)
    gc = gc_ref[e]
    M = goal_ref.shape[1]

    cross = cross_ref[...]                   # (M, M) bf16

    def conv_cross3(img):
        # "same" conv with disk(1) (3x3 cross), zero padding, via two tridiagonal matmuls.
        # bf16 operands / f32 accumulation: exact for binary / small-integer maps.
        b = img.astype(jnp.bfloat16)
        return (img
                + jnp.dot(cross, b, preferred_element_type=jnp.float32)
                + jnp.dot(b, cross, preferred_element_type=jnp.float32))

    # ------------------- reach_goal_if_in_map -------------------
    cat = cat_ref[0, 0]                      # map_features[e, gc + 8]
    cat_scr[...] = cat                       # default: category map unmodified

    @pl.when((gc == 0) | (gc == 1) | (gc == 3))
    def _():
        # Goal-dependent channel subtraction.  sub_a is ch8 (gc==1) or ch9 (gc in {0,3}) and
        # is always subtracted in this branch; sub_b (ch11) only for gc in {0,1}.
        w_b = ((gc == 0) | (gc == 1)).astype(jnp.float32)   # scalar weight
        sub = (sub_a_ref[0, 0] == 1.0).astype(jnp.float32) \
            + w_b * (sub_b_ref[0, 0] == 1.0).astype(jnp.float32)
        cat_mod = cat - sub
        # binary_denoising = binary opening = erosion then dilation with disk(1)
        eroded = 1.0 - jnp.clip(conv_cross3(1.0 - cat_mod), 0.0, 1.0)
        opened = jnp.clip(conv_cross3(eroded), 0.0, 1.0)
        # modifications only apply if the goal was initially present in the map
        init_f = jnp.max(jnp.max((cat == 1.0).astype(jnp.float32),
                                 axis=1, keepdims=True), axis=0, keepdims=True)
        cat_scr[...] = jnp.where(jnp.broadcast_to(init_f, (M, M)) > 0.0, opened, cat)

    goal_cand = (cat_scr[...] == 1.0).astype(jnp.float32)
    found_f = jnp.max(jnp.max(goal_cand, axis=1, keepdims=True),
                      axis=0, keepdims=True)               # (1, 1) found_goal flag in {0., 1.}

    # ------------------- explore_otherwise (frontier exploration) -------------------
    # frontier0 = (explored == 0); we need conv_disk10(1 - frontier0) = conv_disk10(explored!=0)
    inv = (expl_ref[0, 0] != 0.0).astype(jnp.bfloat16)      # binary -> exact in bf16
    # Vertical zero padding (re-written every step: grid axis is "parallel").
    pad_scr[0:PAD, :] = jnp.zeros((PAD, M), pad_scr.dtype)
    pad_scr[PAD + M:PAD + M + PAD, :] = jnp.zeros((PAD, M), pad_scr.dtype)
    pad_scr[PAD:PAD + M, :] = inv

    # disk(10) "same" conv: sum row offsets sharing a band width (static, fully unrolled),
    # stage the 6 group sums side by side, then contract all of them with one wide bf16 matmul.
    for g, (_, dys) in enumerate(_MM_GROUPS):
        acc = pad_scr[PAD + dys[0]:PAD + dys[0] + M, :]
        for dy in dys[1:]:
            acc = acc + pad_scr[PAD + dy:PAD + dy + M, :]
        lhs_scr[:, g * M:(g + 1) * M] = acc
    conv10 = jnp.dot(lhs_scr[...], bands_ref[...], preferred_element_type=jnp.float32)
    for dy in _ZERO_GROUP:                                  # width-0 rows: plain adds, no matmul
        conv10 = conv10 + pad_scr[PAD + dy:PAD + dy + M, :].astype(jnp.float32)

    # 1 - binary_dilation(1 - frontier, disk(10))
    frontier1 = 1.0 - jnp.clip(conv10, 0.0, 1.0)
    # binary_dilation(frontier, disk(1)) - frontier  -> frontier border
    frontier = jnp.clip(conv_cross3(frontier1), 0.0, 1.0) - frontier1

    # found_hint is always False (hint_in_frame=False): final goal map is the goal candidate
    # if the goal was found in the map, else the frontier.
    goal_ref[0] = jnp.where(jnp.broadcast_to(found_f, (M, M)) > 0.0, goal_cand, frontier)
    found_ref[0] = jnp.broadcast_to(found_f, (1, 128))


# ----------------------------------- wrapper ----------------------------------------------
def policy_forward(map_features, local_pose, goal_category, obs):
    """Mirrors Policy.forward(map_features, local_pose, goal_category, obs)."""
    del local_pose, obs  # only used by the (disabled) hint_in_frame branch
    B, C, M, _ = map_features.shape
    mf = map_features if map_features.dtype == jnp.float32 else map_features.astype(jnp.float32)
    gc = goal_category.astype(jnp.int32)
    # Goal-dependent subtraction channels, resolved host-side and scalar-prefetched:
    #   gc==1 -> subtract ch8 & ch11 ; gc==0 -> ch9 & ch11 ; gc==3 -> ch9 (others: unused).
    sub_a = jnp.where(gc == 1, 8, 9).astype(jnp.int32)
    sub_b = jnp.where((gc == 0) | (gc == 1), 11, 9).astype(jnp.int32)

    bands = _disk10_bands_stacked(M)   # (6*M, M) bf16, constant
    cross = _cross3_matrix(M)          # (M, M)   bf16, constant

    goal_map, found_f = pl.pallas_call(
        _policy_kernel,
        out_shape=(
            jax.ShapeDtypeStruct((B, M, M), jnp.float32),
            jax.ShapeDtypeStruct((B, 1, 128), jnp.float32),
        ),
        grid_spec=pltpu.PrefetchScalarGridSpec(
            num_scalar_prefetch=3,
            grid=(B,),
            in_specs=[
                # goal-category channel selected via scalar-prefetched index
                pl.BlockSpec((1, 1, M, M), lambda e, gcr, sar, sbr: (e, gcr[e] + 8, 0, 0)),
                # explored map (channel 1)
                pl.BlockSpec((1, 1, M, M), lambda e, gcr, sar, sbr: (e, 1, 0, 0)),
                # only the two goal-dependent subtraction channels actually needed
                pl.BlockSpec((1, 1, M, M), lambda e, gcr, sar, sbr: (e, sar[e], 0, 0)),
                pl.BlockSpec((1, 1, M, M), lambda e, gcr, sar, sbr: (e, sbr[e], 0, 0)),
                # precomputed constant operands (same block every step -> fetched once)
                pl.BlockSpec((NG * M, M), lambda e, gcr, sar, sbr: (0, 0)),
                pl.BlockSpec((M, M), lambda e, gcr, sar, sbr: (0, 0)),
            ],
            out_specs=[
                pl.BlockSpec((1, M, M), lambda e, gcr, sar, sbr: (e, 0, 0)),
                pl.BlockSpec((1, 1, 128), lambda e, gcr, sar, sbr: (e, 0, 0)),
            ],
            scratch_shapes=[
                pltpu.VMEM((M, M), jnp.float32),              # working category map
                pltpu.VMEM((M + 2 * PAD, M), jnp.bfloat16),   # vertically padded image
                pltpu.VMEM((M, NG * M), jnp.bfloat16),        # grouped row sums for wide matmul
            ],
        ),
        compiler_params=pltpu.CompilerParams(dimension_semantics=("parallel",)),
    )(gc, sub_a, sub_b, mf, mf, mf, mf, bands, cross)

    found_goal = found_f[:, 0, 0] > 0.0
    found_hint = jnp.zeros((B,), dtype=jnp.bool_)
    # TODO(synk): hint_in_frame=True path (median of nonzero frame columns, draw_line,
    # data-dependent prints) is host-side / data-dependent and not translated to Pallas.
    return goal_map, found_goal, found_hint


# ------------------------------ pure-JAX reference ----------------------------------------
def _ref_forward(map_features, goal_category):
    disk1 = jnp.asarray(_disk(1))
    disk10 = jnp.asarray(_disk(10))

    def conv(img, k):
        return jax.lax.conv_general_dilated(
            img[None, None], k[None, None], window_strides=(1, 1), padding="SAME",
            dimension_numbers=("NCHW", "OIHW", "NCHW"),
            precision=jax.lax.Precision.HIGHEST)[0, 0]

    def dilation(x, k):
        return jnp.clip(conv(x, k), 0.0, 1.0)

    def erosion(x, k):
        return 1.0 - jnp.clip(conv(1.0 - x, k), 0.0, 1.0)

    B = map_features.shape[0]
    goal_maps, found_goals = [], []
    for e in range(B):
        gcv = int(goal_category[e])
        cat = map_features[e, gcv + 8]
        has_initial = jnp.sum((cat == 1.0).astype(jnp.float32)) > 0
        sub = jnp.zeros_like(cat)
        if gcv == 1:
            sub = (map_features[e, 8] == 1.0).astype(jnp.float32) + \
                  (map_features[e, 11] == 1.0).astype(jnp.float32)
        elif gcv == 3:
            sub = (map_features[e, 9] == 1.0).astype(jnp.float32)
        elif gcv == 0:
            sub = (map_features[e, 9] == 1.0).astype(jnp.float32) + \
                  (map_features[e, 11] == 1.0).astype(jnp.float32)
        cat_mod = cat - sub
        if gcv in (0, 1, 3):
            cat_mod = dilation(erosion(cat_mod, disk1), disk1)   # binary opening
        cat_final = jnp.where(has_initial, cat_mod, cat)
        found = jnp.sum((cat_final == 1.0).astype(jnp.float32)) > 0
        goal_cand = (cat_final == 1.0).astype(jnp.float32)

        fr0 = (map_features[e, 1] == 0.0).astype(jnp.float32)
        fr1 = 1.0 - dilation(1.0 - fr0, disk10)
        fr = dilation(fr1, disk1) - fr1

        goal_maps.append(jnp.where(found, goal_cand, fr))
        found_goals.append(found)
    return jnp.stack(goal_maps), jnp.stack(found_goals)


# --------------------------------------- main ---------------------------------------------
if __name__ == "__main__":
    key = jax.random.PRNGKey(0)
    B, num_sem, M = 3, 6, 128
    C = 8 + num_sem

    mf = jnp.zeros((B, C, M, M), jnp.float32)

    # channel 1 = explored map: binary blob restricted to the central square
    k1, _ = jax.random.split(key)
    explored = (jax.random.uniform(k1, (B, M, M)) > 0.3).astype(jnp.float32)
    yy, xx = jnp.meshgrid(jnp.arange(M), jnp.arange(M), indexing="ij")
    center = ((yy > 32) & (yy < 96) & (xx > 32) & (xx < 96)).astype(jnp.float32)
    mf = mf.at[:, 1].set(explored * center[None])

    # batch 0: goal category 1 -> goal in ch9, subtract ch8 & ch11, denoise path
    # batch 1: goal category 2 -> semantic channel 10 empty -> frontier-exploration path
    # batch 2: goal category 0 -> goal in ch8, subtract ch9 & ch11, denoise path
    goal_category = jnp.array([1, 2, 0], dtype=jnp.int32)
    mf = mf.at[0, 9, 50:60, 50:60].set(1.0)
    mf = mf.at[0, 8, 50:53, 50:60].set(1.0)
    mf = mf.at[2, 8, 70:80, 70:80].set(1.0)
    mf = mf.at[2, 9, 70:74, 70:80].set(1.0)
    mf = mf.at[2, 11, 70:80, 70:73].set(1.0)

    local_pose = jnp.zeros((B, 3), jnp.float32)
    obs = jnp.zeros((B, 3 + 1 + num_sem, 16, 16), jnp.float32)   # unused (hint path disabled)

    goal_map, found_goal, found_hint = policy_forward(mf, local_pose, goal_category, obs)
    goal_map = jax.block_until_ready(goal_map)
    found_goal = jax.block_until_ready(found_goal)
    found_hint = jax.block_until_ready(found_hint)

    ref_goal, ref_found = _ref_forward(mf, goal_category)
    np.testing.assert_allclose(np.asarray(goal_map), np.asarray(ref_goal), atol=1e-5)
    assert np.array_equal(np.asarray(found_goal), np.asarray(ref_found))
    assert not bool(np.any(np.asarray(found_hint)))

    print("KERNEL_OK")
</pallas_src>

<mosaic_0001>
module attributes {stable_mosaic.version = 11 : i64} {
  func.func @_policy_kernel(%arg0: i32, %arg1: memref<3xi32, #tpu.memory_space<smem>>, %arg2: memref<3xi32, #tpu.memory_space<smem>>, %arg3: memref<3xi32, #tpu.memory_space<smem>>, %arg4: memref<1x1x128x128xf32, #tpu.memory_space<vmem>>, %arg5: memref<1x1x128x128xf32, #tpu.memory_space<vmem>>, %arg6: memref<1x1x128x128xf32, #tpu.memory_space<vmem>>, %arg7: memref<1x1x128x128xf32, #tpu.memory_space<vmem>>, %arg8: memref<768x128xbf16, #tpu.memory_space<vmem>>, %arg9: memref<128x128xbf16, #tpu.memory_space<vmem>>, %arg10: memref<1x128x128xf32, #tpu.memory_space<vmem>>, %arg11: memref<1x1x128xf32, #tpu.memory_space<vmem>>, %arg12: memref<128x128xf32, #tpu.memory_space<vmem>>, %arg13: memref<148x128xbf16, #tpu.memory_space<vmem>>, %arg14: memref<128x768xbf16, #tpu.memory_space<vmem>>) attributes {dimension_semantics = [#tpu.dimension_semantics<parallel>], iteration_bounds = array<i64: 3>, scalar_prefetch = 3 : i64, scratch_operands = 3 : i64, tpu.core_type = #tpu.core_type<tc>, window_params = [{transform_indices = @transform_0, window_bounds = array<i64: 1, 1, 128, 128>}, {transform_indices = @transform_1, window_bounds = array<i64: 1, 1, 128, 128>}, {transform_indices = @transform_2, window_bounds = array<i64: 1, 1, 128, 128>}, {transform_indices = @transform_3, window_bounds = array<i64: 1, 1, 128, 128>}, {pipeline_mode = #tpu.pipeline_mode<synchronous>, transform_indices = @transform_4, window_bounds = array<i64: 768, 128>}, {pipeline_mode = #tpu.pipeline_mode<synchronous>, transform_indices = @transform_5, window_bounds = array<i64: 128, 128>}, {transform_indices = @transform_6, window_bounds = array<i64: 1, 128, 128>}, {transform_indices = @transform_7, window_bounds = array<i64: 1, 1, 128>}]} {
    %0 = arith.index_cast %arg0 : i32 to index
    %1 = memref.load %arg1[%0] : memref<3xi32, #tpu.memory_space<smem>>
    %c0 = arith.constant 0 : index
    %c0_0 = arith.constant 0 : index
    %2 = vector.load %arg9[%c0, %c0_0] : memref<128x128xbf16, #tpu.memory_space<vmem>>, vector<128x128xbf16>
    %c0_1 = arith.constant 0 : index
    %c0_2 = arith.constant 0 : index
    %c0_3 = arith.constant 0 : index
    %c0_4 = arith.constant 0 : index
    %3 = vector.load %arg4[%c0_1, %c0_2, %c0_3, %c0_4] : memref<1x1x128x128xf32, #tpu.memory_space<vmem>>, vector<1x1x128x128xf32>
    %4 = vector.shape_cast %3 : vector<1x1x128x128xf32> to vector<128x128xf32>
    %c0_5 = arith.constant 0 : index
    %c0_6 = arith.constant 0 : index
    %5 = vector.load %arg12[%c0_5, %c0_6] : memref<128x128xf32, #tpu.memory_space<vmem>>, vector<128x128xf32>
    tpu.vector_store %arg12[%c0_5, %c0_6], %4 {strides = array<i32>} : memref<128x128xf32, #tpu.memory_space<vmem>>, vector<128x128xf32>,
    %c0_i32 = arith.constant 0 : i32
    %6 = arith.cmpi eq, %1, %c0_i32 : i32
    %c1_i32 = arith.constant 1 : i32
    %7 = arith.cmpi eq, %1, %c1_i32 : i32
    %8 = arith.ori %6, %7 : i1
    %c3_i32 = arith.constant 3 : i32
    %9 = arith.cmpi eq, %1, %c3_i32 : i32
    %10 = arith.ori %8, %9 : i1
    %11 = arith.extui %10 : i1 to i32
    %c0_i32_7 = arith.constant 0 : i32
    %12 = arith.cmpi ne, %11, %c0_i32_7 : i32
    scf.if %12 {
      %c0_i32_72 = arith.constant 0 : i32
      %110 = arith.cmpi eq, %1, %c0_i32_72 : i32
      %c1_i32_73 = arith.constant 1 : i32
      %111 = arith.cmpi eq, %1, %c1_i32_73 : i32
      %112 = arith.ori %110, %111 : i1
      %113 = arith.extui %112 : i1 to i32
      %114 = arith.sitofp %113 : i32 to f32
      %c0_74 = arith.constant 0 : index
      %c0_75 = arith.constant 0 : index
      %c0_76 = arith.constant 0 : index
      %c0_77 = arith.constant 0 : index
      %115 = vector.load %arg6[%c0_74, %c0_75, %c0_76, %c0_77] : memref<1x1x128x128xf32, #tpu.memory_space<vmem>>, vector<1x1x128x128xf32>
      %116 = vector.shape_cast %115 : vector<1x1x128x128xf32> to vector<128x128xf32>
      %cst_78 = arith.constant 1.000000e+00 : f32
      %117 = vector.broadcast %cst_78 : f32 to vector<128x128xf32>
      %118 = arith.cmpf oeq, %116, %117 : vector<128x128xf32>
      %119 = arith.extui %118 : vector<128x128xi1> to vector<128x128xi32>
      %120 = arith.sitofp %119 : vector<128x128xi32> to vector<128x128xf32>
      %c0_79 = arith.constant 0 : index
      %c0_80 = arith.constant 0 : index
      %c0_81 = arith.constant 0 : index
      %c0_82 = arith.constant 0 : index
      %121 = vector.load %arg7[%c0_79, %c0_80, %c0_81, %c0_82] : memref<1x1x128x128xf32, #tpu.memory_space<vmem>>, vector<1x1x128x128xf32>
      %122 = vector.shape_cast %121 : vector<1x1x128x128xf32> to vector<128x128xf32>
      %cst_83 = arith.constant 1.000000e+00 : f32
      %123 = vector.broadcast %cst_83 : f32 to vector<128x128xf32>
      %124 = arith.cmpf oeq, %122, %123 : vector<128x128xf32>
      %125 = arith.extui %124 : vector<128x128xi1> to vector<128x128xi32>
      %126 = arith.sitofp %125 : vector<128x128xi32> to vector<128x128xf32>
      %127 = vector.broadcast %114 : f32 to vector<128x128xf32>
      %128 = arith.mulf %127, %126 : vector<128x128xf32>
      %129 = arith.addf %120, %128 : vector<128x128xf32>
      %130 = arith.subf %4, %129 : vector<128x128xf32>
      %cst_84 = arith.constant 1.000000e+00 : f32
      %131 = vector.broadcast %cst_84 : f32 to vector<128x128xf32>
      %132 = arith.subf %131, %130 : vector<128x128xf32>
      %133 = arith.truncf %132 : vector<128x128xf32> to vector<128x128xbf16>
      %cst_85 = arith.constant dense<0.000000e+00> : vector<128x128xf32>
      %134 = tpu.matmul %2, %133, %cst_85 {dimension_numbers = #tpu.dot_dimension_numbers<[1], [0], [0], [1], [0, 0, 1, 1], [], []>} : vector<128x128xbf16>, vector<128x128xbf16>, vector<128x128xf32> -> vector<128x128xf32>
      %135 = arith.addf %132, %134 : vector<128x128xf32>
      %cst_86 = arith.constant dense<0.000000e+00> : vector<128x128xf32>
      %136 = tpu.matmul %133, %2, %cst_86 {dimension_numbers = #tpu.dot_dimension_numbers<[1], [0], [0], [1], [0, 0, 1, 1], [], []>} : vector<128x128xbf16>, vector<128x128xbf16>, vector<128x128xf32> -> vector<128x128xf32>
      %137 = arith.addf %135, %136 : vector<128x128xf32>
      %cst_87 = arith.constant 0.000000e+00 : f32
      %cst_88 = arith.constant 1.000000e+00 : f32
      %138 = vector.broadcast %cst_87 : f32 to vector<128x128xf32>
      %139 = arith.maximumf %138, %137 : vector<128x128xf32>
      %140 = vector.broadcast %cst_88 : f32 to vector<128x128xf32>
      %141 = arith.minimumf %140, %139 : vector<128x128xf32>
      %cst_89 = arith.constant 1.000000e+00 : f32
      %142 = vector.broadcast %cst_89 : f32 to vector<128x128xf32>
      %143 = arith.subf %142, %141 : vector<128x128xf32>
      %144 = arith.truncf %143 : vector<128x128xf32> to vector<128x128xbf16>
      %cst_90 = arith.constant dense<0.000000e+00> : vector<128x128xf32>
      %145 = tpu.matmul %2, %144, %cst_90 {dimension_numbers = #tpu.dot_dimension_numbers<[1], [0], [0], [1], [0, 0, 1, 1], [], []>} : vector<128x128xbf16>, vector<128x128xbf16>, vector<128x128xf32> -> vector<128x128xf32>
      %146 = arith.addf %143, %145 : vector<128x128xf32>
      %cst_91 = arith.constant dense<0.000000e+00> : vector<128x128xf32>
      %147 = tpu.matmul %144, %2, %cst_91 {dimension_numbers = #tpu.dot_dimension_numbers<[1], [0], [0], [1], [0, 0, 1, 1], [], []>} : vector<128x128xbf16>, vector<128x128xbf16>, vector<128x128xf32> -> vector<128x128xf32>
      %148 = arith.addf %146, %147 : vector<128x128xf32>
      %cst_92 = arith.constant 0.000000e+00 : f32
      %cst_93 = arith.constant 1.000000e+00 : f32
      %149 = vector.broadcast %cst_92 : f32 to vector<128x128xf32>
      %150 = arith.maximumf %149, %148 : vector<128x128xf32>
      %151 = vector.broadcast %cst_93 : f32 to vector<128x128xf32>
      %152 = arith.minimumf %151, %150 : vector<128x128xf32>
      %cst_94 = arith.constant 1.000000e+00 : f32
      %153 = vector.broadcast %cst_94 : f32 to vector<128x128xf32>
      %154 = arith.cmpf oeq, %4, %153 : vector<128x128xf32>
      %155 = arith.extui %154 : vector<128x128xi1> to vector<128x128xi32>
      %156 = arith.sitofp %155 : vector<128x128xi32> to vector<128x128xf32>
      %cst_95 = arith.constant dense<0xFF800000> : vector<128xf32>
      %157 = vector.multi_reduction <maximumf>, %156, %cst_95 [1] : vector<128x128xf32> to vector<128xf32>
      %158 = vector.shape_cast %157 : vector<128xf32> to vector<128x1xf32>
      %cst_96 = arith.constant dense<0xFF800000> : vector<1xf32>
      %159 = vector.multi_reduction <maximumf>, %158, %cst_96 [0] : vector<128x1xf32> to vector<1xf32>
      %160 = vector.shape_cast %159 : vector<1xf32> to vector<1x1xf32>
      %161 = vector.shape_cast %160 : vector<1x1xf32> to vector<1x1xf32>
      %162 = vector.broadcast %161 : vector<1x1xf32> to vector<128x128xf32>
      %cst_97 = arith.constant 0.000000e+00 : f32
      %163 = vector.broadcast %cst_97 : f32 to vector<128x128xf32>
      %164 = arith.cmpf ogt, %162, %163 : vector<128x128xf32>
      %165 = arith.select %164, %152, %4 : vector<128x128xi1>, vector<128x128xf32>
      %c0_98 = arith.constant 0 : index
      %c0_99 = arith.constant 0 : index
      %166 = vector.load %arg12[%c0_98, %c0_99] : memref<128x128xf32, #tpu.memory_space<vmem>>, vector<128x128xf32>
      tpu.vector_store %arg12[%c0_98, %c0_99], %165 {strides = array<i32>} : memref<128x128xf32, #tpu.memory_space<vmem>>, vector<128x128xf32>,
    } else {
    }
    %c0_8 = arith.constant 0 : index
    %c0_9 = arith.constant 0 : index
    %13 = vector.load %arg12[%c0_8, %c0_9] : memref<128x128xf32, #tpu.memory_space<vmem>>, vector<128x128xf32>
    %cst = arith.constant 1.000000e+00 : f32
    %14 = vector.broadcast %cst : f32 to vector<128x128xf32>
    %15 = arith.cmpf oeq, %13, %14 : vector<128x128xf32>
    %16 = arith.extui %15 : vector<128x128xi1> to vector<128x128xi32>
    %17 = arith.sitofp %16 : vector<128x128xi32> to vector<128x128xf32>
    %cst_10 = arith.constant dense<0xFF800000> : vector<128xf32>
    %18 = vector.multi_reduction <maximumf>, %17, %cst_10 [1] : vector<128x128xf32> to vector<128xf32>
    %19 = vector.shape_cast %18 : vector<128xf32> to vector<128x1xf32>
    %cst_11 = arith.constant dense<0xFF800000> : vector<1xf32>
    %20 = vector.multi_reduction <maximumf>, %19, %cst_11 [0] : vector<128x1xf32> to vector<1xf32>
    %21 = vector.shape_cast %20 : vector<1xf32> to vector<1x1xf32>
    %c0_12 = arith.constant 0 : index
    %c0_13 = arith.constant 0 : index
    %c0_14 = arith.constant 0 : index
    %c0_15 = arith.constant 0 : index
    %22 = vector.load %arg5[%c0_12, %c0_13, %c0_14, %c0_15] : memref<1x1x128x128xf32, #tpu.memory_space<vmem>>, vector<1x1x128x128xf32>
    %23 = vector.shape_cast %22 : vector<1x1x128x128xf32> to vector<128x128xf32>
    %cst_16 = arith.constant 0.000000e+00 : f32
    %24 = vector.broadcast %cst_16 : f32 to vector<128x128xf32>
    %25 = arith.cmpf one, %23, %24 : vector<128x128xf32>
    %26 = arith.extui %25 : vector<128x128xi1> to vector<128x128xi32>
    %27 = arith.sitofp %26 : vector<128x128xi32> to vector<128x128xf32>
    %28 = arith.truncf %27 : vector<128x128xf32> to vector<128x128xbf16>
    %cst_17 = arith.constant 0.000000e+00 : bf16
    %29 = vector.broadcast %cst_17 : bf16 to vector<10x128xbf16>
    %c0_18 = arith.constant 0 : index
    %c0_19 = arith.constant 0 : index
    %30 = vector.load %arg13[%c0_18, %c0_19] : memref<148x128xbf16, #tpu.memory_space<vmem>>, vector<10x128xbf16>
    tpu.vector_store %arg13[%c0_18, %c0_19], %29 {strides = array<i32>} : memref<148x128xbf16, #tpu.memory_space<vmem>>, vector<10x128xbf16>,
    %cst_20 = arith.constant 0.000000e+00 : bf16
    %31 = vector.broadcast %cst_20 : bf16 to vector<10x128xbf16>
    %c138 = arith.constant 138 : index
    %c0_21 = arith.constant 0 : index
    %32 = vector.load %arg13[%c138, %c0_21] : memref<148x128xbf16, #tpu.memory_space<vmem>>, vector<10x128xbf16>
    tpu.vector_store %arg13[%c138, %c0_21], %31 {strides = array<i32>} : memref<148x128xbf16, #tpu.memory_space<vmem>>, vector<10x128xbf16>,
    %c10 = arith.constant 10 : index
    %c0_22 = arith.constant 0 : index
    %33 = vector.load %arg13[%c10, %c0_22] : memref<148x128xbf16, #tpu.memory_space<vmem>>, vector<128x128xbf16>
    tpu.vector_store %arg13[%c10, %c0_22], %28 {strides = array<i32>} : memref<148x128xbf16, #tpu.memory_space<vmem>>, vector<128x128xbf16>,
    %c10_23 = arith.constant 10 : index
    %c0_24 = arith.constant 0 : index
    %34 = vector.load %arg13[%c10_23, %c0_24] : memref<148x128xbf16, #tpu.memory_space<vmem>>, vector<128x128xbf16>
    %c0_25 = arith.constant 0 : index
    %c0_26 = arith.constant 0 : index
    %35 = vector.load %arg14[%c0_25, %c0_26] : memref<128x768xbf16, #tpu.memory_space<vmem>>, vector<128x128xbf16>
    tpu.vector_store %arg14[%c0_25, %c0_26], %34 {strides = array<i32>} : memref<128x768xbf16, #tpu.memory_space<vmem>>, vector<128x128xbf16>,
    %c6 = arith.constant 6 : index
    %c0_27 = arith.constant 0 : index
    %36 = vector.load %arg13[%c6, %c0_27] : memref<148x128xbf16, #tpu.memory_space<vmem>>, vector<128x128xbf16>
    %c7 = arith.constant 7 : index
    %c0_28 = arith.constant 0 : index
    %37 = vector.load %arg13[%c7, %c0_28] : memref<148x128xbf16, #tpu.memory_space<vmem>>, vector<128x128xbf16>
    %38 = arith.addf %36, %37 : vector<128x128xbf16>
    %c8 = arith.constant 8 : index
    %c0_29 = arith.constant 0 : index
    %39 = vector.load %arg13[%c8, %c0_29] : memref<148x128xbf16, #tpu.memory_space<vmem>>, vector<128x128xbf16>
    %40 = arith.addf %38, %39 : vector<128x128xbf16>
    %c9 = arith.constant 9 : index
    %c0_30 = arith.constant 0 : index
    %41 = vector.load %arg13[%c9, %c0_30] : memref<148x128xbf16, #tpu.memory_space<vmem>>, vector<128x128xbf16>
    %42 = arith.addf %40, %41 : vector<128x128xbf16>
    %c11 = arith.constant 11 : index
    %c0_31 = arith.constant 0 : index
    %43 = vector.load %arg13[%c11, %c0_31] : memref<148x128xbf16, #tpu.memory_space<vmem>>, vector<128x128xbf16>
    %44 = arith.addf %42, %43 : vector<128x128xbf16>
    %c12 = arith.constant 12 : index
    %c0_32 = arith.constant 0 : index
    %45 = vector.load %arg13[%c12, %c0_32] : memref<148x128xbf16, #tpu.memory_space<vmem>>, vector<128x128xbf16>
    %46 = arith.addf %44, %45 : vector<128x128xbf16>
    %c13 = arith.constant 13 : index
    %c0_33 = arith.constant 0 : index
    %47 = vector.load %arg13[%c13, %c0_33] : memref<148x128xbf16, #tpu.memory_space<vmem>>, vector<128x128xbf16>
    %48 = arith.addf %46, %47 : vector<128x128xbf16>
    %c14 = arith.constant 14 : index
    %c0_34 = arith.constant 0 : index
    %49 = vector.load %arg13[%c14, %c0_34] : memref<148x128xbf16, #tpu.memory_space<vmem>>, vector<128x128xbf16>
    %50 = arith.addf %48, %49 : vector<128x128xbf16>
    %c0_35 = arith.constant 0 : index
    %c128 = arith.constant 128 : index
    %51 = vector.load %arg14[%c0_35, %c128] : memref<128x768xbf16, #tpu.memory_space<vmem>>, vector<128x128xbf16>
    tpu.vector_store %arg14[%c0_35, %c128], %50 {strides = array<i32>} : memref<128x768xbf16, #tpu.memory_space<vmem>>, vector<128x128xbf16>,
    %c4 = arith.constant 4 : index
    %c0_36 = arith.constant 0 : index
    %52 = vector.load %arg13[%c4, %c0_36] : memref<148x128xbf16, #tpu.memory_space<vmem>>, vector<128x128xbf16>
    %c5 = arith.constant 5 : index
    %c0_37 = arith.constant 0 : index
    %53 = vector.load %arg13[%c5, %c0_37] : memref<148x128xbf16, #tpu.memory_space<vmem>>, vector<128x128xbf16>
    %54 = arith.addf %52, %53 : vector<128x128xbf16>
    %c15 = arith.constant 15 : index
    %c0_38 = arith.constant 0 : index
    %55 = vector.load %arg13[%c15, %c0_38] : memref<148x128xbf16, #tpu.memory_space<vmem>>, vector<128x128xbf16>
    %56 = arith.addf %54, %55 : vector<128x128xbf16>
    %c16 = arith.constant 16 : index
    %c0_39 = arith.constant 0 : index
    %57 = vector.load %arg13[%c16, %c0_39] : memref<148x128xbf16, #tpu.memory_space<vmem>>, vector<128x128xbf16>
    %58 = arith.addf %56, %57 : vector<128x128xbf16>
    %c0_40 = arith.constant 0 : index
    %c256 = arith.constant 256 : index
    %59 = vector.load %arg14[%c0_40, %c256] : memref<128x768xbf16, #tpu.memory_space<vmem>>, vector<128x128xbf16>
    tpu.vector_store %arg14[%c0_40, %c256], %58 {strides = array<i32>} : memref<128x768xbf16, #tpu.memory_space<vmem>>, vector<128x128xbf16>,
    %c3 = arith.constant 3 : index
    %c0_41 = arith.constant 0 : index
    %60 = vector.load %arg13[%c3, %c0_41] : memref<148x128xbf16, #tpu.memory_space<vmem>>, vector<128x128xbf16>
    %c17 = arith.constant 17 : index
    %c0_42 = arith.constant 0 : index
    %61 = vector.load %arg13[%c17, %c0_42] : memref<148x128xbf16, #tpu.memory_space<vmem>>, vector<128x128xbf16>
    %62 = arith.addf %60, %61 : vector<128x128xbf16>
    %c0_43 = arith.constant 0 : index
    %c384 = arith.constant 384 : index
    %63 = vector.load %arg14[%c0_43, %c384] : memref<128x768xbf16, #tpu.memory_space<vmem>>, vector<128x128xbf16>
    tpu.vector_store %arg14[%c0_43, %c384], %62 {strides = array<i32>} : memref<128x768xbf16, #tpu.memory_space<vmem>>, vector<128x128xbf16>,
    %c2 = arith.constant 2 : index
    %c0_44 = arith.constant 0 : index
    %64 = vector.load %arg13[%c2, %c0_44] : memref<148x128xbf16, #tpu.memory_space<vmem>>, vector<128x128xbf16>
    %c18 = arith.constant 18 : index
    %c0_45 = arith.constant 0 : index
    %65 = vector.load %arg13[%c18, %c0_45] : memref<148x128xbf16, #tpu.memory_space<vmem>>, vector<128x128xbf16>
    %66 = arith.addf %64, %65 : vector<128x128xbf16>
    %c0_46 = arith.constant 0 : index
    %c512 = arith.constant 512 : index
    %67 = vector.load %arg14[%c0_46, %c512] : memref<128x768xbf16, #tpu.memory_space<vmem>>, vector<128x128xbf16>
    tpu.vector_store %arg14[%c0_46, %c512], %66 {strides = array<i32>} : memref<128x768xbf16, #tpu.memory_space<vmem>>, vector<128x128xbf16>,
    %c1 = arith.constant 1 : index
    %c0_47 = arith.constant 0 : index
    %68 = vector.load %arg13[%c1, %c0_47] : memref<148x128xbf16, #tpu.memory_space<vmem>>, vector<128x128xbf16>
    %c19 = arith.constant 19 : index
    %c0_48 = arith.constant 0 : index
    %69 = vector.load %arg13[%c19, %c0_48] : memref<148x128xbf16, #tpu.memory_space<vmem>>, vector<128x128xbf16>
    %70 = arith.addf %68, %69 : vector<128x128xbf16>
    %c0_49 = arith.constant 0 : index
    %c640 = arith.constant 640 : index
    %71 = vector.load %arg14[%c0_49, %c640] : memref<128x768xbf16, #tpu.memory_space<vmem>>, vector<128x128xbf16>
    tpu.vector_store %arg14[%c0_49, %c640], %70 {strides = array<i32>} : memref<128x768xbf16, #tpu.memory_space<vmem>>, vector<128x128xbf16>,
    %c0_50 = arith.constant 0 : index
    %c0_51 = arith.constant 0 : index
    %72 = vector.load %arg14[%c0_50, %c0_51] : memref<128x768xbf16, #tpu.memory_space<vmem>>, vector<128x768xbf16>
    %c0_52 = arith.constant 0 : index
    %c0_53 = arith.constant 0 : index
    %73 = vector.load %arg8[%c0_52, %c0_53] : memref<768x128xbf16, #tpu.memory_space<vmem>>, vector<768x128xbf16>
    %cst_54 = arith.constant dense<0.000000e+00> : vector<128x128xf32>
    %74 = tpu.matmul %72, %73, %cst_54 {dimension_numbers = #tpu.dot_dimension_numbers<[1], [0], [0], [1], [0, 0, 1, 1], [], []>} : vector<128x768xbf16>, vector<768x128xbf16>, vector<128x128xf32> -> vector<128x128xf32>
    %c0_55 = arith.constant 0 : index
    %c0_56 = arith.constant 0 : index
    %75 = vector.load %arg13[%c0_55, %c0_56] : memref<148x128xbf16, #tpu.memory_space<vmem>>, vector<128x128xbf16>
    %76 = arith.extf %75 : vector<128x128xbf16> to vector<128x128xf32>
    %77 = arith.addf %74, %76 : vector<128x128xf32>
    %c20 = arith.constant 20 : index
    %c0_57 = arith.constant 0 : index
    %78 = vector.load %arg13[%c20, %c0_57] : memref<148x128xbf16, #tpu.memory_space<vmem>>, vector<128x128xbf16>
    %79 = arith.extf %78 : vector<128x128xbf16> to vector<128x128xf32>
    %80 = arith.addf %77, %79 : vector<128x128xf32>
    %cst_58 = arith.constant 0.000000e+00 : f32
    %cst_59 = arith.constant 1.000000e+00 : f32
    %81 = vector.broadcast %cst_58 : f32 to vector<128x128xf32>
    %82 = arith.maximumf %81, %80 : vector<128x128xf32>
    %83 = vector.broadcast %cst_59 : f32 to vector<128x128xf32>
    %84 = arith.minimumf %83, %82 : vector<128x128xf32>
    %cst_60 = arith.constant 1.000000e+00 : f32
    %85 = vector.broadcast %cst_60 : f32 to vector<128x128xf32>
    %86 = arith.subf %85, %84 : vector<128x128xf32>
    %87 = arith.truncf %86 : vector<128x128xf32> to vector<128x128xbf16>
    %cst_61 = arith.constant dense<0.000000e+00> : vector<128x128xf32>
    %88 = tpu.matmul %2, %87, %cst_61 {dimension_numbers = #tpu.dot_dimension_numbers<[1], [0], [0], [1], [0, 0, 1, 1], [], []>} : vector<128x128xbf16>, vector<128x128xbf16>, vector<128x128xf32> -> vector<128x128xf32>
    %89 = arith.addf %86, %88 : vector<128x128xf32>
    %cst_62 = arith.constant dense<0.000000e+00> : vector<128x128xf32>
    %90 = tpu.matmul %87, %2, %cst_62 {dimension_numbers = #tpu.dot_dimension_numbers<[1], [0], [0], [1], [0, 0, 1, 1], [], []>} : vector<128x128xbf16>, vector<128x128xbf16>, vector<128x128xf32> -> vector<128x128xf32>
    %91 = arith.addf %89, %90 : vector<128x128xf32>
    %cst_63 = arith.constant 0.000000e+00 : f32
    %cst_64 = arith.constant 1.000000e+00 : f32
    %92 = vector.broadcast %cst_63 : f32 to vector<128x128xf32>
    %93 = arith.maximumf %92, %91 : vector<128x128xf32>
    %94 = vector.broadcast %cst_64 : f32 to vector<128x128xf32>
    %95 = arith.minimumf %94, %93 : vector<128x128xf32>
    %96 = arith.subf %95, %86 : vector<128x128xf32>
    %97 = vector.shape_cast %21 : vector<1x1xf32> to vector<1x1xf32>
    %98 = vector.broadcast %97 : vector<1x1xf32> to vector<128x128xf32>
    %cst_65 = arith.constant 0.000000e+00 : f32
    %99 = vector.broadcast %cst_65 : f32 to vector<128x128xf32>
    %100 = arith.cmpf ogt, %98, %99 : vector<128x128xf32>
    %101 = arith.select %100, %17, %96 : vector<128x128xi1>, vector<128x128xf32>
    %c0_66 = arith.constant 0 : index
    %c0_67 = arith.constant 0 : index
    %c0_68 = arith.constant 0 : index
    %102 = vector.load %arg10[%c0_66, %c0_67, %c0_68] : memref<1x128x128xf32, #tpu.memory_space<vmem>>, vector<1x128x128xf32>
    %103 = vector.shape_cast %102 : vector<1x128x128xf32> to vector<128x128xf32>
    %104 = vector.shape_cast %101 : vector<128x128xf32> to vector<1x128x128xf32>
    tpu.vector_store %arg10[%c0_66, %c0_67, %c0_68], %104 {strides = array<i32>} : memref<1x128x128xf32, #tpu.memory_space<vmem>>, vector<1x128x128xf32>,
    %105 = vector.shape_cast %21 : vector<1x1xf32> to vector<1x1xf32>
    %106 = vector.broadcast %105 : vector<1x1xf32> to vector<1x128xf32>
    %c0_69 = arith.constant 0 : index
    %c0_70 = arith.constant 0 : index
    %c0_71 = arith.constant 0 : index
    %107 = vector.load %arg11[%c0_69, %c0_70, %c0_71] : memref<1x1x128xf32, #tpu.memory_space<vmem>>, vector<1x1x128xf32>
    %108 = vector.shape_cast %107 : vector<1x1x128xf32> to vector<1x128xf32>
    %109 = vector.shape_cast %106 : vector<1x128xf32> to vector<1x1x128xf32>
    tpu.vector_store %arg11[%c0_69, %c0_70, %c0_71], %109 {strides = array<i32>} : memref<1x1x128xf32, #tpu.memory_space<vmem>>, vector<1x1x128xf32>,
    return
  }
  func.func @transform_0(%arg0: i32, %arg1: memref<3xi32, #tpu.memory_space<smem>>, %arg2: memref<3xi32, #tpu.memory_space<smem>>, %arg3: memref<3xi32, #tpu.memory_space<smem>>) -> (i32, i32, i32, i32) {
    %0 = arith.index_cast %arg0 : i32 to index
    %1 = memref.load %arg1[%0] : memref<3xi32, #tpu.memory_space<smem>>
    %c8_i32 = arith.constant 8 : i32
    %2 = arith.addi %1, %c8_i32 : i32
    %c0_i32 = arith.constant 0 : i32
    %c0_i32_0 = arith.constant 0 : i32
    %c0_i32_1 = arith.constant 0 : i32
    return %arg0, %2, %c0_i32, %c0_i32_0 : i32, i32, i32, i32
  }
  func.func @transform_1(%arg0: i32, %arg1: memref<3xi32, #tpu.memory_space<smem>>, %arg2: memref<3xi32, #tpu.memory_space<smem>>, %arg3: memref<3xi32, #tpu.memory_space<smem>>) -> (i32, i32, i32, i32) {
    %c1_i32 = arith.constant 1 : i32
    %c0_i32 = arith.constant 0 : i32
    %c0_i32_0 = arith.constant 0 : i32
    %c0_i32_1 = arith.constant 0 : i32
    return %arg0, %c1_i32, %c0_i32, %c0_i32_0 : i32, i32, i32, i32
  }
  func.func @transform_2(%arg0: i32, %arg1: memref<3xi32, #tpu.memory_space<smem>>, %arg2: memref<3xi32, #tpu.memory_space<smem>>, %arg3: memref<3xi32, #tpu.memory_space<smem>>) -> (i32, i32, i32, i32) {
    %0 = arith.index_cast %arg0 : i32 to index
    %1 = memref.load %arg2[%0] : memref<3xi32, #tpu.memory_space<smem>>
    %c0_i32 = arith.constant 0 : i32
    %c0_i32_0 = arith.constant 0 : i32
    %c0_i32_1 = arith.constant 0 : i32
    return %arg0, %1, %c0_i32, %c0_i32_0 : i32, i32, i32, i32
  }
  func.func @transform_3(%arg0: i32, %arg1: memref<3xi32, #tpu.memory_space<smem>>, %arg2: memref<3xi32, #tpu.memory_space<smem>>, %arg3: memref<3xi32, #tpu.memory_space<smem>>) -> (i32, i32, i32, i32) {
    %0 = arith.index_cast %arg0 : i32 to index
    %1 = memref.load %arg3[%0] : memref<3xi32, #tpu.memory_space<smem>>
    %c0_i32 = arith.constant 0 : i32
    %c0_i32_0 = arith.constant 0 : i32
    %c0_i32_1 = arith.constant 0 : i32
    return %arg0, %1, %c0_i32, %c0_i32_0 : i32, i32, i32, i32
  }
  func.func @transform_4(%arg0: i32, %arg1: memref<3xi32, #tpu.memory_space<smem>>, %arg2: memref<3xi32, #tpu.memory_space<smem>>, %arg3: memref<3xi32, #tpu.memory_space<smem>>) -> (i32, i32) {
    %c0_i32 = arith.constant 0 : i32
    %c0_i32_0 = arith.constant 0 : i32
    %c0_i32_1 = arith.constant 0 : i32
    return %c0_i32, %c0_i32_0 : i32, i32
  }
  func.func @transform_5(%arg0: i32, %arg1: memref<3xi32, #tpu.memory_space<smem>>, %arg2: memref<3xi32, #tpu.memory_space<smem>>, %arg3: memref<3xi32, #tpu.memory_space<smem>>) -> (i32, i32) {
    %c0_i32 = arith.constant 0 : i32
    %c0_i32_0 = arith.constant 0 : i32
    %c0_i32_1 = arith.constant 0 : i32
    return %c0_i32, %c0_i32_0 : i32, i32
  }
  func.func @transform_6(%arg0: i32, %arg1: memref<3xi32, #tpu.memory_space<smem>>, %arg2: memref<3xi32, #tpu.memory_space<smem>>, %arg3: memref<3xi32, #tpu.memory_space<smem>>) -> (i32, i32, i32) {
    %c0_i32 = arith.constant 0 : i32
    %c0_i32_0 = arith.constant 0 : i32
    %c0_i32_1 = arith.constant 0 : i32
    return %arg0, %c0_i32, %c0_i32_0 : i32, i32, i32
  }
  func.func @transform_7(%arg0: i32, %arg1: memref<3xi32, #tpu.memory_space<smem>>, %arg2: memref<3xi32, #tpu.memory_space<smem>>, %arg3: memref<3xi32, #tpu.memory_space<smem>>) -> (i32, i32, i32) {
    %c0_i32 = arith.constant 0 : i32
    %c0_i32_0 = arith.constant 0 : i32
    %c0_i32_1 = arith.constant 0 : i32
    return %arg0, %c0_i32, %c0_i32_0 : i32, i32, i32
  }
}

</mosaic_0001>

<llo_original>
// kernel: tpu_custom_call.1
$region0: #{tpu_custom_call.1}
  #allocation0 [shape = 'u32[]', space=smem, size = 0x4, offset = 0x4, fixed_abs, tag = 'smem constant byte address 0x4 - core index']
  #allocation1 [shape = 'u32[72,128]{1,0:T(1,128)}', space=vmem, size = 0x9000, scoped, tag = 'internal scratch']
  #allocation2 [shape = 'f32[128,128]{1,0:T(8,128)}', space=vmem, size = 0x10000, scoped, tag = 'scratch operand']
  #allocation3 [shape = 'bf16[148,128]{1,0:T(8,128)(2,1)}', space=vmem, size = 0x9800, scoped, tag = 'scratch operand']
  #allocation4 [shape = 'bf16[128,768]{1,0:T(8,128)(2,1)}', space=vmem, size = 0x30000, scoped, tag = 'scratch operand']
  #allocation5 [shape = 's32[1]{0}', space=sflag, size = 0x4, scoped, tag = 'scoped memory for tpu_custom_call.1']
  #allocation6 [shape = 'u8[512]{0}', space=smem, size = 0x200, scoped, tag = 'prefetched SMEM operand 0']
  #allocation7 [shape = 'u8[512]{0}', space=smem, size = 0x200, scoped, tag = 'prefetched SMEM operand 1']
  #allocation8 [shape = 'u8[512]{0}', space=smem, size = 0x200, scoped, tag = 'prefetched SMEM operand 2']
  %s0 = inlined_call_operand.hbm [shape: s32[3], index: 0, kind: input, shape index: {}]
  %s1 = inlined_call_operand.hbm [shape: s32[3], index: 1, kind: input, shape index: {}]
  %s2 = inlined_call_operand.hbm [shape: s32[3], index: 2, kind: input, shape index: {}]
  %s3 = inlined_call_operand.hbm [shape: f32[3,14,128,128], index: 3, kind: input, shape index: {}]
  %s4 = inlined_call_operand.hbm [shape: f32[3,14,128,128], index: 4, kind: input, shape index: {}]
  %s5 = inlined_call_operand.hbm [shape: f32[3,14,128,128], index: 5, kind: input, shape index: {}]
  %s6 = inlined_call_operand.hbm [shape: f32[3,14,128,128], index: 6, kind: input, shape index: {}]
  %s7 = inlined_call_operand.hbm [shape: bf16[768,128], index: 7, kind: input, shape index: {}]
  %s8 = inlined_call_operand.hbm [shape: bf16[128,128], index: 8, kind: input, shape index: {}]
  %s9 = inlined_call_operand.hbm [shape: f32[3,128,128], index: 9, kind: output, shape index: {0}]
  %s10 = inlined_call_operand.hbm [shape: f32[3,1,128], index: 10, kind: output, shape index: {1}]
  %11 = xla_tuple %s9, %s10
  %s12 = sld [smem:[#allocation0]]
  $region93: #{tpu_custom_call.1} parent=0
    _
  %s14 = ssub.s32 1, %s12
  %s15 = scalar_select 0, %s14, %s12
  %s17 = sshll.u32 %s0, 4
  %s18 = int_to_ptr.hbm [resolvable:$true] %s17
  %20 = dma.hbm_to_smem %s18, 16, [#allocation6], [#allocation5]
  %s22 = sshll.u32 %s1, 4
  %s23 = int_to_ptr.hbm [resolvable:$true] %s22
  %25 = dma.hbm_to_smem %s23, 16, [#allocation7], [#allocation5]
  %s27 = sshll.u32 %s2, 4
  %s28 = int_to_ptr.hbm [resolvable:$true] %s27
  %30 = dma.hbm_to_smem %s28, 16, [#allocation8], [#allocation5]
  %32 = dma.done [#allocation5], 48
  %33 = sfence
  $region1: #{tpu_custom_call.1} parent=0
    #allocation9 [shape = 'u8[131072]{0}', space=vmem, size = 0x20000, scoped, tag = 'input window, operand 3']
    #allocation10 [shape = 's32[2]{0}', space=sflag, size = 0x8, scoped, tag = 'scoped memory for tpu_custom_call.1']
    #allocation11 [shape = 's32[2]{0}', space=sflag, size = 0x8, scoped, tag = 'scoped memory for tpu_custom_call.1']
    #allocation12 [shape = 'u8[131072]{0}', space=vmem, size = 0x20000, scoped, tag = 'input window, operand 4']
    #allocation13 [shape = 's32[2]{0}', space=sflag, size = 0x8, scoped, tag = 'scoped memory for tpu_custom_call.1']
    #allocation14 [shape = 'u8[131072]{0}', space=vmem, size = 0x20000, scoped, tag = 'input window, operand 5']
    #allocation15 [shape = 'u8[131072]{0}', space=vmem, size = 0x20000, scoped, tag = 'input window, operand 6']
    #allocation16 [shape = 's32[2]{0}', space=sflag, size = 0x8, scoped, tag = 'scoped memory for tpu_custom_call.1']
    #allocation17 [shape = 'u8[196608]{0}', space=vmem, size = 0x30000, scoped, tag = 'input window, operand 7, single buffered']
    #allocation18 [shape = 'u8[32768]{0}', space=vmem, size = 0x8000, scoped, tag = 'input window, operand 8, single buffered']
    #allocation19 [shape = 's32[1]{0}', space=sflag, size = 0x4, scoped, tag = 'scoped memory for tpu_custom_call.1']
    #allocation20 [shape = 'u8[131072]{0}', space=vmem, size = 0x20000, scoped, tag = 'output window, operand 0']
    #allocation21 [shape = 'u8[1024]{0}', space=vmem, size = 0x400, scoped, tag = 'output window, operand 1']
    #allocation22 [shape = 's32[2]{0}', space=sflag, size = 0x8, scoped, tag = 'scoped memory for tpu_custom_call.1']
    %34 = vsyncpa [#allocation10], 0
    %s35 = scalar_lea.sflag [#allocation10], 1
    %36 = vsyncpa %s35, 0
    %37 = vsyncpa [#allocation13], 0
    %s38 = scalar_lea.sflag [#allocation13], 1
    %39 = vsyncpa %s38, 0
    %40 = vsyncpa [#allocation16], 0
    %s41 = scalar_lea.sflag [#allocation16], 1
    %42 = vsyncpa %s41, 0
    %43 = vsyncpa [#allocation19], 0
    %44 = vsyncpa [#allocation11], 0
    %s45 = scalar_lea.sflag [#allocation11], 1
    %46 = vsyncpa %s45, 0
    %47 = vsyncpa [#allocation22], 0
    %s48 = scalar_lea.sflag [#allocation22], 1
    %49 = vsyncpa %s48, 0
    loop: start=0, step=1, limit=5
    $region2: #{tpu_custom_call.1} parent=1 // loop_pre_header
      _
    $region3: #{tpu_custom_call.1} parent=1 // loop_header
      %s51 = sphi 0, %s55
      %p52 = scmp.ge.s32.totalorder %s51, 5
      %s67 = sphi 0, %s69
      %s70 = sphi 0, %s67
      %s71 = sphi 0, %s70
      %s87 = sphi 0, %s71
      %s93 = sphi 0, %s95
      %s96 = sphi 0, %s93
      %s97 = sphi 0, %s96
      %s113 = sphi 0, %s97
      %s123 = sphi 0, %s125
      %s126 = sphi 0, %s123
      %s127 = sphi 0, %s126
      %s143 = sphi 0, %s127
      %s153 = sphi 0, %s155
      %s156 = sphi 0, %s153
      %s157 = sphi 0, %s156
      %s173 = sphi 0, %s157
      %s177 = sphi 0, %s177
      %s179 = sphi 0, %s177
      %s180 = sphi 0, %s179
      %s194 = sphi 0, %s180
      %s198 = sphi 0, %s198
      %s200 = sphi 0, %s198
      %s201 = sphi 0, %s200
      %s215 = sphi 0, %s201
      %s221 = sphi 0, %s223
      %s224 = sphi 0, %s221
      %s225 = sphi 0, %s224
      %s241 = sphi 0, %s225
      %s247 = sphi 0, %s249
      %s250 = sphi 0, %s247
      %s251 = sphi 0, %s250
      %s267 = sphi 0, %s251
    $region4: #{tpu_custom_call.1} parent=1 // loop_header_branch
      %54 = sbr.rel (%p52) target = $region8
    $region5: #{tpu_custom_call.1} parent=1 // loop_body
      %s56 = ssub.s32 %s51, 1
      %s57 = ssub.s32 %s51, 2
      %s58 = sadd.s32 %s51, 1
      %s59 = sld [smem:[#allocation6 + %s51]]
      %s60 = sadd.s32 %s59, 8
      %s61 = sld [smem:[#allocation6 + %s58]]
      %s62 = sadd.s32 %s61, 8
      %s63 = ssub.s32 %s51, %s58
      %s64 = ssub.s32 %s60, %s62
      %s65 = sor.u32 %s63, %s64
      %p66 = scmp.eq.s32.totalorder %s65, 0
      %s68 = sadd.s32 %s67, 1
      %s69 = scalar_select %p66, %s67, %s68
      %p72 = pneg %p66
      %p73 = scmp.eq.s32.totalorder %s51, 2
      %p74 = por %p72, %p73
      %p75 = scmp.ne.s32.totalorder %s67, %s70
      %p76 = scmp.eq.s32.totalorder %s51, 0
      %p77 = por %p75, %p76
      %p78 = scmp.ne.s32.totalorder %s67, %s70
      %p79 = scmp.eq.s32.totalorder %s56, 2
      %p80 = por %p78, %p79
      %p81 = scmp.ne.s32.totalorder %s70, %s71
      %p82 = scmp.eq.s32.totalorder %s56, 0
      %p83 = por %p81, %p82
      %p84 = scmp.ne.s32.totalorder %s70, %s71
      %p85 = scmp.eq.s32.totalorder %s57, 2
      %p86 = por %p84, %p85
      %p88 = scmp.ne.s32.totalorder %s71, %s87
      %p89 = scmp.eq.s32.totalorder %s57, 0
      %p90 = por %p88, %p89
      %s91 = ssub.s32 %s51, %s58
      %p92 = scmp.eq.s32.totalorder %s91, 0
      %s94 = sadd.s32 %s93, 1
      %s95 = scalar_select %p92, %s93, %s94
      %p98 = pneg %p92
      %p99 = scmp.eq.s32.totalorder %s51, 2
      %p100 = por %p98, %p99
      %p101 = scmp.ne.s32.totalorder %s93, %s96
      %p102 = scmp.eq.s32.totalorder %s51, 0
      %p103 = por %p101, %p102
      %p104 = scmp.ne.s32.totalorder %s93, %s96
      %p105 = scmp.eq.s32.totalorder %s56, 2
      %p106 = por %p104, %p105
      %p107 = scmp.ne.s32.totalorder %s96, %s97
      %p108 = scmp.eq.s32.totalorder %s56, 0
      %p109 = por %p107, %p108
      %p110 = scmp.ne.s32.totalorder %s96, %s97
      %p111 = scmp.eq.s32.totalorder %s57, 2
      %p112 = por %p110, %p111
      %p114 = scmp.ne.s32.totalorder %s97, %s113
      %p115 = scmp.eq.s32.totalorder %s57, 0
      %p116 = por %p114, %p115
      %s117 = sld [smem:[#allocation7 + %s51]]
      %s118 = sld [smem:[#allocation7 + %s58]]
      %s119 = ssub.s32 %s51, %s58
      %s120 = ssub.s32 %s117, %s118
      %s121 = sor.u32 %s119, %s120
      %p122 = scmp.eq.s32.totalorder %s121, 0
      %s124 = sadd.s32 %s123, 1
      %s125 = scalar_select %p122, %s123, %s124
      %p128 = pneg %p122
      %p129 = scmp.eq.s32.totalorder %s51, 2
      %p130 = por %p128, %p129
      %p131 = scmp.ne.s32.totalorder %s123, %s126
      %p132 = scmp.eq.s32.totalorder %s51, 0
      %p133 = por %p131, %p132
      %p134 = scmp.ne.s32.totalorder %s123, %s126
      %p135 = scmp.eq.s32.totalorder %s56, 2
      %p136 = por %p134, %p135
      %p137 = scmp.ne.s32.totalorder %s126, %s127
      %p138 = scmp.eq.s32.totalorder %s56, 0
      %p139 = por %p137, %p138
      %p140 = scmp.ne.s32.totalorder %s126, %s127
      %p141 = scmp.eq.s32.totalorder %s57, 2
      %p142 = por %p140, %p141
      %p144 = scmp.ne.s32.totalorder %s127, %s143
      %p145 = scmp.eq.s32.totalorder %s57, 0
      %p146 = por %p144, %p145
      %s147 = sld [smem:[#allocation8 + %s51]]
      %s148 = sld [smem:[#allocation8 + %s58]]
      %s149 = ssub.s32 %s51, %s58
      %s150 = ssub.s32 %s147, %s148
      %s151 = sor.u32 %s149, %s150
      %p152 = scmp.eq.s32.totalorder %s151, 0
      %s154 = sadd.s32 %s153, 1
      %s155 = scalar_select %p152, %s153, %s154
      %p158 = pneg %p152
      %p159 = scmp.eq.s32.totalorder %s51, 2
      %p160 = por %p158, %p159
      %p161 = scmp.ne.s32.totalorder %s153, %s156
      %p162 = scmp.eq.s32.totalorder %s51, 0
      %p163 = por %p161, %p162
      %p164 = scmp.ne.s32.totalorder %s153, %s156
      %p165 = scmp.eq.s32.totalorder %s56, 2
      %p166 = por %p164, %p165
      %p167 = scmp.ne.s32.totalorder %s156, %s157
      %p168 = scmp.eq.s32.totalorder %s56, 0
      %p169 = por %p167, %p168
      %p170 = scmp.ne.s32.totalorder %s156, %s157
      %p171 = scmp.eq.s32.totalorder %s57, 2
      %p172 = por %p170, %p171
      %p174 = scmp.ne.s32.totalorder %s157, %s173
      %p175 = scmp.eq.s32.totalorder %s57, 0
      %p176 = por %p174, %p175
      %s178 = sadd.s32 %s177, 1
      %p181 = scmp.eq.s32.totalorder %s51, 2
      %p182 = scmp.ne.s32.totalorder %s177, %s179
      %p183 = scmp.eq.s32.totalorder %s51, 0
      %p184 = por %p182, %p183
      %p185 = scmp.ne.s32.totalorder %s177, %s179
      %p186 = scmp.eq.s32.totalorder %s56, 2
      %p187 = por %p185, %p186
      %p188 = scmp.ne.s32.totalorder %s179, %s180
      %p189 = scmp.eq.s32.totalorder %s56, 0
      %p190 = por %p188, %p189
      %p191 = scmp.ne.s32.totalorder %s179, %s180
      %p192 = scmp.eq.s32.totalorder %s57, 2
      %p193 = por %p191, %p192
      %p195 = scmp.ne.s32.totalorder %s180, %s194
      %p196 = scmp.eq.s32.totalorder %s57, 0
      %p197 = por %p195, %p196
      %s199 = sadd.s32 %s198, 1
      %p202 = scmp.eq.s32.totalorder %s51, 2
      %p203 = scmp.ne.s32.totalorder %s198, %s200
      %p204 = scmp.eq.s32.totalorder %s51, 0
      %p205 = por %p203, %p204
      %p206 = scmp.ne.s32.totalorder %s198, %s200
      %p207 = scmp.eq.s32.totalorder %s56, 2
      %p208 = por %p206, %p207
      %p209 = scmp.ne.s32.totalorder %s200, %s201
      %p210 = scmp.eq.s32.totalorder %s56, 0
      %p211 = por %p209, %p210
      %p212 = scmp.ne.s32.totalorder %s200, %s201
      %p213 = scmp.eq.s32.totalorder %s57, 2
      %p214 = por %p212, %p213
      %p216 = scmp.ne.s32.totalorder %s201, %s215
      %p217 = scmp.eq.s32.totalorder %s57, 0
      %p218 = por %p216, %p217
      %s219 = ssub.s32 %s51, %s58
      %p220 = scmp.eq.s32.totalorder %s219, 0
      %s222 = sadd.s32 %s221, 1
      %s223 = scalar_select %p220, %s221, %s222
      %p226 = pneg %p220
      %p227 = scmp.eq.s32.totalorder %s51, 2
      %p228 = por %p226, %p227
      %p229 = scmp.ne.s32.totalorder %s221, %s224
      %p230 = scmp.eq.s32.totalorder %s51, 0
      %p231 = por %p229, %p230
      %p232 = scmp.ne.s32.totalorder %s221, %s224
      %p233 = scmp.eq.s32.totalorder %s56, 2
      %p234 = por %p232, %p233
      %p235 = scmp.ne.s32.totalorder %s224, %s225
      %p236 = scmp.eq.s32.totalorder %s56, 0
      %p237 = por %p235, %p236
      %p238 = scmp.ne.s32.totalorder %s224, %s225
      %p239 = scmp.eq.s32.totalorder %s57, 2
      %p240 = por %p238, %p239
      %p242 = scmp.ne.s32.totalorder %s225, %s241
      %p243 = scmp.eq.s32.totalorder %s57, 0
      %p244 = por %p242, %p243
      %s245 = ssub.s32 %s51, %s58
      %p246 = scmp.eq.s32.totalorder %s245, 0
      %s248 = sadd.s32 %s247, 1
      %s249 = scalar_select %p246, %s247, %s248
      %p252 = pneg %p246
      %p253 = scmp.eq.s32.totalorder %s51, 2
      %p254 = por %p252, %p253
      %p255 = scmp.ne.s32.totalorder %s247, %s250
      %p256 = scmp.eq.s32.totalorder %s51, 0
      %p257 = por %p255, %p256
      %p258 = scmp.ne.s32.totalorder %s247, %s250
      %p259 = scmp.eq.s32.totalorder %s56, 2
      %p260 = por %p258, %p259
      %p261 = scmp.ne.s32.totalorder %s250, %s251
      %p262 = scmp.eq.s32.totalorder %s56, 0
      %p263 = por %p261, %p262
      %p264 = scmp.ne.s32.totalorder %s250, %s251
      %p265 = scmp.eq.s32.totalorder %s57, 2
      %p266 = por %p264, %p265
      %p268 = scmp.ne.s32.totalorder %s251, %s267
      %p269 = scmp.eq.s32.totalorder %s57, 0
      %p270 = por %p268, %p269
      %p271 = scmp.le.s32.totalorder 1, %s51
      %p272 = scmp.lt.s32.totalorder %s51, 4
      %p273 = pnand %p271, %p272
      %p274 = pneg %p273
      // Predicated region
      $region9: #{tpu_custom_call.1} parent=5 // pred_check
        _
      $region10: #{tpu_custom_call.1} parent=5 // pred_check_branch
        %276 = sbr.rel (%p273) target = $region12
      $region11: #{tpu_custom_call.1} parent=5 // pred_region
        %s277 = ssub.s32 %s51, 1
        // Predicated region
        $region13: #{tpu_custom_call.1} parent=11 // pred_check
          %p278 = pneg %p190
        $region14: #{tpu_custom_call.1} parent=11 // pred_check_branch
          %280 = sbr.rel (%p278) target = $region16
        $region15: #{tpu_custom_call.1} parent=11 // pred_region
          %282 = vsyncadd [#allocation16], 0
          %s283 = sshll.u32 %s7, 4
          %s284 = int_to_ptr.hbm [resolvable:$true] %s283
          %s285 = sshll.u32 [#allocation17], 4
          %s286 = int_to_ptr.vmem [resolvable:$true] %s285
          %291 = dma.hbm_to_vmem [thread:$0]  %s284, 6144, %s286, [#allocation16], 64, 64, 4
        $region16: #{tpu_custom_call.1} parent=11 // pred_fallthru
          _
        // Predicated region
        $region17: #{tpu_custom_call.1} parent=11 // pred_check
          %p292 = pneg %p211
        $region18: #{tpu_custom_call.1} parent=11 // pred_check_branch
          %294 = sbr.rel (%p292) target = $region20
        $region19: #{tpu_custom_call.1} parent=11 // pred_region
          %296 = vsyncadd [#allocation19], 0
          %s297 = sshll.u32 %s8, 4
          %s298 = int_to_ptr.hbm [resolvable:$true] %s297
          %s299 = sshll.u32 [#allocation18], 4
          %s300 = int_to_ptr.vmem [resolvable:$true] %s299
          %305 = dma.hbm_to_vmem [thread:$0]  %s298, 1024, %s300, [#allocation19], 64, 64, 4
        $region20: #{tpu_custom_call.1} parent=11 // pred_fallthru
          _
      $region12: #{tpu_custom_call.1} parent=5 // pred_fallthru
        _
      %p306 = scmp.lt.s32.totalorder %s51, 3
      // Predicated region
      $region21: #{tpu_custom_call.1} parent=5 // pred_check
        %p307 = pneg %p306
      $region22: #{tpu_custom_call.1} parent=5 // pred_check_branch
        %309 = sbr.rel (%p307) target = $region24
      $region23: #{tpu_custom_call.1} parent=5 // pred_region
        // Predicated region
        $region25: #{tpu_custom_call.1} parent=23 // pred_check
          %p310 = pneg %p77
        $region26: #{tpu_custom_call.1} parent=23 // pred_check_branch
          %312 = sbr.rel (%p310) target = $region28
        $region27: #{tpu_custom_call.1} parent=23 // pred_region
          %s313 = sand.u32 %s67, 1
          %s314 = scalar_lea.sflag [#allocation10], %s313
          %s315 = sand.u32 %s67, 1
          %s316 = smul.addr %s315, 128
          %s317 = scalar_lea.vmem [#allocation9], %s316
          %s318 = sld [smem:[#allocation6 + %s51]]
          %s319 = sadd.s32 %s318, 8
          %321 = vsyncadd %s314, 0
          %s322 = smul.addr %s319, 16
          %s323 = smul.addr %s51, 224
          %s324 = sadd.s32 %s322, %s323
          %s325 = smul.addr %s324, 8
          %s326 = scalar_lea.hbm %s3, %s325
          %s327 = sshll.u32 %s326, 4
          %s328 = int_to_ptr.hbm [resolvable:$true] %s327
          %s329 = sshll.u32 %s317, 4
          %s330 = int_to_ptr.vmem [resolvable:$true] %s329
          %335 = dma.hbm_to_vmem [thread:$0]  %s328, 2048, %s330, %s314, 128, 128, 8
        $region28: #{tpu_custom_call.1} parent=23 // pred_fallthru
          _
        // Predicated region
        $region29: #{tpu_custom_call.1} parent=23 // pred_check
          %p336 = pneg %p103
        $region30: #{tpu_custom_call.1} parent=23 // pred_check_branch
          %338 = sbr.rel (%p336) target = $region32
        $region31: #{tpu_custom_call.1} parent=23 // pred_region
          %s339 = sand.u32 %s51, 1
          %s340 = scalar_lea.sflag [#allocation13], %s339
          %s341 = sand.u32 %s93, 1
          %s342 = smul.addr %s341, 128
          %s343 = scalar_lea.vmem [#allocation12], %s342
          %345 = vsyncadd %s340, 0
          %s346 = smul.addr %s51, 224
          %s347 = sadd.s32 16, %s346
          %s348 = smul.addr %s347, 8
          %s349 = scalar_lea.hbm %s4, %s348
          %s350 = sshll.u32 %s349, 4
          %s351 = int_to_ptr.hbm [resolvable:$true] %s350
          %s352 = sshll.u32 %s343, 4
          %s353 = int_to_ptr.vmem [resolvable:$true] %s352
          %358 = dma.hbm_to_vmem [thread:$0]  %s351, 2048, %s353, %s340, 128, 128, 8
        $region32: #{tpu_custom_call.1} parent=23 // pred_fallthru
          _
        // Predicated region
        $region33: #{tpu_custom_call.1} parent=23 // pred_check
          %p359 = pneg %p133
        $region34: #{tpu_custom_call.1} parent=23 // pred_check_branch
          %361 = sbr.rel (%p359) target = $region36
        $region35: #{tpu_custom_call.1} parent=23 // pred_region
          %s362 = sand.u32 %s51, 1
          %s363 = scalar_lea.sflag [#allocation13], %s362
          %s364 = sand.u32 %s123, 1
          %s365 = smul.addr %s364, 128
          %s366 = scalar_lea.vmem [#allocation14], %s365
          %s367 = sld [smem:[#allocation7 + %s51]]
          %369 = vsyncadd %s363, 0
          %s370 = smul.addr %s367, 16
          %s371 = smul.addr %s51, 224
          %s372 = sadd.s32 %s370, %s371
          %s373 = smul.addr %s372, 8
          %s374 = scalar_lea.hbm %s5, %s373
          %s375 = sshll.u32 %s374, 4
          %s376 = int_to_ptr.hbm [resolvable:$true] %s375
          %s377 = sshll.u32 %s366, 4
          %s378 = int_to_ptr.vmem [resolvable:$true] %s377
          %383 = dma.hbm_to_vmem [thread:$0]  %s376, 2048, %s378, %s363, 128, 128, 8
        $region36: #{tpu_custom_call.1} parent=23 // pred_fallthru
          _
        // Predicated region
        $region37: #{tpu_custom_call.1} parent=23 // pred_check
          %p384 = pneg %p163
        $region38: #{tpu_custom_call.1} parent=23 // pred_check_branch
          %386 = sbr.rel (%p384) target = $region40
        $region39: #{tpu_custom_call.1} parent=23 // pred_region
          %s387 = sand.u32 %s51, 1
          %s388 = scalar_lea.sflag [#allocation16], %s387
          %s389 = sand.u32 %s153, 1
          %s390 = smul.addr %s389, 128
          %s391 = scalar_lea.vmem [#allocation15], %s390
          %s392 = sld [smem:[#allocation8 + %s51]]
          %394 = vsyncadd %s388, 0
          %s395 = smul.addr %s392, 16
          %s396 = smul.addr %s51, 224
          %s397 = sadd.s32 %s395, %s396
          %s398 = smul.addr %s397, 8
          %s399 = scalar_lea.hbm %s6, %s398
          %s400 = sshll.u32 %s399, 4
          %s401 = int_to_ptr.hbm [resolvable:$true] %s400
          %s402 = sshll.u32 %s391, 4
          %s403 = int_to_ptr.vmem [resolvable:$true] %s402
          %408 = dma.hbm_to_vmem [thread:$0]  %s401, 2048, %s403, %s388, 128, 128, 8
        $region40: #{tpu_custom_call.1} parent=23 // pred_fallthru
          _
      $region24: #{tpu_custom_call.1} parent=5 // pred_fallthru
        _
      %p409 = scmp.le.s32.totalorder 1, %s51
      %p410 = scmp.lt.s32.totalorder %s51, 4
      %p411 = pnand %p409, %p410
      %p412 = pneg %p411
      // Predicated region
      $region41: #{tpu_custom_call.1} parent=5 // pred_check
        _
      $region42: #{tpu_custom_call.1} parent=5 // pred_check_branch
        %414 = sbr.rel (%p411) target = $region44
      $region43: #{tpu_custom_call.1} parent=5 // pred_region
        %s415 = ssub.s32 %s51, 1
        %s416 = sand.u32 %s70, 1
        %s417 = scalar_lea.sflag [#allocation10], %s416
        %s418 = sand.u32 %s70, 1
        %s419 = smul.addr %s418, 128
        %s420 = scalar_lea.vmem [#allocation9], %s419
        // Predicated region
        $region45: #{tpu_custom_call.1} parent=43 // pred_check
          %p421 = pneg %p83
        $region46: #{tpu_custom_call.1} parent=43 // pred_check_branch
          %423 = sbr.rel (%p421) target = $region48
        $region47: #{tpu_custom_call.1} parent=43 // pred_region
          %425 = dma.done %s417, 2048
        $region48: #{tpu_custom_call.1} parent=43 // pred_fallthru
          _
        %s426 = sand.u32 %s56, 1
        %s427 = scalar_lea.sflag [#allocation13], %s426
        %s428 = sand.u32 %s96, 1
        %s429 = smul.addr %s428, 128
        %s430 = scalar_lea.vmem [#allocation12], %s429
        // Predicated region
        $region49: #{tpu_custom_call.1} parent=43 // pred_check
          %p431 = pneg %p109
        $region50: #{tpu_custom_call.1} parent=43 // pred_check_branch
          %433 = sbr.rel (%p431) target = $region52
        $region51: #{tpu_custom_call.1} parent=43 // pred_region
          %435 = dma.done %s427, 2048
        $region52: #{tpu_custom_call.1} parent=43 // pred_fallthru
          _
        %s436 = sand.u32 %s56, 1
        %s437 = scalar_lea.sflag [#allocation13], %s436
        %s438 = sand.u32 %s126, 1
        %s439 = smul.addr %s438, 128
        %s440 = scalar_lea.vmem [#allocation14], %s439
        // Predicated region
        $region53: #{tpu_custom_call.1} parent=43 // pred_check
          %p441 = pneg %p139
        $region54: #{tpu_custom_call.1} parent=43 // pred_check_branch
          %443 = sbr.rel (%p441) target = $region56
        $region55: #{tpu_custom_call.1} parent=43 // pred_region
          %445 = dma.done %s437, 2048
        $region56: #{tpu_custom_call.1} parent=43 // pred_fallthru
          _
        %s446 = sand.u32 %s56, 1
        %s447 = scalar_lea.sflag [#allocation16], %s446
        %s448 = sand.u32 %s156, 1
        %s449 = smul.addr %s448, 128
        %s450 = scalar_lea.vmem [#allocation15], %s449
        // Predicated region
        $region57: #{tpu_custom_call.1} parent=43 // pred_check
          %p451 = pneg %p169
        $region58: #{tpu_custom_call.1} parent=43 // pred_check_branch
          %453 = sbr.rel (%p451) target = $region60
        $region59: #{tpu_custom_call.1} parent=43 // pred_region
          %455 = dma.done %s447, 2048
        $region60: #{tpu_custom_call.1} parent=43 // pred_fallthru
          _
        // Predicated region
        $region61: #{tpu_custom_call.1} parent=43 // pred_check
          %p456 = pneg %p190
        $region62: #{tpu_custom_call.1} parent=43 // pred_check_branch
          %458 = sbr.rel (%p456) target = $region64
        $region63: #{tpu_custom_call.1} parent=43 // pred_region
          %460 = dma.done [#allocation16], 6144
        $region64: #{tpu_custom_call.1} parent=43 // pred_fallthru
          _
        // Predicated region
        $region65: #{tpu_custom_call.1} parent=43 // pred_check
          %p461 = pneg %p211
        $region66: #{tpu_custom_call.1} parent=43 // pred_check_branch
          %463 = sbr.rel (%p461) target = $region68
        $region67: #{tpu_custom_call.1} parent=43 // pred_region
          %465 = dma.done [#allocation19], 1024
        $region68: #{tpu_custom_call.1} parent=43 // pred_fallthru
          _
        %s466 = sand.u32 %s70, 1
        %s467 = scalar_lea.sflag [#allocation10], %s466
        %s468 = sand.u32 %s70, 1
        %s469 = smul.addr %s468, 128
        %s470 = scalar_lea.vmem [#allocation9], %s469
        %p471 = pneg %p83
        %p472 = pneg %p80
        %s473 = sand.u32 %s56, 1
        %s474 = scalar_lea.sflag [#allocation13], %s473
        %s475 = sand.u32 %s96, 1
        %s476 = smul.addr %s475, 128
        %s477 = scalar_lea.vmem [#allocation12], %s476
        %p478 = pneg %p109
        %p479 = pneg %p106
        %s480 = sand.u32 %s56, 1
        %s481 = scalar_lea.sflag [#allocation13], %s480
        %s482 = sand.u32 %s126, 1
        %s483 = smul.addr %s482, 128
        %s484 = scalar_lea.vmem [#allocation14], %s483
        %p485 = pneg %p139
        %p486 = pneg %p136
        %s487 = sand.u32 %s56, 1
        %s488 = scalar_lea.sflag [#allocation16], %s487
        %s489 = sand.u32 %s156, 1
        %s490 = smul.addr %s489, 128
        %s491 = scalar_lea.vmem [#allocation15], %s490
        %p492 = pneg %p169
        %p493 = pneg %p166
        %p494 = pneg %p190
        %p495 = pneg %p187
        %p496 = pneg %p211
        %p497 = pneg %p208
        %p498 = pneg %p237
        %p499 = pneg %p234
        %s500 = sand.u32 %s224, 1
        %s501 = scalar_lea.sflag [#allocation11], %s500
        %s502 = sand.u32 %s224, 1
        %s503 = smul.addr %s502, 128
        %s504 = scalar_lea.vmem [#allocation20], %s503
        %p505 = pneg %p263
        %p506 = pneg %p260
        %s507 = sand.u32 %s250, 1
        %s508 = scalar_lea.sflag [#allocation22], %s507
        %s509 = sand.u32 %s250, 1
        %s510 = scalar_lea.vmem [#allocation21], %s509
        %s511 = sld [smem:[#allocation6 + %s56]]
        %s512 = sadd.s32 %s511, 8
        %s513 = sld [smem:[#allocation7 + %s56]]
        %s514 = sld [smem:[#allocation8 + %s56]]
        %s516 = sld [smem:[#allocation6 + %s56]]
        %v517 = vld [vmem:[#allocation18] sm:$0xf]
        %v518 = vld [vmem:[#allocation18 + $0x4] sm:$0xf]
        %v519 = vld [vmem:[#allocation18 + $0x8] sm:$0xf]
        %v520 = vld [vmem:[#allocation18 + $0xc] sm:$0xf]
        %v521 = vld [vmem:[#allocation18 + $0x10] sm:$0xf]
        %v522 = vld [vmem:[#allocation18 + $0x14] sm:$0xf]
        %v523 = vld [vmem:[#allocation18 + $0x18] sm:$0xf]
        %v524 = vld [vmem:[#allocation18 + $0x1c] sm:$0xf]
        %v525 = vld [vmem:[#allocation18 + $0x20] sm:$0xf]
        %v526 = vld [vmem:[#allocation18 + $0x24] sm:$0xf]
        %v527 = vld [vmem:[#allocation18 + $0x28] sm:$0xf]
        %v528 = vld [vmem:[#allocation18 + $0x2c] sm:$0xf]
        %v529 = vld [vmem:[#allocation18 + $0x30] sm:$0xf]
        %v530 = vld [vmem:[#allocation18 + $0x34] sm:$0xf]
        %v531 = vld [vmem:[#allocation18 + $0x38] sm:$0xf]
        %v532 = vld [vmem:[#allocation18 + $0x3c] sm:$0xf]
        %v533 = vld [vmem:[%s420] sm:$0xff]
        %v534 = vld [vmem:[%s420 + $0x8] sm:$0xff]
        %v535 = vld [vmem:[%s420 + $0x10] sm:$0xff]
        %v536 = vld [vmem:[%s420 + $0x18] sm:$0xff]
        %v537 = vld [vmem:[%s420 + $0x20] sm:$0xff]
        %v538 = vld [vmem:[%s420 + $0x28] sm:$0xff]
        %v539 = vld [vmem:[%s420 + $0x30] sm:$0xff]
        %v540 = vld [vmem:[%s420 + $0x38] sm:$0xff]
        %v541 = vld [vmem:[%s420 + $0x40] sm:$0xff]
        %v542 = vld [vmem:[%s420 + $0x48] sm:$0xff]
        %v543 = vld [vmem:[%s420 + $0x50] sm:$0xff]
        %v544 = vld [vmem:[%s420 + $0x58] sm:$0xff]
        %v545 = vld [vmem:[%s420 + $0x60] sm:$0xff]
        %v546 = vld [vmem:[%s420 + $0x68] sm:$0xff]
        %v547 = vld [vmem:[%s420 + $0x70] sm:$0xff]
        %v548 = vld [vmem:[%s420 + $0x78] sm:$0xff]
        %549 = vst [vmem:[#allocation2] sm:$0xff] %v533
        %550 = vst [vmem:[#allocation2 + $0x8] sm:$0xff] %v534
        %551 = vst [vmem:[#allocation2 + $0x10] sm:$0xff] %v535
        %552 = vst [vmem:[#allocation2 + $0x18] sm:$0xff] %v536
        %553 = vst [vmem:[#allocation2 + $0x20] sm:$0xff] %v537
        %554 = vst [vmem:[#allocation2 + $0x28] sm:$0xff] %v538
        %555 = vst [vmem:[#allocation2 + $0x30] sm:$0xff] %v539
        %556 = vst [vmem:[#allocation2 + $0x38] sm:$0xff] %v540
        %557 = vst [vmem:[#allocation2 + $0x40] sm:$0xff] %v541
        %558 = vst [vmem:[#allocation2 + $0x48] sm:$0xff] %v542
        %559 = vst [vmem:[#allocation2 + $0x50] sm:$0xff] %v543
        %560 = vst [vmem:[#allocation2 + $0x58] sm:$0xff] %v544
        %561 = vst [vmem:[#allocation2 + $0x60] sm:$0xff] %v545
        %562 = vst [vmem:[#allocation2 + $0x68] sm:$0xff] %v546
        %563 = vst [vmem:[#allocation2 + $0x70] sm:$0xff] %v547
        %564 = vst [vmem:[#allocation2 + $0x78] sm:$0xff] %v548
        %p565 = scmp.eq.s32.totalorder %s516, 0
        %p566 = scmp.eq.s32.totalorder %s516, 1
        %p567 = por %p565, %p566
        %p568 = scmp.eq.s32.totalorder %s516, 3
        %p569 = por %p567, %p568
        // Predicated region
        $region69: #{tpu_custom_call.1} parent=43 // pred_check
          %p570 = pneg %p569
        $region70: #{tpu_custom_call.1} parent=43 // pred_check_branch
          %572 = sbr.rel (%p570) target = $region72
        $region71: #{tpu_custom_call.1} parent=43 // pred_region
          %s573 = scalar_select %p567, 1, 0
          %s574 = scvt.s32.f32 %s573
          %v575 = vld [vmem:[%s440] sm:$0xff]
          %v576 = vld [vmem:[%s440 + $0x8] sm:$0xff]
          %v577 = vld [vmem:[%s440 + $0x10] sm:$0xff]
          %v578 = vld [vmem:[%s440 + $0x18] sm:$0xff]
          %v579 = vld [vmem:[%s440 + $0x20] sm:$0xff]
          %v580 = vld [vmem:[%s440 + $0x28] sm:$0xff]
          %v581 = vld [vmem:[%s440 + $0x30] sm:$0xff]
          %v582 = vld [vmem:[%s440 + $0x38] sm:$0xff]
          %v583 = vld [vmem:[%s440 + $0x40] sm:$0xff]
          %v584 = vld [vmem:[%s440 + $0x48] sm:$0xff]
          %v585 = vld [vmem:[%s440 + $0x50] sm:$0xff]
          %v586 = vld [vmem:[%s440 + $0x58] sm:$0xff]
          %v587 = vld [vmem:[%s440 + $0x60] sm:$0xff]
          %v588 = vld [vmem:[%s440 + $0x68] sm:$0xff]
          %v589 = vld [vmem:[%s440 + $0x70] sm:$0xff]
          %v590 = vld [vmem:[%s440 + $0x78] sm:$0xff]
          %vm591 = vcmp.eq.f32.partialorder %v575, 1.0
          %vm592 = vcmp.eq.f32.partialorder %v576, 1.0
          %vm593 = vcmp.eq.f32.partialorder %v577, 1.0
          %vm594 = vcmp.eq.f32.partialorder %v578, 1.0
          %vm595 = vcmp.eq.f32.partialorder %v579, 1.0
          %vm596 = vcmp.eq.f32.partialorder %v580, 1.0
          %vm597 = vcmp.eq.f32.partialorder %v581, 1.0
          %vm598 = vcmp.eq.f32.partialorder %v582, 1.0
          %vm599 = vcmp.eq.f32.partialorder %v583, 1.0
          %vm600 = vcmp.eq.f32.partialorder %v584, 1.0
          %vm601 = vcmp.eq.f32.partialorder %v585, 1.0
          %vm602 = vcmp.eq.f32.partialorder %v586, 1.0
          %vm603 = vcmp.eq.f32.partialorder %v587, 1.0
          %vm604 = vcmp.eq.f32.partialorder %v588, 1.0
          %vm605 = vcmp.eq.f32.partialorder %v589, 1.0
          %vm606 = vcmp.eq.f32.partialorder %v590, 1.0
          %v607 = vsel %vm591, 1, 0
          %v608 = vsel %vm592, 1, 0
          %v609 = vsel %vm593, 1, 0
          %v610 = vsel %vm594, 1, 0
          %v611 = vsel %vm595, 1, 0
          %v612 = vsel %vm596, 1, 0
          %v613 = vsel %vm597, 1, 0
          %v614 = vsel %vm598, 1, 0
          %v615 = vsel %vm599, 1, 0
          %v616 = vsel %vm600, 1, 0
          %v617 = vsel %vm601, 1, 0
          %v618 = vsel %vm602, 1, 0
          %v619 = vsel %vm603, 1, 0
          %v620 = vsel %vm604, 1, 0
          %v621 = vsel %vm605, 1, 0
          %v622 = vsel %vm606, 1, 0
          %v623 = vcvt.s32.f32 %v607
          %v624 = vcvt.s32.f32 %v608
          %v625 = vcvt.s32.f32 %v609
          %v626 = vcvt.s32.f32 %v610
          %v627 = vcvt.s32.f32 %v611
          %v628 = vcvt.s32.f32 %v612
          %v629 = vcvt.s32.f32 %v613
          %v630 = vcvt.s32.f32 %v614
          %v631 = vcvt.s32.f32 %v615
          %v632 = vcvt.s32.f32 %v616
          %v633 = vcvt.s32.f32 %v617
          %v634 = vcvt.s32.f32 %v618
          %v635 = vcvt.s32.f32 %v619
          %v636 = vcvt.s32.f32 %v620
          %v637 = vcvt.s32.f32 %v621
          %v638 = vcvt.s32.f32 %v622
          %v639 = vld [vmem:[%s450] sm:$0xff]
          %v640 = vld [vmem:[%s450 + $0x8] sm:$0xff]
          %v641 = vld [vmem:[%s450 + $0x10] sm:$0xff]
          %v642 = vld [vmem:[%s450 + $0x18] sm:$0xff]
          %v643 = vld [vmem:[%s450 + $0x20] sm:$0xff]
          %v644 = vld [vmem:[%s450 + $0x28] sm:$0xff]
          %v645 = vld [vmem:[%s450 + $0x30] sm:$0xff]
          %v646 = vld [vmem:[%s450 + $0x38] sm:$0xff]
          %v647 = vld [vmem:[%s450 + $0x40] sm:$0xff]
          %v648 = vld [vmem:[%s450 + $0x48] sm:$0xff]
          %v649 = vld [vmem:[%s450 + $0x50] sm:$0xff]
          %v650 = vld [vmem:[%s450 + $0x58] sm:$0xff]
          %v651 = vld [vmem:[%s450 + $0x60] sm:$0xff]
          %v652 = vld [vmem:[%s450 + $0x68] sm:$0xff]
          %v653 = vld [vmem:[%s450 + $0x70] sm:$0xff]
          %v654 = vld [vmem:[%s450 + $0x78] sm:$0xff]
          %vm655 = vcmp.eq.f32.partialorder %v639, 1.0
          %vm656 = vcmp.eq.f32.partialorder %v640, 1.0
          %vm657 = vcmp.eq.f32.partialorder %v641, 1.0
          %vm658 = vcmp.eq.f32.partialorder %v642, 1.0
          %vm659 = vcmp.eq.f32.partialorder %v643, 1.0
          %vm660 = vcmp.eq.f32.partialorder %v644, 1.0
          %vm661 = vcmp.eq.f32.partialorder %v645, 1.0
          %vm662 = vcmp.eq.f32.partialorder %v646, 1.0
          %vm663 = vcmp.eq.f32.partialorder %v647, 1.0
          %vm664 = vcmp.eq.f32.partialorder %v648, 1.0
          %vm665 = vcmp.eq.f32.partialorder %v649, 1.0
          %vm666 = vcmp.eq.f32.partialorder %v650, 1.0
          %vm667 = vcmp.eq.f32.partialorder %v651, 1.0
          %vm668 = vcmp.eq.f32.partialorder %v652, 1.0
          %vm669 = vcmp.eq.f32.partialorder %v653, 1.0
          %vm670 = vcmp.eq.f32.partialorder %v654, 1.0
          %v671 = vsel %vm655, 1, 0
          %v672 = vsel %vm656, 1, 0
          %v673 = vsel %vm657, 1, 0
          %v674 = vsel %vm658, 1, 0
          %v675 = vsel %vm659, 1, 0
          %v676 = vsel %vm660, 1, 0
          %v677 = vsel %vm661, 1, 0
          %v678 = vsel %vm662, 1, 0
          %v679 = vsel %vm663, 1, 0
          %v680 = vsel %vm664, 1, 0
          %v681 = vsel %vm665, 1, 0
          %v682 = vsel %vm666, 1, 0
          %v683 = vsel %vm667, 1, 0
          %v684 = vsel %vm668, 1, 0
          %v685 = vsel %vm669, 1, 0
          %v686 = vsel %vm670, 1, 0
          %v687 = vcvt.s32.f32 %v671
          %v688 = vcvt.s32.f32 %v672
          %v689 = vcvt.s32.f32 %v673
          %v690 = vcvt.s32.f32 %v674
          %v691 = vcvt.s32.f32 %v675
          %v692 = vcvt.s32.f32 %v676
          %v693 = vcvt.s32.f32 %v677
          %v694 = vcvt.s32.f32 %v678
          %v695 = vcvt.s32.f32 %v679
          %v696 = vcvt.s32.f32 %v680
          %v697 = vcvt.s32.f32 %v681
          %v698 = vcvt.s32.f32 %v682
          %v699 = vcvt.s32.f32 %v683
          %v700 = vcvt.s32.f32 %v684
          %v701 = vcvt.s32.f32 %v685
          %v702 = vcvt.s32.f32 %v686
          %v703 = vstv %s574
          %v704 = vmul.f32 %v703, %v687
          %v705 = vmul.f32 %v703, %v688
          %v706 = vmul.f32 %v703, %v689
          %v707 = vmul.f32 %v703, %v690
          %v708 = vmul.f32 %v703, %v691
          %v709 = vmul.f32 %v703, %v692
          %v710 = vmul.f32 %v703, %v693
          %v711 = vmul.f32 %v703, %v694
          %v712 = vmul.f32 %v703, %v695
          %v713 = vmul.f32 %v703, %v696
          %v714 = vmul.f32 %v703, %v697
          %v715 = vmul.f32 %v703, %v698
          %v716 = vmul.f32 %v703, %v699
          %v717 = vmul.f32 %v703, %v700
          %v718 = vmul.f32 %v703, %v701
          %v719 = vmul.f32 %v703, %v702
          %v720 = vadd.f32 %v623, %v704
          %v721 = vadd.f32 %v624, %v705
          %v722 = vadd.f32 %v625, %v706
          %v723 = vadd.f32 %v626, %v707
          %v724 = vadd.f32 %v627, %v708
          %v725 = vadd.f32 %v628, %v709
          %v726 = vadd.f32 %v629, %v710
          %v727 = vadd.f32 %v630, %v711
          %v728 = vadd.f32 %v631, %v712
          %v729 = vadd.f32 %v632, %v713
          %v730 = vadd.f32 %v633, %v714
          %v731 = vadd.f32 %v634, %v715
          %v732 = vadd.f32 %v635, %v716
          %v733 = vadd.f32 %v636, %v717
          %v734 = vadd.f32 %v637, %v718
          %v735 = vadd.f32 %v638, %v719
          %v736 = vsub.f32 %v533, %v720
          %v737 = vsub.f32 %v534, %v721
          %v738 = vsub.f32 %v535, %v722
          %v739 = vsub.f32 %v536, %v723
          %v740 = vsub.f32 %v537, %v724
          %v741 = vsub.f32 %v538, %v725
          %v742 = vsub.f32 %v539, %v726
          %v743 = vsub.f32 %v540, %v727
          %v744 = vsub.f32 %v541, %v728
          %v745 = vsub.f32 %v542, %v729
          %v746 = vsub.f32 %v543, %v730
          %v747 = vsub.f32 %v544, %v731
          %v748 = vsub.f32 %v545, %v732
          %v749 = vsub.f32 %v546, %v733
          %v750 = vsub.f32 %v547, %v734
          %v751 = vsub.f32 %v548, %v735
          %v752 = vsub.f32 1.0, %v736
          %v753 = vsub.f32 1.0, %v737
          %v754 = vsub.f32 1.0, %v738
          %v755 = vsub.f32 1.0, %v739
          %v756 = vsub.f32 1.0, %v740
          %v757 = vsub.f32 1.0, %v741
          %v758 = vsub.f32 1.0, %v742
          %v759 = vsub.f32 1.0, %v743
          %v760 = vsub.f32 1.0, %v744
          %v761 = vsub.f32 1.0, %v745
          %v762 = vsub.f32 1.0, %v746
          %v763 = vsub.f32 1.0, %v747
          %v764 = vsub.f32 1.0, %v748
          %v765 = vsub.f32 1.0, %v749
          %v766 = vsub.f32 1.0, %v750
          %v767 = vsub.f32 1.0, %v751
          %v768 = vpack.c.bf16 %v753, %v752
          %v769 = vpack.c.bf16 %v755, %v754
          %v770 = vpack.c.bf16 %v757, %v756
          %v771 = vpack.c.bf16 %v759, %v758
          %v772 = vpack.c.bf16 %v761, %v760
          %v773 = vpack.c.bf16 %v763, %v762
          %v774 = vpack.c.bf16 %v765, %v764
          %v775 = vpack.c.bf16 %v767, %v766
          %v792 = vunpack.c.l.b16 %v517
          %v793 = vunpack.c.l.b16 %v518
          %v794 = vunpack.c.l.b16 %v519
          %v795 = vunpack.c.l.b16 %v520
          %v796 = vunpack.c.l.b16 %v521
          %v797 = vunpack.c.l.b16 %v522
          %v798 = vunpack.c.l.b16 %v523
          %v799 = vunpack.c.l.b16 %v524
          %v800 = vunpack.c.l.b16 %v525
          %v801 = vunpack.c.l.b16 %v526
          %v802 = vunpack.c.l.b16 %v527
          %v803 = vunpack.c.l.b16 %v528
          %v804 = vunpack.c.l.b16 %v529
          %v805 = vunpack.c.l.b16 %v530
          %v806 = vunpack.c.l.b16 %v531
          %v807 = vunpack.c.l.b16 %v532
          %v808 = vpack.c.b16 %v793, %v792
          %v809 = vpack.c.b16 %v795, %v794
          %v810 = vpack.c.b16 %v797, %v796
          %v811 = vpack.c.b16 %v799, %v798
          %v812 = vpack.c.b16 %v801, %v800
          %v813 = vpack.c.b16 %v803, %v802
          %v814 = vpack.c.b16 %v805, %v804
          %v815 = vpack.c.b16 %v807, %v806
          %824 = vmatpush.bf16.msra.mxu0 %v775
          %825 = vmatpush.bf16.msra.mxu0 %v774
          %826 = vmatpush.bf16.msra.mxu0 %v773
          %827 = vmatpush.bf16.msra.mxu0 %v772
          %828 = vmatpush.bf16.msra.mxu0 %v771
          %829 = vmatpush.bf16.msra.mxu0 %v770
          %830 = vmatpush.bf16.msra.mxu0 %v769
          %831 = vmatpush.bf16.msra.mxu0 %v768
          %832 = vmatmul.bf16.gmra.mxu0 %v808
          %v833 = vpop.f32.mrf.mxu0
          %v834 = vadd.f32 0.0, %v833
          %v835 = vpop.f32.mrf.mxu0
          %v836 = vadd.f32 0.0, %v835
          %837 = vmatmul.bf16.gmra.mxu0 %v809
          %v838 = vpop.f32.mrf.mxu0
          %v839 = vadd.f32 0.0, %v838
          %v840 = vpop.f32.mrf.mxu0
          %v841 = vadd.f32 0.0, %v840
          %842 = vmatmul.bf16.gmra.mxu0 %v810
          %v843 = vpop.f32.mrf.mxu0
          %v844 = vadd.f32 0.0, %v843
          %v845 = vpop.f32.mrf.mxu0
          %v846 = vadd.f32 0.0, %v845
          %847 = vmatmul.bf16.gmra.mxu0 %v811
          %v848 = vpop.f32.mrf.mxu0
          %v849 = vadd.f32 0.0, %v848
          %v850 = vpop.f32.mrf.mxu0
          %v851 = vadd.f32 0.0, %v850
          %852 = vmatmul.bf16.gmra.mxu0 %v812
          %v853 = vpop.f32.mrf.mxu0
          %v854 = vadd.f32 0.0, %v853
          %v855 = vpop.f32.mrf.mxu0
          %v856 = vadd.f32 0.0, %v855
          %857 = vmatmul.bf16.gmra.mxu0 %v813
          %v858 = vpop.f32.mrf.mxu0
          %v859 = vadd.f32 0.0, %v858
          %v860 = vpop.f32.mrf.mxu0
          %v861 = vadd.f32 0.0, %v860
          %862 = vmatmul.bf16.gmra.mxu0 %v814
          %v863 = vpop.f32.mrf.mxu0
          %v864 = vadd.f32 0.0, %v863
          %v865 = vpop.f32.mrf.mxu0
          %v866 = vadd.f32 0.0, %v865
          %867 = vmatmul.bf16.gmra.mxu0 %v815
          %v868 = vpop.f32.mrf.mxu0
          %v869 = vadd.f32 0.0, %v868
          %v870 = vpop.f32.mrf.mxu0
          %v871 = vadd.f32 0.0, %v870
          %872 = vdwg.mxu0
          %v873 = vadd.f32 %v752, %v834
          %v874 = vadd.f32 %v753, %v836
          %v875 = vadd.f32 %v754, %v839
          %v876 = vadd.f32 %v755, %v841
          %v877 = vadd.f32 %v756, %v844
          %v878 = vadd.f32 %v757, %v846
          %v879 = vadd.f32 %v758, %v849
          %v880 = vadd.f32 %v759, %v851
          %v881 = vadd.f32 %v760, %v854
          %v882 = vadd.f32 %v761, %v856
          %v883 = vadd.f32 %v762, %v859
          %v884 = vadd.f32 %v763, %v861
          %v885 = vadd.f32 %v764, %v864
          %v886 = vadd.f32 %v765, %v866
          %v887 = vadd.f32 %v766, %v869
          %v888 = vadd.f32 %v767, %v871
          %889 = vmatpush.bf16.msra.mxu0 %v815
          %890 = vmatpush.bf16.msra.mxu0 %v814
          %891 = vmatpush.bf16.msra.mxu0 %v813
          %892 = vmatpush.bf16.msra.mxu0 %v812
          %893 = vmatpush.bf16.msra.mxu0 %v811
          %894 = vmatpush.bf16.msra.mxu0 %v810
          %895 = vmatpush.bf16.msra.mxu0 %v809
          %896 = vmatpush.bf16.msra.mxu0 %v808
          %897 = vmatmul.bf16.gmra.mxu0 %v768
          %v898 = vpop.f32.mrf.mxu0
          %v899 = vadd.f32 0.0, %v898
          %v900 = vpop.f32.mrf.mxu0
          %v901 = vadd.f32 0.0, %v900
          %902 = vmatmul.bf16.gmra.mxu0 %v769
          %v903 = vpop.f32.mrf.mxu0
          %v904 = vadd.f32 0.0, %v903
          %v905 = vpop.f32.mrf.mxu0
          %v906 = vadd.f32 0.0, %v905
          %907 = vmatmul.bf16.gmra.mxu0 %v770
          %v908 = vpop.f32.mrf.mxu0
          %v909 = vadd.f32 0.0, %v908
          %v910 = vpop.f32.mrf.mxu0
          %v911 = vadd.f32 0.0, %v910
          %912 = vmatmul.bf16.gmra.mxu0 %v771
          %v913 = vpop.f32.mrf.mxu0
          %v914 = vadd.f32 0.0, %v913
          %v915 = vpop.f32.mrf.mxu0
          %v916 = vadd.f32 0.0, %v915
          %917 = vmatmul.bf16.gmra.mxu0 %v772
          %v918 = vpop.f32.mrf.mxu0
          %v919 = vadd.f32 0.0, %v918
          %v920 = vpop.f32.mrf.mxu0
          %v921 = vadd.f32 0.0, %v920
          %922 = vmatmul.bf16.gmra.mxu0 %v773
          %v923 = vpop.f32.mrf.mxu0
          %v924 = vadd.f32 0.0, %v923
          %v925 = vpop.f32.mrf.mxu0
          %v926 = vadd.f32 0.0, %v925
          %927 = vmatmul.bf16.gmra.mxu0 %v774
          %v928 = vpop.f32.mrf.mxu0
          %v929 = vadd.f32 0.0, %v928
          %v930 = vpop.f32.mrf.mxu0
          %v931 = vadd.f32 0.0, %v930
          %932 = vmatmul.bf16.gmra.mxu0 %v775
          %v933 = vpop.f32.mrf.mxu0
          %v934 = vadd.f32 0.0, %v933
          %v935 = vpop.f32.mrf.mxu0
          %v936 = vadd.f32 0.0, %v935
          %937 = vdwg.mxu0
          %v938 = vadd.f32 %v873, %v899
          %v939 = vadd.f32 %v874, %v901
          %v940 = vadd.f32 %v875, %v904
          %v941 = vadd.f32 %v876, %v906
          %v942 = vadd.f32 %v877, %v909
          %v943 = vadd.f32 %v878, %v911
          %v944 = vadd.f32 %v879, %v914
          %v945 = vadd.f32 %v880, %v916
          %v946 = vadd.f32 %v881, %v919
          %v947 = vadd.f32 %v882, %v921
          %v948 = vadd.f32 %v883, %v924
          %v949 = vadd.f32 %v884, %v926
          %v950 = vadd.f32 %v885, %v929
          %v951 = vadd.f32 %v886, %v931
          %v952 = vadd.f32 %v887, %v934
          %v953 = vadd.f32 %v888, %v936
          %v954 = vmax.f32 %v938, 0.0
          %v955 = vmax.f32 %v939, 0.0
          %v956 = vmax.f32 %v940, 0.0
          %v957 = vmax.f32 %v941, 0.0
          %v958 = vmax.f32 %v942, 0.0
          %v959 = vmax.f32 %v943, 0.0
          %v960 = vmax.f32 %v944, 0.0
          %v961 = vmax.f32 %v945, 0.0
          %v962 = vmax.f32 %v946, 0.0
          %v963 = vmax.f32 %v947, 0.0
          %v964 = vmax.f32 %v948, 0.0
          %v965 = vmax.f32 %v949, 0.0
          %v966 = vmax.f32 %v950, 0.0
          %v967 = vmax.f32 %v951, 0.0
          %v968 = vmax.f32 %v952, 0.0
          %v969 = vmax.f32 %v953, 0.0
          %v970 = vmin.f32 %v954, 1.0
          %v971 = vmin.f32 %v955, 1.0
          %v972 = vmin.f32 %v956, 1.0
          %v973 = vmin.f32 %v957, 1.0
          %v974 = vmin.f32 %v958, 1.0
          %v975 = vmin.f32 %v959, 1.0
          %v976 = vmin.f32 %v960, 1.0
          %v977 = vmin.f32 %v961, 1.0
          %v978 = vmin.f32 %v962, 1.0
          %v979 = vmin.f32 %v963, 1.0
          %v980 = vmin.f32 %v964, 1.0
          %v981 = vmin.f32 %v965, 1.0
          %v982 = vmin.f32 %v966, 1.0
          %v983 = vmin.f32 %v967, 1.0
          %v984 = vmin.f32 %v968, 1.0
          %v985 = vmin.f32 %v969, 1.0
          %v986 = vsub.f32 1.0, %v970
          %v987 = vsub.f32 1.0, %v971
          %v988 = vsub.f32 1.0, %v972
          %v989 = vsub.f32 1.0, %v973
          %v990 = vsub.f32 1.0, %v974
          %v991 = vsub.f32 1.0, %v975
          %v992 = vsub.f32 1.0, %v976
          %v993 = vsub.f32 1.0, %v977
          %v994 = vsub.f32 1.0, %v978
          %v995 = vsub.f32 1.0, %v979
          %v996 = vsub.f32 1.0, %v980
          %v997 = vsub.f32 1.0, %v981
          %v998 = vsub.f32 1.0, %v982
          %v999 = vsub.f32 1.0, %v983
          %v1000 = vsub.f32 1.0, %v984
          %v1001 = vsub.f32 1.0, %v985
          %v1002 = vpack.c.bf16 %v987, %v986
          %v1003 = vpack.c.bf16 %v989, %v988
          %v1004 = vpack.c.bf16 %v991, %v990
          %v1005 = vpack.c.bf16 %v993, %v992
          %v1006 = vpack.c.bf16 %v995, %v994
          %v1007 = vpack.c.bf16 %v997, %v996
          %v1008 = vpack.c.bf16 %v999, %v998
          %v1009 = vpack.c.bf16 %v1001, %v1000
          %1010 = vmatpush.bf16.msra.mxu0 %v1009
          %1011 = vmatpush.bf16.msra.mxu0 %v1008
          %1012 = vmatpush.bf16.msra.mxu0 %v1007
          %1013 = vmatpush.bf16.msra.mxu0 %v1006
          %1014 = vmatpush.bf16.msra.mxu0 %v1005
          %1015 = vmatpush.bf16.msra.mxu0 %v1004
          %1016 = vmatpush.bf16.msra.mxu0 %v1003
          %1017 = vmatpush.bf16.msra.mxu0 %v1002
          %1018 = vmatmul.bf16.gmra.mxu0 %v808
          %v1019 = vpop.f32.mrf.mxu0
          %v1020 = vadd.f32 0.0, %v1019
          %v1021 = vpop.f32.mrf.mxu0
          %v1022 = vadd.f32 0.0, %v1021
          %1023 = vmatmul.bf16.gmra.mxu0 %v809
          %v1024 = vpop.f32.mrf.mxu0
          %v1025 = vadd.f32 0.0, %v1024
          %v1026 = vpop.f32.mrf.mxu0
          %v1027 = vadd.f32 0.0, %v1026
          %1028 = vmatmul.bf16.gmra.mxu0 %v810
          %v1029 = vpop.f32.mrf.mxu0
          %v1030 = vadd.f32 0.0, %v1029
          %v1031 = vpop.f32.mrf.mxu0
          %v1032 = vadd.f32 0.0, %v1031
          %1033 = vmatmul.bf16.gmra.mxu0 %v811
          %v1034 = vpop.f32.mrf.mxu0
          %v1035 = vadd.f32 0.0, %v1034
          %v1036 = vpop.f32.mrf.mxu0
          %v1037 = vadd.f32 0.0, %v1036
          %1038 = vmatmul.bf16.gmra.mxu0 %v812
          %v1039 = vpop.f32.mrf.mxu0
          %v1040 = vadd.f32 0.0, %v1039
          %v1041 = vpop.f32.mrf.mxu0
          %v1042 = vadd.f32 0.0, %v1041
          %1043 = vmatmul.bf16.gmra.mxu0 %v813
          %v1044 = vpop.f32.mrf.mxu0
          %v1045 = vadd.f32 0.0, %v1044
          %v1046 = vpop.f32.mrf.mxu0
          %v1047 = vadd.f32 0.0, %v1046
          %1048 = vmatmul.bf16.gmra.mxu0 %v814
          %v1049 = vpop.f32.mrf.mxu0
          %v1050 = vadd.f32 0.0, %v1049
          %v1051 = vpop.f32.mrf.mxu0
          %v1052 = vadd.f32 0.0, %v1051
          %1053 = vmatmul.bf16.gmra.mxu0 %v815
          %v1054 = vpop.f32.mrf.mxu0
          %v1055 = vadd.f32 0.0, %v1054
          %v1056 = vpop.f32.mrf.mxu0
          %v1057 = vadd.f32 0.0, %v1056
          %1058 = vdwg.mxu0
          %v1059 = vadd.f32 %v986, %v1020
          %v1060 = vadd.f32 %v987, %v1022
          %v1061 = vadd.f32 %v988, %v1025
          %v1062 = vadd.f32 %v989, %v1027
          %v1063 = vadd.f32 %v990, %v1030
          %v1064 = vadd.f32 %v991, %v1032
          %v1065 = vadd.f32 %v992, %v1035
          %v1066 = vadd.f32 %v993, %v1037
          %v1067 = vadd.f32 %v994, %v1040
          %v1068 = vadd.f32 %v995, %v1042
          %v1069 = vadd.f32 %v996, %v1045
          %v1070 = vadd.f32 %v997, %v1047
          %v1071 = vadd.f32 %v998, %v1050
          %v1072 = vadd.f32 %v999, %v1052
          %v1073 = vadd.f32 %v1000, %v1055
          %v1074 = vadd.f32 %v1001, %v1057
          %1075 = vmatpush.bf16.msra.mxu0 %v815
          %1076 = vmatpush.bf16.msra.mxu0 %v814
          %1077 = vmatpush.bf16.msra.mxu0 %v813
          %1078 = vmatpush.bf16.msra.mxu0 %v812
          %1079 = vmatpush.bf16.msra.mxu0 %v811
          %1080 = vmatpush.bf16.msra.mxu0 %v810
          %1081 = vmatpush.bf16.msra.mxu0 %v809
          %1082 = vmatpush.bf16.msra.mxu0 %v808
          %1083 = vmatmul.bf16.gmra.mxu0 %v1002
          %v1084 = vpop.f32.mrf.mxu0
          %v1085 = vadd.f32 0.0, %v1084
          %v1086 = vpop.f32.mrf.mxu0
          %v1087 = vadd.f32 0.0, %v1086
          %1088 = vmatmul.bf16.gmra.mxu0 %v1003
          %v1089 = vpop.f32.mrf.mxu0
          %v1090 = vadd.f32 0.0, %v1089
          %v1091 = vpop.f32.mrf.mxu0
          %v1092 = vadd.f32 0.0, %v1091
          %1093 = vmatmul.bf16.gmra.mxu0 %v1004
          %v1094 = vpop.f32.mrf.mxu0
          %v1095 = vadd.f32 0.0, %v1094
          %v1096 = vpop.f32.mrf.mxu0
          %v1097 = vadd.f32 0.0, %v1096
          %1098 = vmatmul.bf16.gmra.mxu0 %v1005
          %v1099 = vpop.f32.mrf.mxu0
          %v1100 = vadd.f32 0.0, %v1099
          %v1101 = vpop.f32.mrf.mxu0
          %v1102 = vadd.f32 0.0, %v1101
          %1103 = vmatmul.bf16.gmra.mxu0 %v1006
          %v1104 = vpop.f32.mrf.mxu0
          %v1105 = vadd.f32 0.0, %v1104
          %v1106 = vpop.f32.mrf.mxu0
          %v1107 = vadd.f32 0.0, %v1106
          %1108 = vmatmul.bf16.gmra.mxu0 %v1007
          %v1109 = vpop.f32.mrf.mxu0
          %v1110 = vadd.f32 0.0, %v1109
          %v1111 = vpop.f32.mrf.mxu0
          %v1112 = vadd.f32 0.0, %v1111
          %1113 = vmatmul.bf16.gmra.mxu0 %v1008
          %v1114 = vpop.f32.mrf.mxu0
          %v1115 = vadd.f32 0.0, %v1114
          %v1116 = vpop.f32.mrf.mxu0
          %v1117 = vadd.f32 0.0, %v1116
          %1118 = vmatmul.bf16.gmra.mxu0 %v1009
          %v1119 = vpop.f32.mrf.mxu0
          %v1120 = vadd.f32 0.0, %v1119
          %v1121 = vpop.f32.mrf.mxu0
          %v1122 = vadd.f32 0.0, %v1121
          %1123 = vdwg.mxu0
          %v1124 = vadd.f32 %v1059, %v1085
          %v1125 = vadd.f32 %v1060, %v1087
          %v1126 = vadd.f32 %v1061, %v1090
          %v1127 = vadd.f32 %v1062, %v1092
          %v1128 = vadd.f32 %v1063, %v1095
          %v1129 = vadd.f32 %v1064, %v1097
          %v1130 = vadd.f32 %v1065, %v1100
          %v1131 = vadd.f32 %v1066, %v1102
          %v1132 = vadd.f32 %v1067, %v1105
          %v1133 = vadd.f32 %v1068, %v1107
          %v1134 = vadd.f32 %v1069, %v1110
          %v1135 = vadd.f32 %v1070, %v1112
          %v1136 = vadd.f32 %v1071, %v1115
          %v1137 = vadd.f32 %v1072, %v1117
          %v1138 = vadd.f32 %v1073, %v1120
          %v1139 = vadd.f32 %v1074, %v1122
          %v1140 = vmax.f32 %v1124, 0.0
          %v1141 = vmax.f32 %v1125, 0.0
          %v1142 = vmax.f32 %v1126, 0.0
          %v1143 = vmax.f32 %v1127, 0.0
          %v1144 = vmax.f32 %v1128, 0.0
          %v1145 = vmax.f32 %v1129, 0.0
          %v1146 = vmax.f32 %v1130, 0.0
          %v1147 = vmax.f32 %v1131, 0.0
          %v1148 = vmax.f32 %v1132, 0.0
          %v1149 = vmax.f32 %v1133, 0.0
          %v1150 = vmax.f32 %v1134, 0.0
          %v1151 = vmax.f32 %v1135, 0.0
          %v1152 = vmax.f32 %v1136, 0.0
          %v1153 = vmax.f32 %v1137, 0.0
          %v1154 = vmax.f32 %v1138, 0.0
          %v1155 = vmax.f32 %v1139, 0.0
          %v1156 = vmin.f32 %v1140, 1.0
          %v1157 = vmin.f32 %v1141, 1.0
          %v1158 = vmin.f32 %v1142, 1.0
          %v1159 = vmin.f32 %v1143, 1.0
          %v1160 = vmin.f32 %v1144, 1.0
          %v1161 = vmin.f32 %v1145, 1.0
          %v1162 = vmin.f32 %v1146, 1.0
          %v1163 = vmin.f32 %v1147, 1.0
          %v1164 = vmin.f32 %v1148, 1.0
          %v1165 = vmin.f32 %v1149, 1.0
          %v1166 = vmin.f32 %v1150, 1.0
          %v1167 = vmin.f32 %v1151, 1.0
          %v1168 = vmin.f32 %v1152, 1.0
          %v1169 = vmin.f32 %v1153, 1.0
          %v1170 = vmin.f32 %v1154, 1.0
          %v1171 = vmin.f32 %v1155, 1.0
          %vm1172 = vcmp.eq.f32.partialorder %v533, 1.0
          %vm1173 = vcmp.eq.f32.partialorder %v534, 1.0
          %vm1174 = vcmp.eq.f32.partialorder %v535, 1.0
          %vm1175 = vcmp.eq.f32.partialorder %v536, 1.0
          %vm1176 = vcmp.eq.f32.partialorder %v537, 1.0
          %vm1177 = vcmp.eq.f32.partialorder %v538, 1.0
          %vm1178 = vcmp.eq.f32.partialorder %v539, 1.0
          %vm1179 = vcmp.eq.f32.partialorder %v540, 1.0
          %vm1180 = vcmp.eq.f32.partialorder %v541, 1.0
          %vm1181 = vcmp.eq.f32.partialorder %v542, 1.0
          %vm1182 = vcmp.eq.f32.partialorder %v543, 1.0
          %vm1183 = vcmp.eq.f32.partialorder %v544, 1.0
          %vm1184 = vcmp.eq.f32.partialorder %v545, 1.0
          %vm1185 = vcmp.eq.f32.partialorder %v546, 1.0
          %vm1186 = vcmp.eq.f32.partialorder %v547, 1.0
          %vm1187 = vcmp.eq.f32.partialorder %v548, 1.0
          %v1188 = vsel %vm1172, 1, 0
          %v1189 = vsel %vm1173, 1, 0
          %v1190 = vsel %vm1174, 1, 0
          %v1191 = vsel %vm1175, 1, 0
          %v1192 = vsel %vm1176, 1, 0
          %v1193 = vsel %vm1177, 1, 0
          %v1194 = vsel %vm1178, 1, 0
          %v1195 = vsel %vm1179, 1, 0
          %v1196 = vsel %vm1180, 1, 0
          %v1197 = vsel %vm1181, 1, 0
          %v1198 = vsel %vm1182, 1, 0
          %v1199 = vsel %vm1183, 1, 0
          %v1200 = vsel %vm1184, 1, 0
          %v1201 = vsel %vm1185, 1, 0
          %v1202 = vsel %vm1186, 1, 0
          %v1203 = vsel %vm1187, 1, 0
          %v1204 = vcvt.s32.f32 %v1188
          %v1205 = vcvt.s32.f32 %v1189
          %v1206 = vcvt.s32.f32 %v1190
          %v1207 = vcvt.s32.f32 %v1191
          %v1208 = vcvt.s32.f32 %v1192
          %v1209 = vcvt.s32.f32 %v1193
          %v1210 = vcvt.s32.f32 %v1194
          %v1211 = vcvt.s32.f32 %v1195
          %v1212 = vcvt.s32.f32 %v1196
          %v1213 = vcvt.s32.f32 %v1197
          %v1214 = vcvt.s32.f32 %v1198
          %v1215 = vcvt.s32.f32 %v1199
          %v1216 = vcvt.s32.f32 %v1200
          %v1217 = vcvt.s32.f32 %v1201
          %v1218 = vcvt.s32.f32 %v1202
          %v1219 = vcvt.s32.f32 %v1203
          %1220 = vmax.xlane.f32.xlu0 %v1204
          %v1221 = vpop.xlane.xlu0 %1220
          %1222 = vmax.xlane.f32.xlu0 %v1205
          %v1223 = vpop.xlane.xlu0 %1222
          %1224 = vmax.xlane.f32.xlu0 %v1206
          %v1225 = vpop.xlane.xlu0 %1224
          %1226 = vmax.xlane.f32.xlu0 %v1207
          %v1227 = vpop.xlane.xlu0 %1226
          %1228 = vmax.xlane.f32.xlu0 %v1208
          %v1229 = vpop.xlane.xlu0 %1228
          %1230 = vmax.xlane.f32.xlu0 %v1209
          %v1231 = vpop.xlane.xlu0 %1230
          %1232 = vmax.xlane.f32.xlu0 %v1210
          %v1233 = vpop.xlane.xlu0 %1232
          %1234 = vmax.xlane.f32.xlu0 %v1211
          %v1235 = vpop.xlane.xlu0 %1234
          %1236 = vmax.xlane.f32.xlu0 %v1212
          %v1237 = vpop.xlane.xlu0 %1236
          %1238 = vmax.xlane.f32.xlu0 %v1213
          %v1239 = vpop.xlane.xlu0 %1238
          %1240 = vmax.xlane.f32.xlu0 %v1214
          %v1241 = vpop.xlane.xlu0 %1240
          %1242 = vmax.xlane.f32.xlu0 %v1215
          %v1243 = vpop.xlane.xlu0 %1242
          %1244 = vmax.xlane.f32.xlu0 %v1216
          %v1245 = vpop.xlane.xlu0 %1244
          %1246 = vmax.xlane.f32.xlu0 %v1217
          %v1247 = vpop.xlane.xlu0 %1246
          %1248 = vmax.xlane.f32.xlu0 %v1218
          %v1249 = vpop.xlane.xlu0 %1248
          %1250 = vmax.xlane.f32.xlu0 %v1219
          %v1251 = vpop.xlane.xlu0 %1250
          %v1252 = vmax.f32 %v1221, %v1229
          %v1253 = vmax.f32 %v1223, %v1231
          %v1254 = vmax.f32 %v1225, %v1233
          %v1255 = vmax.f32 %v1227, %v1235
          %v1256 = vmax.f32 %v1252, %v1237
          %v1257 = vmax.f32 %v1253, %v1239
          %v1258 = vmax.f32 %v1254, %v1241
          %v1259 = vmax.f32 %v1255, %v1243
          %v1260 = vmax.f32 %v1256, %v1245
          %v1261 = vmax.f32 %v1257, %v1247
          %v1262 = vmax.f32 %v1258, %v1249
          %v1263 = vmax.f32 %v1259, %v1251
          %v1264 = vmax.f32 %v1260, %v1261
          %v1265 = vmax.f32 %v1262, %v1263
          %v1266 = vmax.f32 %v1264, %v1265
          %v1267 = vrot.slane %v1266, 4
          %v1268 = vmax.f32 %v1266, %v1267
          %v1269 = vrot.slane %v1268, 2
          %v1270 = vmax.f32 %v1268, %v1269
          %v1271 = vrot.slane %v1270, 1
          %v1272 = vmax.f32 %v1270, %v1271
          %vm1273 = vcmp.gt.f32.partialorder %v1272, 0.0
          %v1274 = vsel %vm1273, %v1156, %v533
          %v1275 = vsel %vm1273, %v1157, %v534
          %v1276 = vsel %vm1273, %v1158, %v535
          %v1277 = vsel %vm1273, %v1159, %v536
          %v1278 = vsel %vm1273, %v1160, %v537
          %v1279 = vsel %vm1273, %v1161, %v538
          %v1280 = vsel %vm1273, %v1162, %v539
          %v1281 = vsel %vm1273, %v1163, %v540
          %v1282 = vsel %vm1273, %v1164, %v541
          %v1283 = vsel %vm1273, %v1165, %v542
          %v1284 = vsel %vm1273, %v1166, %v543
          %v1285 = vsel %vm1273, %v1167, %v544
          %v1286 = vsel %vm1273, %v1168, %v545
          %v1287 = vsel %vm1273, %v1169, %v546
          %v1288 = vsel %vm1273, %v1170, %v547
          %v1289 = vsel %vm1273, %v1171, %v548
          %1290 = vst [vmem:[#allocation2] sm:$0xff] %v1274
          %1291 = vst [vmem:[#allocation2 + $0x8] sm:$0xff] %v1275
          %1292 = vst [vmem:[#allocation2 + $0x10] sm:$0xff] %v1276
          %1293 = vst [vmem:[#allocation2 + $0x18] sm:$0xff] %v1277
          %1294 = vst [vmem:[#allocation2 + $0x20] sm:$0xff] %v1278
          %1295 = vst [vmem:[#allocation2 + $0x28] sm:$0xff] %v1279
          %1296 = vst [vmem:[#allocation2 + $0x30] sm:$0xff] %v1280
          %1297 = vst [vmem:[#allocation2 + $0x38] sm:$0xff] %v1281
          %1298 = vst [vmem:[#allocation2 + $0x40] sm:$0xff] %v1282
          %1299 = vst [vmem:[#allocation2 + $0x48] sm:$0xff] %v1283
          %1300 = vst [vmem:[#allocation2 + $0x50] sm:$0xff] %v1284
          %1301 = vst [vmem:[#allocation2 + $0x58] sm:$0xff] %v1285
          %1302 = vst [vmem:[#allocation2 + $0x60] sm:$0xff] %v1286
          %1303 = vst [vmem:[#allocation2 + $0x68] sm:$0xff] %v1287
          %1304 = vst [vmem:[#allocation2 + $0x70] sm:$0xff] %v1288
          %1305 = vst [vmem:[#allocation2 + $0x78] sm:$0xff] %v1289
        $region72: #{tpu_custom_call.1} parent=43 // pred_fallthru
          _
        %v1306 = vld [vmem:[#allocation2] sm:$0xff]
        %v1307 = vld [vmem:[#allocation2 + $0x8] sm:$0xff]
        %v1308 = vld [vmem:[#allocation2 + $0x10] sm:$0xff]
        %v1309 = vld [vmem:[#allocation2 + $0x18] sm:$0xff]
        %v1310 = vld [vmem:[#allocation2 + $0x20] sm:$0xff]
        %v1311 = vld [vmem:[#allocation2 + $0x28] sm:$0xff]
        %v1312 = vld [vmem:[#allocation2 + $0x30] sm:$0xff]
        %v1313 = vld [vmem:[#allocation2 + $0x38] sm:$0xff]
        %v1314 = vld [vmem:[#allocation2 + $0x40] sm:$0xff]
        %v1315 = vld [vmem:[#allocation2 + $0x48] sm:$0xff]
        %v1316 = vld [vmem:[#allocation2 + $0x50] sm:$0xff]
        %v1317 = vld [vmem:[#allocation2 + $0x58] sm:$0xff]
        %v1318 = vld [vmem:[#allocation2 + $0x60] sm:$0xff]
        %v1319 = vld [vmem:[#allocation2 + $0x68] sm:$0xff]
        %v1320 = vld [vmem:[#allocation2 + $0x70] sm:$0xff]
        %v1321 = vld [vmem:[#allocation2 + $0x78] sm:$0xff]
        %vm1322 = vcmp.eq.f32.partialorder %v1306, 1.0
        %vm1323 = vcmp.eq.f32.partialorder %v1307, 1.0
        %vm1324 = vcmp.eq.f32.partialorder %v1308, 1.0
        %vm1325 = vcmp.eq.f32.partialorder %v1309, 1.0
        %vm1326 = vcmp.eq.f32.partialorder %v1310, 1.0
        %vm1327 = vcmp.eq.f32.partialorder %v1311, 1.0
        %vm1328 = vcmp.eq.f32.partialorder %v1312, 1.0
        %vm1329 = vcmp.eq.f32.partialorder %v1313, 1.0
        %vm1330 = vcmp.eq.f32.partialorder %v1314, 1.0
        %vm1331 = vcmp.eq.f32.partialorder %v1315, 1.0
        %vm1332 = vcmp.eq.f32.partialorder %v1316, 1.0
        %vm1333 = vcmp.eq.f32.partialorder %v1317, 1.0
        %vm1334 = vcmp.eq.f32.partialorder %v1318, 1.0
        %vm1335 = vcmp.eq.f32.partialorder %v1319, 1.0
        %vm1336 = vcmp.eq.f32.partialorder %v1320, 1.0
        %vm1337 = vcmp.eq.f32.partialorder %v1321, 1.0
        %v1338 = vsel %vm1322, 1, 0
        %v1339 = vsel %vm1323, 1, 0
        %v1340 = vsel %vm1324, 1, 0
        %v1341 = vsel %vm1325, 1, 0
        %v1342 = vsel %vm1326, 1, 0
        %v1343 = vsel %vm1327, 1, 0
        %v1344 = vsel %vm1328, 1, 0
        %v1345 = vsel %vm1329, 1, 0
        %v1346 = vsel %vm1330, 1, 0
        %v1347 = vsel %vm1331, 1, 0
        %v1348 = vsel %vm1332, 1, 0
        %v1349 = vsel %vm1333, 1, 0
        %v1350 = vsel %vm1334, 1, 0
        %v1351 = vsel %vm1335, 1, 0
        %v1352 = vsel %vm1336, 1, 0
        %v1353 = vsel %vm1337, 1, 0
        %v1354 = vcvt.s32.f32 %v1338
        %v1355 = vcvt.s32.f32 %v1339
        %v1356 = vcvt.s32.f32 %v1340
        %v1357 = vcvt.s32.f32 %v1341
        %v1358 = vcvt.s32.f32 %v1342
        %v1359 = vcvt.s32.f32 %v1343
        %v1360 = vcvt.s32.f32 %v1344
        %v1361 = vcvt.s32.f32 %v1345
        %v1362 = vcvt.s32.f32 %v1346
        %v1363 = vcvt.s32.f32 %v1347
        %v1364 = vcvt.s32.f32 %v1348
        %v1365 = vcvt.s32.f32 %v1349
        %v1366 = vcvt.s32.f32 %v1350
        %v1367 = vcvt.s32.f32 %v1351
        %v1368 = vcvt.s32.f32 %v1352
        %v1369 = vcvt.s32.f32 %v1353
        %1370 = vmax.xlane.f32.xlu0 %v1354
        %v1371 = vpop.xlane.xlu0 %1370
        %1372 = vmax.xlane.f32.xlu0 %v1355
        %v1373 = vpop.xlane.xlu0 %1372
        %1374 = vmax.xlane.f32.xlu0 %v1356
        %v1375 = vpop.xlane.xlu0 %1374
        %1376 = vmax.xlane.f32.xlu0 %v1357
        %v1377 = vpop.xlane.xlu0 %1376
        %1378 = vmax.xlane.f32.xlu0 %v1358
        %v1379 = vpop.xlane.xlu0 %1378
        %1380 = vmax.xlane.f32.xlu0 %v1359
        %v1381 = vpop.xlane.xlu0 %1380
        %1382 = vmax.xlane.f32.xlu0 %v1360
        %v1383 = vpop.xlane.xlu0 %1382
        %1384 = vmax.xlane.f32.xlu0 %v1361
        %v1385 = vpop.xlane.xlu0 %1384
        %1386 = vmax.xlane.f32.xlu0 %v1362
        %v1387 = vpop.xlane.xlu0 %1386
        %1388 = vmax.xlane.f32.xlu0 %v1363
        %v1389 = vpop.xlane.xlu0 %1388
        %1390 = vmax.xlane.f32.xlu0 %v1364
        %v1391 = vpop.xlane.xlu0 %1390
        %1392 = vmax.xlane.f32.xlu0 %v1365
        %v1393 = vpop.xlane.xlu0 %1392
        %1394 = vmax.xlane.f32.xlu0 %v1366
        %v1395 = vpop.xlane.xlu0 %1394
        %1396 = vmax.xlane.f32.xlu0 %v1367
        %v1397 = vpop.xlane.xlu0 %1396
        %1398 = vmax.xlane.f32.xlu0 %v1368
        %v1399 = vpop.xlane.xlu0 %1398
        %1400 = vmax.xlane.f32.xlu0 %v1369
        %v1401 = vpop.xlane.xlu0 %1400
        %v1402 = vmax.f32 %v1371, %v1379
        %v1403 = vmax.f32 %v1373, %v1381
        %v1404 = vmax.f32 %v1375, %v1383
        %v1405 = vmax.f32 %v1377, %v1385
        %v1406 = vmax.f32 %v1402, %v1387
        %v1407 = vmax.f32 %v1403, %v1389
        %v1408 = vmax.f32 %v1404, %v1391
        %v1409 = vmax.f32 %v1405, %v1393
        %v1410 = vmax.f32 %v1406, %v1395
        %v1411 = vmax.f32 %v1407, %v1397
        %v1412 = vmax.f32 %v1408, %v1399
        %v1413 = vmax.f32 %v1409, %v1401
        %v1414 = vmax.f32 %v1410, %v1411
        %v1415 = vmax.f32 %v1412, %v1413
        %v1416 = vmax.f32 %v1414, %v1415
        %v1417 = vrot.slane %v1416, 4
        %v1418 = vmax.f32 %v1416, %v1417
        %v1419 = vrot.slane %v1418, 2
        %v1420 = vmax.f32 %v1418, %v1419
        %v1421 = vrot.slane %v1420, 1
        %v1422 = vmax.f32 %v1420, %v1421
        %v1423 = vld [vmem:[%s430] sm:$0xff]
        %v1424 = vld [vmem:[%s430 + $0x8] sm:$0xff]
        %v1425 = vld [vmem:[%s430 + $0x10] sm:$0xff]
        %v1426 = vld [vmem:[%s430 + $0x18] sm:$0xff]
        %v1427 = vld [vmem:[%s430 + $0x20] sm:$0xff]
        %v1428 = vld [vmem:[%s430 + $0x28] sm:$0xff]
        %v1429 = vld [vmem:[%s430 + $0x30] sm:$0xff]
        %v1430 = vld [vmem:[%s430 + $0x38] sm:$0xff]
        %v1431 = vld [vmem:[%s430 + $0x40] sm:$0xff]
        %v1432 = vld [vmem:[%s430 + $0x48] sm:$0xff]
        %v1433 = vld [vmem:[%s430 + $0x50] sm:$0xff]
        %v1434 = vld [vmem:[%s430 + $0x58] sm:$0xff]
        %v1435 = vld [vmem:[%s430 + $0x60] sm:$0xff]
        %v1436 = vld [vmem:[%s430 + $0x68] sm:$0xff]
        %v1437 = vld [vmem:[%s430 + $0x70] sm:$0xff]
        %v1438 = vld [vmem:[%s430 + $0x78] sm:$0xff]
        %vm1439 = vcmp.ne.f32.partialorder %v1423, 0.0
        %vm1440 = vcmp.ne.f32.partialorder %v1424, 0.0
        %vm1441 = vcmp.ne.f32.partialorder %v1425, 0.0
        %vm1442 = vcmp.ne.f32.partialorder %v1426, 0.0
        %vm1443 = vcmp.ne.f32.partialorder %v1427, 0.0
        %vm1444 = vcmp.ne.f32.partialorder %v1428, 0.0
        %vm1445 = vcmp.ne.f32.partialorder %v1429, 0.0
        %vm1446 = vcmp.ne.f32.partialorder %v1430, 0.0
        %vm1447 = vcmp.ne.f32.partialorder %v1431, 0.0
        %vm1448 = vcmp.ne.f32.partialorder %v1432, 0.0
        %vm1449 = vcmp.ne.f32.partialorder %v1433, 0.0
        %vm1450 = vcmp.ne.f32.partialorder %v1434, 0.0
        %vm1451 = vcmp.ne.f32.partialorder %v1435, 0.0
        %vm1452 = vcmp.ne.f32.partialorder %v1436, 0.0
        %vm1453 = vcmp.ne.f32.partialorder %v1437, 0.0
        %vm1454 = vcmp.ne.f32.partialorder %v1438, 0.0
        %v1455 = vsel %vm1439, 1, 0
        %v1456 = vsel %vm1440, 1, 0
        %v1457 = vsel %vm1441, 1, 0
        %v1458 = vsel %vm1442, 1, 0
        %v1459 = vsel %vm1443, 1, 0
        %v1460 = vsel %vm1444, 1, 0
        %v1461 = vsel %vm1445, 1, 0
        %v1462 = vsel %vm1446, 1, 0
        %v1463 = vsel %vm1447, 1, 0
        %v1464 = vsel %vm1448, 1, 0
        %v1465 = vsel %vm1449, 1, 0
        %v1466 = vsel %vm1450, 1, 0
        %v1467 = vsel %vm1451, 1, 0
        %v1468 = vsel %vm1452, 1, 0
        %v1469 = vsel %vm1453, 1, 0
        %v1470 = vsel %vm1454, 1, 0
        %v1471 = vcvt.s32.f32 %v1455
        %v1472 = vcvt.s32.f32 %v1456
        %v1473 = vcvt.s32.f32 %v1457
        %v1474 = vcvt.s32.f32 %v1458
        %v1475 = vcvt.s32.f32 %v1459
        %v1476 = vcvt.s32.f32 %v1460
        %v1477 = vcvt.s32.f32 %v1461
        %v1478 = vcvt.s32.f32 %v1462
        %v1479 = vcvt.s32.f32 %v1463
        %v1480 = vcvt.s32.f32 %v1464
        %v1481 = vcvt.s32.f32 %v1465
        %v1482 = vcvt.s32.f32 %v1466
        %v1483 = vcvt.s32.f32 %v1467
        %v1484 = vcvt.s32.f32 %v1468
        %v1485 = vcvt.s32.f32 %v1469
        %v1486 = vcvt.s32.f32 %v1470
        %v1487 = vpack.c.bf16 %v1471, %v1471
        %v1488 = vpack.c.bf16 %v1472, %v1472
        %v1489 = vpack.c.bf16 %v1473, %v1473
        %v1490 = vpack.c.bf16 %v1474, %v1474
        %v1491 = vpack.c.bf16 %v1475, %v1475
        %v1492 = vpack.c.bf16 %v1476, %v1476
        %v1493 = vpack.c.bf16 %v1477, %v1477
        %v1494 = vpack.c.bf16 %v1478, %v1478
        %v1495 = vpack.c.bf16 %v1479, %v1479
        %v1496 = vpack.c.bf16 %v1480, %v1480
        %v1497 = vpack.c.bf16 %v1481, %v1481
        %v1498 = vpack.c.bf16 %v1482, %v1482
        %v1499 = vpack.c.bf16 %v1483, %v1483
        %v1500 = vpack.c.bf16 %v1484, %v1484
        %v1501 = vpack.c.bf16 %v1485, %v1485
        %v1502 = vpack.c.bf16 %v1486, %v1486
        %1503 = vst [vmem:[#allocation3] sm:$0xf] 0
        %1504 = vst [vmem:[#allocation3 + $0x4] sm:$0x1] 0
        %1505 = vst [vmem:[#allocation3 + $0x44] sm:$0xe] 0
        %1506 = vst [vmem:[#allocation3 + $0x48] sm:$0x3] 0
        %vm1523 = vcmask 1040384
        %vm1524 = vcmask 1044484
        %vm1525 = vmor %vm1523, %vm1524
        %v1526 = vrot.slane %v1487, 7
        %v1527 = vrot.slane %v1526, 4
        %v1528 = vrot.slane %v1488, 7
        %v1529 = vsel %vm1525, %v1527, %v1528
        %v1530 = vrot.slane %v1528, 4
        %v1531 = vrot.slane %v1489, 7
        %v1532 = vsel %vm1525, %v1530, %v1531
        %v1533 = vrot.slane %v1531, 4
        %v1534 = vrot.slane %v1490, 7
        %v1535 = vsel %vm1525, %v1533, %v1534
        %v1536 = vrot.slane %v1534, 4
        %v1537 = vrot.slane %v1491, 7
        %v1538 = vsel %vm1525, %v1536, %v1537
        %v1539 = vrot.slane %v1537, 4
        %v1540 = vrot.slane %v1492, 7
        %v1541 = vsel %vm1525, %v1539, %v1540
        %v1542 = vrot.slane %v1540, 4
        %v1543 = vrot.slane %v1493, 7
        %v1544 = vsel %vm1525, %v1542, %v1543
        %v1545 = vrot.slane %v1543, 4
        %v1546 = vrot.slane %v1494, 7
        %v1547 = vsel %vm1525, %v1545, %v1546
        %v1548 = vrot.slane %v1546, 4
        %v1549 = vrot.slane %v1495, 7
        %v1550 = vsel %vm1525, %v1548, %v1549
        %v1551 = vrot.slane %v1549, 4
        %v1552 = vrot.slane %v1496, 7
        %v1553 = vsel %vm1525, %v1551, %v1552
        %v1554 = vrot.slane %v1552, 4
        %v1555 = vrot.slane %v1497, 7
        %v1556 = vsel %vm1525, %v1554, %v1555
        %v1557 = vrot.slane %v1555, 4
        %v1558 = vrot.slane %v1498, 7
        %v1559 = vsel %vm1525, %v1557, %v1558
        %v1560 = vrot.slane %v1558, 4
        %v1561 = vrot.slane %v1499, 7
        %v1562 = vsel %vm1525, %v1560, %v1561
        %v1563 = vrot.slane %v1561, 4
        %v1564 = vrot.slane %v1500, 7
        %v1565 = vsel %vm1525, %v1563, %v1564
        %v1566 = vrot.slane %v1564, 4
        %v1567 = vrot.slane %v1501, 7
        %v1568 = vsel %vm1525, %v1566, %v1567
        %v1569 = vrot.slane %v1567, 4
        %v1570 = vrot.slane %v1502, 7
        %v1571 = vsel %vm1525, %v1569, %v1570
        %v1572 = vrot.slane %v1570, 4
        %1590 = vst [vmem:[#allocation3 + $0x4] sm:$0xe] %v1526
        %1591 = vst [vmem:[#allocation3 + $0x8] sm:$0xf] %v1529
        %1592 = vst [vmem:[#allocation3 + $0xc] sm:$0xf] %v1532
        %1593 = vst [vmem:[#allocation3 + $0x10] sm:$0xf] %v1535
        %1594 = vst [vmem:[#allocation3 + $0x14] sm:$0xf] %v1538
        %1595 = vst [vmem:[#allocation3 + $0x18] sm:$0xf] %v1541
        %1596 = vst [vmem:[#allocation3 + $0x1c] sm:$0xf] %v1544
        %1597 = vst [vmem:[#allocation3 + $0x20] sm:$0xf] %v1547
        %1598 = vst [vmem:[#allocation3 + $0x24] sm:$0xf] %v1550
        %1599 = vst [vmem:[#allocation3 + $0x28] sm:$0xf] %v1553
        %1600 = vst [vmem:[#allocation3 + $0x2c] sm:$0xf] %v1556
        %1601 = vst [vmem:[#allocation3 + $0x30] sm:$0xf] %v1559
        %1602 = vst [vmem:[#allocation3 + $0x34] sm:$0xf] %v1562
        %1603 = vst [vmem:[#allocation3 + $0x38] sm:$0xf] %v1565
        %1604 = vst [vmem:[#allocation3 + $0x3c] sm:$0xf] %v1568
        %1605 = vst [vmem:[#allocation3 + $0x40] sm:$0xf] %v1571
        %1606 = vst [vmem:[#allocation3 + $0x44] sm:$0x1] %v1572
        %v1607 = vld [vmem:[#allocation3 + $0x4] sm:$0xe]
        %v1608 = vld [vmem:[#allocation3 + $0x8] sm:$0xf]
        %v1609 = vld [vmem:[#allocation3 + $0xc] sm:$0xf]
        %v1610 = vld [vmem:[#allocation3 + $0x10] sm:$0xf]
        %v1611 = vld [vmem:[#allocation3 + $0x14] sm:$0xf]
        %v1612 = vld [vmem:[#allocation3 + $0x18] sm:$0xf]
        %v1613 = vld [vmem:[#allocation3 + $0x1c] sm:$0xf]
        %v1614 = vld [vmem:[#allocation3 + $0x20] sm:$0xf]
        %v1615 = vld [vmem:[#allocation3 + $0x24] sm:$0xf]
        %v1616 = vld [vmem:[#allocation3 + $0x28] sm:$0xf]
        %v1617 = vld [vmem:[#allocation3 + $0x2c] sm:$0xf]
        %v1618 = vld [vmem:[#allocation3 + $0x30] sm:$0xf]
        %v1619 = vld [vmem:[#allocation3 + $0x34] sm:$0xf]
        %v1620 = vld [vmem:[#allocation3 + $0x38] sm:$0xf]
        %v1621 = vld [vmem:[#allocation3 + $0x3c] sm:$0xf]
        %v1622 = vld [vmem:[#allocation3 + $0x40] sm:$0xf]
        %v1623 = vld [vmem:[#allocation3 + $0x44] sm:$0x1]
        %vm1641 = vcmask 1042432
        %vm1642 = vcmask 1046532
        %vm1643 = vmor %vm1641, %vm1642
        %v1644 = vrot.slane %v1607, 5
        %v1645 = vrot.slane %v1644, 4
        %v1646 = vrot.slane %v1608, 5
        %v1647 = vsel %vm1643, %v1645, %v1646
        %v1648 = vrot.slane %v1646, 4
        %v1649 = vrot.slane %v1609, 5
        %v1650 = vsel %vm1643, %v1648, %v1649
        %v1651 = vrot.slane %v1649, 4
        %v1652 = vrot.slane %v1610, 5
        %v1653 = vsel %vm1643, %v1651, %v1652
        %v1654 = vrot.slane %v1652, 4
        %v1655 = vrot.slane %v1611, 5
        %v1656 = vsel %vm1643, %v1654, %v1655
        %v1657 = vrot.slane %v1655, 4
        %v1658 = vrot.slane %v1612, 5
        %v1659 = vsel %vm1643, %v1657, %v1658
        %v1660 = vrot.slane %v1658, 4
        %v1661 = vrot.slane %v1613, 5
        %v1662 = vsel %vm1643, %v1660, %v1661
        %v1663 = vrot.slane %v1661, 4
        %v1664 = vrot.slane %v1614, 5
        %v1665 = vsel %vm1643, %v1663, %v1664
        %v1666 = vrot.slane %v1664, 4
        %v1667 = vrot.slane %v1615, 5
        %v1668 = vsel %vm1643, %v1666, %v1667
        %v1669 = vrot.slane %v1667, 4
        %v1670 = vrot.slane %v1616, 5
        %v1671 = vsel %vm1643, %v1669, %v1670
        %v1672 = vrot.slane %v1670, 4
        %v1673 = vrot.slane %v1617, 5
        %v1674 = vsel %vm1643, %v1672, %v1673
        %v1675 = vrot.slane %v1673, 4
        %v1676 = vrot.slane %v1618, 5
        %v1677 = vsel %vm1643, %v1675, %v1676
        %v1678 = vrot.slane %v1676, 4
        %v1679 = vrot.slane %v1619, 5
        %v1680 = vsel %vm1643, %v1678, %v1679
        %v1681 = vrot.slane %v1679, 4
        %v1682 = vrot.slane %v1620, 5
        %v1683 = vsel %vm1643, %v1681, %v1682
        %v1684 = vrot.slane %v1682, 4
        %v1685 = vrot.slane %v1621, 5
        %v1686 = vsel %vm1643, %v1684, %v1685
        %v1687 = vrot.slane %v1685, 4
        %v1688 = vrot.slane %v1622, 5
        %v1689 = vsel %vm1643, %v1687, %v1688
        %v1690 = vrot.slane %v1688, 4
        %v1691 = vrot.slane %v1623, 5
        %v1692 = vsel %vm1643, %v1690, %v1691
        %1709 = vst [vmem:[#allocation4] sm:$0xf] %v1647
        %1710 = vst [vmem:[#allocation4 + $0x18] sm:$0xf] %v1650
        %1711 = vst [vmem:[#allocation4 + $0x30] sm:$0xf] %v1653
        %1712 = vst [vmem:[#allocation4 + $0x48] sm:$0xf] %v1656
        %1713 = vst [vmem:[#allocation4 + $0x60] sm:$0xf] %v1659
        %1714 = vst [vmem:[#allocation4 + $0x78] sm:$0xf] %v1662
        %1715 = vst [vmem:[#allocation4 + $0x90] sm:$0xf] %v1665
        %1716 = vst [vmem:[#allocation4 + $0xa8] sm:$0xf] %v1668
        %1717 = vst [vmem:[#allocation4 + $0xc0] sm:$0xf] %v1671
        %1718 = vst [vmem:[#allocation4 + $0xd8] sm:$0xf] %v1674
        %1719 = vst [vmem:[#allocation4 + $0xf0] sm:$0xf] %v1677
        %1720 = vst [vmem:[#allocation4 + $0x108] sm:$0xf] %v1680
        %1721 = vst [vmem:[#allocation4 + $0x120] sm:$0xf] %v1683
        %1722 = vst [vmem:[#allocation4 + $0x138] sm:$0xf] %v1686
        %1723 = vst [vmem:[#allocation4 + $0x150] sm:$0xf] %v1689
        %1724 = vst [vmem:[#allocation4 + $0x168] sm:$0xf] %v1692
        %v1725 = vld [vmem:[#allocation3] sm:$0x8]
        %v1726 = vld [vmem:[#allocation3 + $0x4] sm:$0xf]
        %v1727 = vld [vmem:[#allocation3 + $0x8] sm:$0xf]
        %v1728 = vld [vmem:[#allocation3 + $0xc] sm:$0xf]
        %v1729 = vld [vmem:[#allocation3 + $0x10] sm:$0xf]
        %v1730 = vld [vmem:[#allocation3 + $0x14] sm:$0xf]
        %v1731 = vld [vmem:[#allocation3 + $0x18] sm:$0xf]
        %v1732 = vld [vmem:[#allocation3 + $0x1c] sm:$0xf]
        %v1733 = vld [vmem:[#allocation3 + $0x20] sm:$0xf]
        %v1734 = vld [vmem:[#allocation3 + $0x24] sm:$0xf]
        %v1735 = vld [vmem:[#allocation3 + $0x28] sm:$0xf]
        %v1736 = vld [vmem:[#allocation3 + $0x2c] sm:$0xf]
        %v1737 = vld [vmem:[#allocation3 + $0x30] sm:$0xf]
        %v1738 = vld [vmem:[#allocation3 + $0x34] sm:$0xf]
        %v1739 = vld [vmem:[#allocation3 + $0x38] sm:$0xf]
        %v1740 = vld [vmem:[#allocation3 + $0x3c] sm:$0xf]
        %v1741 = vld [vmem:[#allocation3 + $0x40] sm:$0x7]
        %v1742 = vld [vmem:[#allocation3 + $0x40] sm:$0xf]
        %v1743 = vunpack.c.l.bf16 %v1725
        %v1744 = vunpack.c.l.bf16 %v1726
        %v1745 = vunpack.c.l.bf16 %v1727
        %v1746 = vunpack.c.l.bf16 %v1728
        %v1747 = vunpack.c.l.bf16 %v1729
        %v1748 = vunpack.c.l.bf16 %v1730
        %v1749 = vunpack.c.l.bf16 %v1731
        %v1750 = vunpack.c.l.bf16 %v1732
        %v1751 = vunpack.c.l.bf16 %v1733
        %v1752 = vunpack.c.l.bf16 %v1734
        %v1753 = vunpack.c.l.bf16 %v1735
        %v1754 = vunpack.c.l.bf16 %v1736
        %v1755 = vunpack.c.l.bf16 %v1737
        %v1756 = vunpack.c.l.bf16 %v1738
        %v1757 = vunpack.c.l.bf16 %v1739
        %v1758 = vunpack.c.l.bf16 %v1740
        %v1759 = vunpack.c.l.bf16 %v1741
        %v1760 = vunpack.c.l.bf16 %v1742
        %vm1778 = vcmask 1046528
        %v1779 = vrot.slane %v1743, 1
        %v1780 = vrot.slane %v1744, 1
        %v1781 = vsel %vm1778, %v1779, %v1780
        %v1782 = vrot.slane %v1745, 1
        %v1783 = vsel %vm1778, %v1780, %v1782
        %v1784 = vrot.slane %v1746, 1
        %v1785 = vsel %vm1778, %v1782, %v1784
        %v1786 = vrot.slane %v1747, 1
        %v1787 = vsel %vm1778, %v1784, %v1786
        %v1788 = vrot.slane %v1748, 1
        %v1789 = vsel %vm1778, %v1786, %v1788
        %v1790 = vrot.slane %v1749, 1
        %v1791 = vsel %vm1778, %v1788, %v1790
        %v1792 = vrot.slane %v1750, 1
        %v1793 = vsel %vm1778, %v1790, %v1792
        %v1794 = vrot.slane %v1751, 1
        %v1795 = vsel %vm1778, %v1792, %v1794
        %v1796 = vrot.slane %v1752, 1
        %v1797 = vsel %vm1778, %v1794, %v1796
        %v1798 = vrot.slane %v1753, 1
        %v1799 = vsel %vm1778, %v1796, %v1798
        %v1800 = vrot.slane %v1754, 1
        %v1801 = vsel %vm1778, %v1798, %v1800
        %v1802 = vrot.slane %v1755, 1
        %v1803 = vsel %vm1778, %v1800, %v1802
        %v1804 = vrot.slane %v1756, 1
        %v1805 = vsel %vm1778, %v1802, %v1804
        %v1806 = vrot.slane %v1757, 1
        %v1807 = vsel %vm1778, %v1804, %v1806
        %v1808 = vrot.slane %v1758, 1
        %v1809 = vsel %vm1778, %v1806, %v1808
        %v1810 = vrot.slane %v1760, 1
        %v1811 = vsel %vm1778, %v1808, %v1810
        %v1829 = vadd.f32 %v1743, %v1781
        %v1830 = vadd.f32 %v1744, %v1783
        %v1831 = vadd.f32 %v1745, %v1785
        %v1832 = vadd.f32 %v1746, %v1787
        %v1833 = vadd.f32 %v1747, %v1789
        %v1834 = vadd.f32 %v1748, %v1791
        %v1835 = vadd.f32 %v1749, %v1793
        %v1836 = vadd.f32 %v1750, %v1795
        %v1837 = vadd.f32 %v1751, %v1797
        %v1838 = vadd.f32 %v1752, %v1799
        %v1839 = vadd.f32 %v1753, %v1801
        %v1840 = vadd.f32 %v1754, %v1803
        %v1841 = vadd.f32 %v1755, %v1805
        %v1842 = vadd.f32 %v1756, %v1807
        %v1843 = vadd.f32 %v1757, %v1809
        %v1844 = vadd.f32 %v1758, %v1811
        %v1845 = vadd.f32 %v1759, %v1810
        %v1846 = vpack.c.bf16 %v1829, %v1829
        %v1847 = vpack.c.bf16 %v1830, %v1830
        %v1848 = vpack.c.bf16 %v1831, %v1831
        %v1849 = vpack.c.bf16 %v1832, %v1832
        %v1850 = vpack.c.bf16 %v1833, %v1833
        %v1851 = vpack.c.bf16 %v1834, %v1834
        %v1852 = vpack.c.bf16 %v1835, %v1835
        %v1853 = vpack.c.bf16 %v1836, %v1836
        %v1854 = vpack.c.bf16 %v1837, %v1837
        %v1855 = vpack.c.bf16 %v1838, %v1838
        %v1856 = vpack.c.bf16 %v1839, %v1839
        %v1857 = vpack.c.bf16 %v1840, %v1840
        %v1858 = vpack.c.bf16 %v1841, %v1841
        %v1859 = vpack.c.bf16 %v1842, %v1842
        %v1860 = vpack.c.bf16 %v1843, %v1843
        %v1861 = vpack.c.bf16 %v1844, %v1844
        %v1862 = vpack.c.bf16 %v1845, %v1845
        %v1863 = vunpack.c.l.bf16 %v1846
        %v1864 = vunpack.c.l.bf16 %v1847
        %v1865 = vunpack.c.l.bf16 %v1848
        %v1866 = vunpack.c.l.bf16 %v1849
        %v1867 = vunpack.c.l.bf16 %v1850
        %v1868 = vunpack.c.l.bf16 %v1851
        %v1869 = vunpack.c.l.bf16 %v1852
        %v1870 = vunpack.c.l.bf16 %v1853
        %v1871 = vunpack.c.l.bf16 %v1854
        %v1872 = vunpack.c.l.bf16 %v1855
        %v1873 = vunpack.c.l.bf16 %v1856
        %v1874 = vunpack.c.l.bf16 %v1857
        %v1875 = vunpack.c.l.bf16 %v1858
        %v1876 = vunpack.c.l.bf16 %v1859
        %v1877 = vunpack.c.l.bf16 %v1860
        %v1878 = vunpack.c.l.bf16 %v1861
        %v1879 = vunpack.c.l.bf16 %v1862
        %vm1880 = vcmask 1045504
        %v1881 = vrot.slane %v1744, 2
        %v1882 = vrot.slane %v1745, 2
        %v1883 = vsel %vm1880, %v1881, %v1882
        %v1884 = vrot.slane %v1746, 2
        %v1885 = vsel %vm1880, %v1882, %v1884
        %v1886 = vrot.slane %v1747, 2
        %v1887 = vsel %vm1880, %v1884, %v1886
        %v1888 = vrot.slane %v1748, 2
        %v1889 = vsel %vm1880, %v1886, %v1888
        %v1890 = vrot.slane %v1749, 2
        %v1891 = vsel %vm1880, %v1888, %v1890
        %v1892 = vrot.slane %v1750, 2
        %v1893 = vsel %vm1880, %v1890, %v1892
        %v1894 = vrot.slane %v1751, 2
        %v1895 = vsel %vm1880, %v1892, %v1894
        %v1896 = vrot.slane %v1752, 2
        %v1897 = vsel %vm1880, %v1894, %v1896
        %v1898 = vrot.slane %v1753, 2
        %v1899 = vsel %vm1880, %v1896, %v1898
        %v1900 = vrot.slane %v1754, 2
        %v1901 = vsel %vm1880, %v1898, %v1900
        %v1902 = vrot.slane %v1755, 2
        %v1903 = vsel %vm1880, %v1900, %v1902
        %v1904 = vrot.slane %v1756, 2
        %v1905 = vsel %vm1880, %v1902, %v1904
        %v1906 = vrot.slane %v1757, 2
        %v1907 = vsel %vm1880, %v1904, %v1906
        %v1908 = vrot.slane %v1758, 2
        %v1909 = vsel %vm1880, %v1906, %v1908
        %v1910 = vrot.slane %v1760, 2
        %v1911 = vsel %vm1880, %v1908, %v1910
        %v1929 = vadd.f32 %v1863, %v1881
        %v1930 = vadd.f32 %v1864, %v1883
        %v1931 = vadd.f32 %v1865, %v1885
        %v1932 = vadd.f32 %v1866, %v1887
        %v1933 = vadd.f32 %v1867, %v1889
        %v1934 = vadd.f32 %v1868, %v1891
        %v1935 = vadd.f32 %v1869, %v1893
        %v1936 = vadd.f32 %v1870, %v1895
        %v1937 = vadd.f32 %v1871, %v1897
        %v1938 = vadd.f32 %v1872, %v1899
        %v1939 = vadd.f32 %v1873, %v1901
        %v1940 = vadd.f32 %v1874, %v1903
        %v1941 = vadd.f32 %v1875, %v1905
        %v1942 = vadd.f32 %v1876, %v1907
        %v1943 = vadd.f32 %v1877, %v1909
        %v1944 = vadd.f32 %v1878, %v1911
        %v1945 = vadd.f32 %v1879, %v1910
        %v1946 = vpack.c.bf16 %v1929, %v1929
        %v1947 = vpack.c.bf16 %v1930, %v1930
        %v1948 = vpack.c.bf16 %v1931, %v1931
        %v1949 = vpack.c.bf16 %v1932, %v1932
        %v1950 = vpack.c.bf16 %v1933, %v1933
        %v1951 = vpack.c.bf16 %v1934, %v1934
        %v1952 = vpack.c.bf16 %v1935, %v1935
        %v1953 = vpack.c.bf16 %v1936, %v1936
        %v1954 = vpack.c.bf16 %v1937, %v1937
        %v1955 = vpack.c.bf16 %v1938, %v1938
        %v1956 = vpack.c.bf16 %v1939, %v1939
        %v1957 = vpack.c.bf16 %v1940, %v1940
        %v1958 = vpack.c.bf16 %v1941, %v1941
        %v1959 = vpack.c.bf16 %v1942, %v1942
        %v1960 = vpack.c.bf16 %v1943, %v1943
        %v1961 = vpack.c.bf16 %v1944, %v1944
        %v1962 = vpack.c.bf16 %v1945, %v1945
        %v1963 = vld [vmem:[#allocation3 + $0x44] sm:$0x1]
        %v1964 = vunpack.c.l.bf16 %v1946
        %v1965 = vunpack.c.l.bf16 %v1947
        %v1966 = vunpack.c.l.bf16 %v1948
        %v1967 = vunpack.c.l.bf16 %v1949
        %v1968 = vunpack.c.l.bf16 %v1950
        %v1969 = vunpack.c.l.bf16 %v1951
        %v1970 = vunpack.c.l.bf16 %v1952
        %v1971 = vunpack.c.l.bf16 %v1953
        %v1972 = vunpack.c.l.bf16 %v1954
        %v1973 = vunpack.c.l.bf16 %v1955
        %v1974 = vunpack.c.l.bf16 %v1956
        %v1975 = vunpack.c.l.bf16 %v1957
        %v1976 = vunpack.c.l.bf16 %v1958
        %v1977 = vunpack.c.l.bf16 %v1959
        %v1978 = vunpack.c.l.bf16 %v1960
        %v1979 = vunpack.c.l.bf16 %v1961
        %v1980 = vunpack.c.l.bf16 %v1962
        %v1981 = vunpack.c.l.bf16 %v1963
        %vm1983 = vcmask 1044480
        %v1984 = vrot.slane %v1744, 3
        %v1985 = vrot.slane %v1745, 3
        %v1986 = vsel %vm1983, %v1984, %v1985
        %v1987 = vrot.slane %v1746, 3
        %v1988 = vsel %vm1983, %v1985, %v1987
        %v1989 = vrot.slane %v1747, 3
        %v1990 = vsel %vm1983, %v1987, %v1989
        %v1991 = vrot.slane %v1748, 3
        %v1992 = vsel %vm1983, %v1989, %v1991
        %v1993 = vrot.slane %v1749, 3
        %v1994 = vsel %vm1983, %v1991, %v1993
        %v1995 = vrot.slane %v1750, 3
        %v1996 = vsel %vm1983, %v1993, %v1995
        %v1997 = vrot.slane %v1751, 3
        %v1998 = vsel %vm1983, %v1995, %v1997
        %v1999 = vrot.slane %v1752, 3
        %v2000 = vsel %vm1983, %v1997, %v1999
        %v2001 = vrot.slane %v1753, 3
        %v2002 = vsel %vm1983, %v1999, %v2001
        %v2003 = vrot.slane %v1754, 3
        %v2004 = vsel %vm1983, %v2001, %v2003
        %v2005 = vrot.slane %v1755, 3
        %v2006 = vsel %vm1983, %v2003, %v2005
        %v2007 = vrot.slane %v1756, 3
        %v2008 = vsel %vm1983, %v2005, %v2007
        %v2009 = vrot.slane %v1757, 3
        %v2010 = vsel %vm1983, %v2007, %v2009
        %v2011 = vrot.slane %v1758, 3
        %v2012 = vsel %vm1983, %v2009, %v2011
        %v2013 = vrot.slane %v1760, 3
        %v2014 = vsel %vm1983, %v2011, %v2013
        %v2015 = vrot.slane %v1981, 3
        %v2016 = vsel %vm1983, %v2013, %v2015
        %v2034 = vadd.f32 %v1964, %v1984
        %v2035 = vadd.f32 %v1965, %v1986
        %v2036 = vadd.f32 %v1966, %v1988
        %v2037 = vadd.f32 %v1967, %v1990
        %v2038 = vadd.f32 %v1968, %v1992
        %v2039 = vadd.f32 %v1969, %v1994
        %v2040 = vadd.f32 %v1970, %v1996
        %v2041 = vadd.f32 %v1971, %v1998
        %v2042 = vadd.f32 %v1972, %v2000
        %v2043 = vadd.f32 %v1973, %v2002
        %v2044 = vadd.f32 %v1974, %v2004
        %v2045 = vadd.f32 %v1975, %v2006
        %v2046 = vadd.f32 %v1976, %v2008
        %v2047 = vadd.f32 %v1977, %v2010
        %v2048 = vadd.f32 %v1978, %v2012
        %v2049 = vadd.f32 %v1979, %v2014
        %v2050 = vadd.f32 %v1980, %v2016
        %v2051 = vpack.c.bf16 %v2034, %v2034
        %v2052 = vpack.c.bf16 %v2035, %v2035
        %v2053 = vpack.c.bf16 %v2036, %v2036
        %v2054 = vpack.c.bf16 %v2037, %v2037
        %v2055 = vpack.c.bf16 %v2038, %v2038
        %v2056 = vpack.c.bf16 %v2039, %v2039
        %v2057 = vpack.c.bf16 %v2040, %v2040
        %v2058 = vpack.c.bf16 %v2041, %v2041
        %v2059 = vpack.c.bf16 %v2042, %v2042
        %v2060 = vpack.c.bf16 %v2043, %v2043
        %v2061 = vpack.c.bf16 %v2044, %v2044
        %v2062 = vpack.c.bf16 %v2045, %v2045
        %v2063 = vpack.c.bf16 %v2046, %v2046
        %v2064 = vpack.c.bf16 %v2047, %v2047
        %v2065 = vpack.c.bf16 %v2048, %v2048
        %v2066 = vpack.c.bf16 %v2049, %v2049
        %v2067 = vpack.c.bf16 %v2050, %v2050
        %v2068 = vld [vmem:[#allocation3 + $0x4] sm:$0xe]
        %v2069 = vld [vmem:[#allocation3 + $0x44] sm:$0x3]
        %v2070 = vunpack.c.l.bf16 %v2051
        %v2071 = vunpack.c.l.bf16 %v2052
        %v2072 = vunpack.c.l.bf16 %v2053
        %v2073 = vunpack.c.l.bf16 %v2054
        %v2074 = vunpack.c.l.bf16 %v2055
        %v2075 = vunpack.c.l.bf16 %v2056
        %v2076 = vunpack.c.l.bf16 %v2057
        %v2077 = vunpack.c.l.bf16 %v2058
        %v2078 = vunpack.c.l.bf16 %v2059
        %v2079 = vunpack.c.l.bf16 %v2060
        %v2080 = vunpack.c.l.bf16 %v2061
        %v2081 = vunpack.c.l.bf16 %v2062
        %v2082 = vunpack.c.l.bf16 %v2063
        %v2083 = vunpack.c.l.bf16 %v2064
        %v2084 = vunpack.c.l.bf16 %v2065
        %v2085 = vunpack.c.l.bf16 %v2066
        %v2086 = vunpack.c.l.bf16 %v2067
        %v2087 = vunpack.c.l.bf16 %v2068
        %v2088 = vunpack.c.l.bf16 %v2069
        %vm2091 = vcmask 1042432
        %v2092 = vrot.slane %v2087, 5
        %v2093 = vrot.slane %v1745, 5
        %v2094 = vsel %vm2091, %v2092, %v2093
        %v2095 = vrot.slane %v1746, 5
        %v2096 = vsel %vm2091, %v2093, %v2095
        %v2097 = vrot.slane %v1747, 5
        %v2098 = vsel %vm2091, %v2095, %v2097
        %v2099 = vrot.slane %v1748, 5
        %v2100 = vsel %vm2091, %v2097, %v2099
        %v2101 = vrot.slane %v1749, 5
        %v2102 = vsel %vm2091, %v2099, %v2101
        %v2103 = vrot.slane %v1750, 5
        %v2104 = vsel %vm2091, %v2101, %v2103
        %v2105 = vrot.slane %v1751, 5
        %v2106 = vsel %vm2091, %v2103, %v2105
        %v2107 = vrot.slane %v1752, 5
        %v2108 = vsel %vm2091, %v2105, %v2107
        %v2109 = vrot.slane %v1753, 5
        %v2110 = vsel %vm2091, %v2107, %v2109
        %v2111 = vrot.slane %v1754, 5
        %v2112 = vsel %vm2091, %v2109, %v2111
        %v2113 = vrot.slane %v1755, 5
        %v2114 = vsel %vm2091, %v2111, %v2113
        %v2115 = vrot.slane %v1756, 5
        %v2116 = vsel %vm2091, %v2113, %v2115
        %v2117 = vrot.slane %v1757, 5
        %v2118 = vsel %vm2091, %v2115, %v2117
        %v2119 = vrot.slane %v1758, 5
        %v2120 = vsel %vm2091, %v2117, %v2119
        %v2121 = vrot.slane %v1760, 5
        %v2122 = vsel %vm2091, %v2119, %v2121
        %v2123 = vrot.slane %v2088, 5
        %v2124 = vsel %vm2091, %v2121, %v2123
        %v2142 = vadd.f32 %v2070, %v2092
        %v2143 = vadd.f32 %v2071, %v2094
        %v2144 = vadd.f32 %v2072, %v2096
        %v2145 = vadd.f32 %v2073, %v2098
        %v2146 = vadd.f32 %v2074, %v2100
        %v2147 = vadd.f32 %v2075, %v2102
        %v2148 = vadd.f32 %v2076, %v2104
        %v2149 = vadd.f32 %v2077, %v2106
        %v2150 = vadd.f32 %v2078, %v2108
        %v2151 = vadd.f32 %v2079, %v2110
        %v2152 = vadd.f32 %v2080, %v2112
        %v2153 = vadd.f32 %v2081, %v2114
        %v2154 = vadd.f32 %v2082, %v2116
        %v2155 = vadd.f32 %v2083, %v2118
        %v2156 = vadd.f32 %v2084, %v2120
        %v2157 = vadd.f32 %v2085, %v2122
        %v2158 = vadd.f32 %v2086, %v2124
        %v2159 = vpack.c.bf16 %v2142, %v2142
        %v2160 = vpack.c.bf16 %v2143, %v2143
        %v2161 = vpack.c.bf16 %v2144, %v2144
        %v2162 = vpack.c.bf16 %v2145, %v2145
        %v2163 = vpack.c.bf16 %v2146, %v2146
        %v2164 = vpack.c.bf16 %v2147, %v2147
        %v2165 = vpack.c.bf16 %v2148, %v2148
        %v2166 = vpack.c.bf16 %v2149, %v2149
        %v2167 = vpack.c.bf16 %v2150, %v2150
        %v2168 = vpack.c.bf16 %v2151, %v2151
        %v2169 = vpack.c.bf16 %v2152, %v2152
        %v2170 = vpack.c.bf16 %v2153, %v2153
        %v2171 = vpack.c.bf16 %v2154, %v2154
        %v2172 = vpack.c.bf16 %v2155, %v2155
        %v2173 = vpack.c.bf16 %v2156, %v2156
        %v2174 = vpack.c.bf16 %v2157, %v2157
        %v2175 = vpack.c.bf16 %v2158, %v2158
        %v2176 = vld [vmem:[#allocation3 + $0x4] sm:$0xc]
        %v2177 = vunpack.c.l.bf16 %v2159
        %v2178 = vunpack.c.l.bf16 %v2160
        %v2179 = vunpack.c.l.bf16 %v2161
        %v2180 = vunpack.c.l.bf16 %v2162
        %v2181 = vunpack.c.l.bf16 %v2163
        %v2182 = vunpack.c.l.bf16 %v2164
        %v2183 = vunpack.c.l.bf16 %v2165
        %v2184 = vunpack.c.l.bf16 %v2166
        %v2185 = vunpack.c.l.bf16 %v2167
        %v2186 = vunpack.c.l.bf16 %v2168
        %v2187 = vunpack.c.l.bf16 %v2169
        %v2188 = vunpack.c.l.bf16 %v2170
        %v2189 = vunpack.c.l.bf16 %v2171
        %v2190 = vunpack.c.l.bf16 %v2172
        %v2191 = vunpack.c.l.bf16 %v2173
        %v2192 = vunpack.c.l.bf16 %v2174
        %v2193 = vunpack.c.l.bf16 %v2175
        %v2194 = vunpack.c.l.bf16 %v2176
        %vm2196 = vcmask 1041408
        %v2197 = vrot.slane %v2194, 6
        %v2198 = vrot.slane %v1745, 6
        %v2199 = vsel %vm2196, %v2197, %v2198
        %v2200 = vrot.slane %v1746, 6
        %v2201 = vsel %vm2196, %v2198, %v2200
        %v2202 = vrot.slane %v1747, 6
        %v2203 = vsel %vm2196, %v2200, %v2202
        %v2204 = vrot.slane %v1748, 6
        %v2205 = vsel %vm2196, %v2202, %v2204
        %v2206 = vrot.slane %v1749, 6
        %v2207 = vsel %vm2196, %v2204, %v2206
        %v2208 = vrot.slane %v1750, 6
        %v2209 = vsel %vm2196, %v2206, %v2208
        %v2210 = vrot.slane %v1751, 6
        %v2211 = vsel %vm2196, %v2208, %v2210
        %v2212 = vrot.slane %v1752, 6
        %v2213 = vsel %vm2196, %v2210, %v2212
        %v2214 = vrot.slane %v1753, 6
        %v2215 = vsel %vm2196, %v2212, %v2214
        %v2216 = vrot.slane %v1754, 6
        %v2217 = vsel %vm2196, %v2214, %v2216
        %v2218 = vrot.slane %v1755, 6
        %v2219 = vsel %vm2196, %v2216, %v2218
        %v2220 = vrot.slane %v1756, 6
        %v2221 = vsel %vm2196, %v2218, %v2220
        %v2222 = vrot.slane %v1757, 6
        %v2223 = vsel %vm2196, %v2220, %v2222
        %v2224 = vrot.slane %v1758, 6
        %v2225 = vsel %vm2196, %v2222, %v2224
        %v2226 = vrot.slane %v1760, 6
        %v2227 = vsel %vm2196, %v2224, %v2226
        %v2228 = vrot.slane %v2088, 6
        %v2229 = vsel %vm2196, %v2226, %v2228
        %v2247 = vadd.f32 %v2177, %v2197
        %v2248 = vadd.f32 %v2178, %v2199
        %v2249 = vadd.f32 %v2179, %v2201
        %v2250 = vadd.f32 %v2180, %v2203
        %v2251 = vadd.f32 %v2181, %v2205
        %v2252 = vadd.f32 %v2182, %v2207
        %v2253 = vadd.f32 %v2183, %v2209
        %v2254 = vadd.f32 %v2184, %v2211
        %v2255 = vadd.f32 %v2185, %v2213
        %v2256 = vadd.f32 %v2186, %v2215
        %v2257 = vadd.f32 %v2187, %v2217
        %v2258 = vadd.f32 %v2188, %v2219
        %v2259 = vadd.f32 %v2189, %v2221
        %v2260 = vadd.f32 %v2190, %v2223
        %v2261 = vadd.f32 %v2191, %v2225
        %v2262 = vadd.f32 %v2192, %v2227
        %v2263 = vadd.f32 %v2193, %v2229
        %v2264 = vpack.c.bf16 %v2247, %v2247
        %v2265 = vpack.c.bf16 %v2248, %v2248
        %v2266 = vpack.c.bf16 %v2249, %v2249
        %v2267 = vpack.c.bf16 %v2250, %v2250
        %v2268 = vpack.c.bf16 %v2251, %v2251
        %v2269 = vpack.c.bf16 %v2252, %v2252
        %v2270 = vpack.c.bf16 %v2253, %v2253
        %v2271 = vpack.c.bf16 %v2254, %v2254
        %v2272 = vpack.c.bf16 %v2255, %v2255
        %v2273 = vpack.c.bf16 %v2256, %v2256
        %v2274 = vpack.c.bf16 %v2257, %v2257
        %v2275 = vpack.c.bf16 %v2258, %v2258
        %v2276 = vpack.c.bf16 %v2259, %v2259
        %v2277 = vpack.c.bf16 %v2260, %v2260
        %v2278 = vpack.c.bf16 %v2261, %v2261
        %v2279 = vpack.c.bf16 %v2262, %v2262
        %v2280 = vpack.c.bf16 %v2263, %v2263
        %v2281 = vld [vmem:[#allocation3 + $0x44] sm:$0x7]
        %v2282 = vunpack.c.l.bf16 %v2264
        %v2283 = vunpack.c.l.bf16 %v2265
        %v2284 = vunpack.c.l.bf16 %v2266
        %v2285 = vunpack.c.l.bf16 %v2267
        %v2286 = vunpack.c.l.bf16 %v2268
        %v2287 = vunpack.c.l.bf16 %v2269
        %v2288 = vunpack.c.l.bf16 %v2270
        %v2289 = vunpack.c.l.bf16 %v2271
        %v2290 = vunpack.c.l.bf16 %v2272
        %v2291 = vunpack.c.l.bf16 %v2273
        %v2292 = vunpack.c.l.bf16 %v2274
        %v2293 = vunpack.c.l.bf16 %v2275
        %v2294 = vunpack.c.l.bf16 %v2276
        %v2295 = vunpack.c.l.bf16 %v2277
        %v2296 = vunpack.c.l.bf16 %v2278
        %v2297 = vunpack.c.l.bf16 %v2279
        %v2298 = vunpack.c.l.bf16 %v2280
        %v2299 = vunpack.c.l.bf16 %v2281
        %vm2301 = vcmask 1040384
        %v2302 = vrot.slane %v2194, 7
        %v2303 = vrot.slane %v1745, 7
        %v2304 = vsel %vm2301, %v2302, %v2303
        %v2305 = vrot.slane %v1746, 7
        %v2306 = vsel %vm2301, %v2303, %v2305
        %v2307 = vrot.slane %v1747, 7
        %v2308 = vsel %vm2301, %v2305, %v2307
        %v2309 = vrot.slane %v1748, 7
        %v2310 = vsel %vm2301, %v2307, %v2309
        %v2311 = vrot.slane %v1749, 7
        %v2312 = vsel %vm2301, %v2309, %v2311
        %v2313 = vrot.slane %v1750, 7
        %v2314 = vsel %vm2301, %v2311, %v2313
        %v2315 = vrot.slane %v1751, 7
        %v2316 = vsel %vm2301, %v2313, %v2315
        %v2317 = vrot.slane %v1752, 7
        %v2318 = vsel %vm2301, %v2315, %v2317
        %v2319 = vrot.slane %v1753, 7
        %v2320 = vsel %vm2301, %v2317, %v2319
        %v2321 = vrot.slane %v1754, 7
        %v2322 = vsel %vm2301, %v2319, %v2321
        %v2323 = vrot.slane %v1755, 7
        %v2324 = vsel %vm2301, %v2321, %v2323
        %v2325 = vrot.slane %v1756, 7
        %v2326 = vsel %vm2301, %v2323, %v2325
        %v2327 = vrot.slane %v1757, 7
        %v2328 = vsel %vm2301, %v2325, %v2327
        %v2329 = vrot.slane %v1758, 7
        %v2330 = vsel %vm2301, %v2327, %v2329
        %v2331 = vrot.slane %v1760, 7
        %v2332 = vsel %vm2301, %v2329, %v2331
        %v2333 = vrot.slane %v2299, 7
        %v2334 = vsel %vm2301, %v2331, %v2333
        %v2352 = vadd.f32 %v2282, %v2302
        %v2353 = vadd.f32 %v2283, %v2304
        %v2354 = vadd.f32 %v2284, %v2306
        %v2355 = vadd.f32 %v2285, %v2308
        %v2356 = vadd.f32 %v2286, %v2310
        %v2357 = vadd.f32 %v2287, %v2312
        %v2358 = vadd.f32 %v2288, %v2314
        %v2359 = vadd.f32 %v2289, %v2316
        %v2360 = vadd.f32 %v2290, %v2318
        %v2361 = vadd.f32 %v2291, %v2320
        %v2362 = vadd.f32 %v2292, %v2322
        %v2363 = vadd.f32 %v2293, %v2324
        %v2364 = vadd.f32 %v2294, %v2326
        %v2365 = vadd.f32 %v2295, %v2328
        %v2366 = vadd.f32 %v2296, %v2330
        %v2367 = vadd.f32 %v2297, %v2332
        %v2368 = vadd.f32 %v2298, %v2334
        %v2369 = vpack.c.bf16 %v2352, %v2352
        %v2370 = vpack.c.bf16 %v2353, %v2353
        %v2371 = vpack.c.bf16 %v2354, %v2354
        %v2372 = vpack.c.bf16 %v2355, %v2355
        %v2373 = vpack.c.bf16 %v2356, %v2356
        %v2374 = vpack.c.bf16 %v2357, %v2357
        %v2375 = vpack.c.bf16 %v2358, %v2358
        %v2376 = vpack.c.bf16 %v2359, %v2359
        %v2377 = vpack.c.bf16 %v2360, %v2360
        %v2378 = vpack.c.bf16 %v2361, %v2361
        %v2379 = vpack.c.bf16 %v2362, %v2362
        %v2380 = vpack.c.bf16 %v2363, %v2363
        %v2381 = vpack.c.bf16 %v2364, %v2364
        %v2382 = vpack.c.bf16 %v2365, %v2365
        %v2383 = vpack.c.bf16 %v2366, %v2366
        %v2384 = vpack.c.bf16 %v2367, %v2367
        %v2385 = vpack.c.bf16 %v2368, %v2368
        %v2386 = vld [vmem:[#allocation3 + $0x4] sm:$0x8]
        %v2387 = vunpack.c.l.bf16 %v2369
        %v2388 = vunpack.c.l.bf16 %v2370
        %v2389 = vunpack.c.l.bf16 %v2371
        %v2390 = vunpack.c.l.bf16 %v2372
        %v2391 = vunpack.c.l.bf16 %v2373
        %v2392 = vunpack.c.l.bf16 %v2374
        %v2393 = vunpack.c.l.bf16 %v2375
        %v2394 = vunpack.c.l.bf16 %v2376
        %v2395 = vunpack.c.l.bf16 %v2377
        %v2396 = vunpack.c.l.bf16 %v2378
        %v2397 = vunpack.c.l.bf16 %v2379
        %v2398 = vunpack.c.l.bf16 %v2380
        %v2399 = vunpack.c.l.bf16 %v2381
        %v2400 = vunpack.c.l.bf16 %v2382
        %v2401 = vunpack.c.l.bf16 %v2383
        %v2402 = vunpack.c.l.bf16 %v2384
        %v2403 = vunpack.c.l.bf16 %v2385
        %v2404 = vunpack.c.l.bf16 %v2386
        %v2405 = vadd.f32 %v2387, %v2404
        %v2406 = vadd.f32 %v2388, %v1745
        %v2407 = vadd.f32 %v2389, %v1746
        %v2408 = vadd.f32 %v2390, %v1747
        %v2409 = vadd.f32 %v2391, %v1748
        %v2410 = vadd.f32 %v2392, %v1749
        %v2411 = vadd.f32 %v2393, %v1750
        %v2412 = vadd.f32 %v2394, %v1751
        %v2413 = vadd.f32 %v2395, %v1752
        %v2414 = vadd.f32 %v2396, %v1753
        %v2415 = vadd.f32 %v2397, %v1754
        %v2416 = vadd.f32 %v2398, %v1755
        %v2417 = vadd.f32 %v2399, %v1756
        %v2418 = vadd.f32 %v2400, %v1757
        %v2419 = vadd.f32 %v2401, %v1758
        %v2420 = vadd.f32 %v2402, %v1760
        %v2421 = vadd.f32 %v2403, %v2299
        %v2422 = vpack.c.bf16 %v2405, %v2405
        %v2423 = vpack.c.bf16 %v2406, %v2406
        %v2424 = vpack.c.bf16 %v2407, %v2407
        %v2425 = vpack.c.bf16 %v2408, %v2408
        %v2426 = vpack.c.bf16 %v2409, %v2409
        %v2427 = vpack.c.bf16 %v2410, %v2410
        %v2428 = vpack.c.bf16 %v2411, %v2411
        %v2429 = vpack.c.bf16 %v2412, %v2412
        %v2430 = vpack.c.bf16 %v2413, %v2413
        %v2431 = vpack.c.bf16 %v2414, %v2414
        %v2432 = vpack.c.bf16 %v2415, %v2415
        %v2433 = vpack.c.bf16 %v2416, %v2416
        %v2434 = vpack.c.bf16 %v2417, %v2417
        %v2435 = vpack.c.bf16 %v2418, %v2418
        %v2436 = vpack.c.bf16 %v2419, %v2419
        %v2437 = vpack.c.bf16 %v2420, %v2420
        %v2438 = vpack.c.bf16 %v2421, %v2421
        %v2456 = vrot.slane %v2422, 7
        %v2457 = vrot.slane %v2456, 4
        %v2458 = vrot.slane %v2423, 7
        %v2459 = vsel %vm1525, %v2457, %v2458
        %v2460 = vrot.slane %v2458, 4
        %v2461 = vrot.slane %v2424, 7
        %v2462 = vsel %vm1525, %v2460, %v2461
        %v2463 = vrot.slane %v2461, 4
        %v2464 = vrot.slane %v2425, 7
        %v2465 = vsel %vm1525, %v2463, %v2464
        %v2466 = vrot.slane %v2464, 4
        %v2467 = vrot.slane %v2426, 7
        %v2468 = vsel %vm1525, %v2466, %v2467
        %v2469 = vrot.slane %v2467, 4
        %v2470 = vrot.slane %v2427, 7
        %v2471 = vsel %vm1525, %v2469, %v2470
        %v2472 = vrot.slane %v2470, 4
        %v2473 = vrot.slane %v2428, 7
        %v2474 = vsel %vm1525, %v2472, %v2473
        %v2475 = vrot.slane %v2473, 4
        %v2476 = vrot.slane %v2429, 7
        %v2477 = vsel %vm1525, %v2475, %v2476
        %v2478 = vrot.slane %v2476, 4
        %v2479 = vrot.slane %v2430, 7
        %v2480 = vsel %vm1525, %v2478, %v2479
        %v2481 = vrot.slane %v2479, 4
        %v2482 = vrot.slane %v2431, 7
        %v2483 = vsel %vm1525, %v2481, %v2482
        %v2484 = vrot.slane %v2482, 4
        %v2485 = vrot.slane %v2432, 7
        %v2486 = vsel %vm1525, %v2484, %v2485
        %v2487 = vrot.slane %v2485, 4
        %v2488 = vrot.slane %v2433, 7
        %v2489 = vsel %vm1525, %v2487, %v2488
        %v2490 = vrot.slane %v2488, 4
        %v2491 = vrot.slane %v2434, 7
        %v2492 = vsel %vm1525, %v2490, %v2491
        %v2493 = vrot.slane %v2491, 4
        %v2494 = vrot.slane %v2435, 7
        %v2495 = vsel %vm1525, %v2493, %v2494
        %v2496 = vrot.slane %v2494, 4
        %v2497 = vrot.slane %v2436, 7
        %v2498 = vsel %vm1525, %v2496, %v2497
        %v2499 = vrot.slane %v2497, 4
        %v2500 = vrot.slane %v2437, 7
        %v2501 = vsel %vm1525, %v2499, %v2500
        %v2502 = vrot.slane %v2500, 4
        %v2503 = vrot.slane %v2438, 7
        %v2504 = vsel %vm1525, %v2502, %v2503
        %2521 = vst [vmem:[#allocation4 + $0x4] sm:$0xf] %v2459
        %2522 = vst [vmem:[#allocation4 + $0x1c] sm:$0xf] %v2462
        %2523 = vst [vmem:[#allocation4 + $0x34] sm:$0xf] %v2465
        %2524 = vst [vmem:[#allocation4 + $0x4c] sm:$0xf] %v2468
        %2525 = vst [vmem:[#allocation4 + $0x64] sm:$0xf] %v2471
        %2526 = vst [vmem:[#allocation4 + $0x7c] sm:$0xf] %v2474
        %2527 = vst [vmem:[#allocation4 + $0x94] sm:$0xf] %v2477
        %2528 = vst [vmem:[#allocation4 + $0xac] sm:$0xf] %v2480
        %2529 = vst [vmem:[#allocation4 + $0xc4] sm:$0xf] %v2483
        %2530 = vst [vmem:[#allocation4 + $0xdc] sm:$0xf] %v2486
        %2531 = vst [vmem:[#allocation4 + $0xf4] sm:$0xf] %v2489
        %2532 = vst [vmem:[#allocation4 + $0x10c] sm:$0xf] %v2492
        %2533 = vst [vmem:[#allocation4 + $0x124] sm:$0xf] %v2495
        %2534 = vst [vmem:[#allocation4 + $0x13c] sm:$0xf] %v2498
        %2535 = vst [vmem:[#allocation4 + $0x154] sm:$0xf] %v2501
        %2536 = vst [vmem:[#allocation4 + $0x16c] sm:$0xf] %v2504
        %v2537 = vld [vmem:[#allocation3] sm:$0xc]
        %v2538 = vld [vmem:[#allocation3 + $0x4] sm:$0xf]
        %v2539 = vld [vmem:[#allocation3 + $0x8] sm:$0xf]
        %v2540 = vld [vmem:[#allocation3 + $0xc] sm:$0xf]
        %v2541 = vld [vmem:[#allocation3 + $0x10] sm:$0xf]
        %v2542 = vld [vmem:[#allocation3 + $0x14] sm:$0xf]
        %v2543 = vld [vmem:[#allocation3 + $0x18] sm:$0xf]
        %v2544 = vld [vmem:[#allocation3 + $0x1c] sm:$0xf]
        %v2545 = vld [vmem:[#allocation3 + $0x20] sm:$0xf]
        %v2546 = vld [vmem:[#allocation3 + $0x24] sm:$0xf]
        %v2547 = vld [vmem:[#allocation3 + $0x28] sm:$0xf]
        %v2548 = vld [vmem:[#allocation3 + $0x2c] sm:$0xf]
        %v2549 = vld [vmem:[#allocation3 + $0x30] sm:$0xf]
        %v2550 = vld [vmem:[#allocation3 + $0x34] sm:$0xf]
        %v2551 = vld [vmem:[#allocation3 + $0x38] sm:$0xf]
        %v2552 = vld [vmem:[#allocation3 + $0x3c] sm:$0xf]
        %v2553 = vld [vmem:[#allocation3 + $0x40] sm:$0x3]
        %v2554 = vld [vmem:[#allocation3 + $0x40] sm:$0x7]
        %v2555 = vunpack.c.l.bf16 %v2537
        %v2556 = vunpack.c.l.bf16 %v2538
        %v2557 = vunpack.c.l.bf16 %v2539
        %v2558 = vunpack.c.l.bf16 %v2540
        %v2559 = vunpack.c.l.bf16 %v2541
        %v2560 = vunpack.c.l.bf16 %v2542
        %v2561 = vunpack.c.l.bf16 %v2543
        %v2562 = vunpack.c.l.bf16 %v2544
        %v2563 = vunpack.c.l.bf16 %v2545
        %v2564 = vunpack.c.l.bf16 %v2546
        %v2565 = vunpack.c.l.bf16 %v2547
        %v2566 = vunpack.c.l.bf16 %v2548
        %v2567 = vunpack.c.l.bf16 %v2549
        %v2568 = vunpack.c.l.bf16 %v2550
        %v2569 = vunpack.c.l.bf16 %v2551
        %v2570 = vunpack.c.l.bf16 %v2552
        %v2571 = vunpack.c.l.bf16 %v2553
        %v2572 = vunpack.c.l.bf16 %v2554
        %v2590 = vrot.slane %v2555, 1
        %v2591 = vrot.slane %v2556, 1
        %v2592 = vsel %vm1778, %v2590, %v2591
        %v2593 = vrot.slane %v2557, 1
        %v2594 = vsel %vm1778, %v2591, %v2593
        %v2595 = vrot.slane %v2558, 1
        %v2596 = vsel %vm1778, %v2593, %v2595
        %v2597 = vrot.slane %v2559, 1
        %v2598 = vsel %vm1778, %v2595, %v2597
        %v2599 = vrot.slane %v2560, 1
        %v2600 = vsel %vm1778, %v2597, %v2599
        %v2601 = vrot.slane %v2561, 1
        %v2602 = vsel %vm1778, %v2599, %v2601
        %v2603 = vrot.slane %v2562, 1
        %v2604 = vsel %vm1778, %v2601, %v2603
        %v2605 = vrot.slane %v2563, 1
        %v2606 = vsel %vm1778, %v2603, %v2605
        %v2607 = vrot.slane %v2564, 1
        %v2608 = vsel %vm1778, %v2605, %v2607
        %v2609 = vrot.slane %v2565, 1
        %v2610 = vsel %vm1778, %v2607, %v2609
        %v2611 = vrot.slane %v2566, 1
        %v2612 = vsel %vm1778, %v2609, %v2611
        %v2613 = vrot.slane %v2567, 1
        %v2614 = vsel %vm1778, %v2611, %v2613
        %v2615 = vrot.slane %v2568, 1
        %v2616 = vsel %vm1778, %v2613, %v2615
        %v2617 = vrot.slane %v2569, 1
        %v2618 = vsel %vm1778, %v2615, %v2617
        %v2619 = vrot.slane %v2570, 1
        %v2620 = vsel %vm1778, %v2617, %v2619
        %v2621 = vrot.slane %v2572, 1
        %v2622 = vsel %vm1778, %v2619, %v2621
        %v2640 = vadd.f32 %v2555, %v2592
        %v2641 = vadd.f32 %v2556, %v2594
        %v2642 = vadd.f32 %v2557, %v2596
        %v2643 = vadd.f32 %v2558, %v2598
        %v2644 = vadd.f32 %v2559, %v2600
        %v2645 = vadd.f32 %v2560, %v2602
        %v2646 = vadd.f32 %v2561, %v2604
        %v2647 = vadd.f32 %v2562, %v2606
        %v2648 = vadd.f32 %v2563, %v2608
        %v2649 = vadd.f32 %v2564, %v2610
        %v2650 = vadd.f32 %v2565, %v2612
        %v2651 = vadd.f32 %v2566, %v2614
        %v2652 = vadd.f32 %v2567, %v2616
        %v2653 = vadd.f32 %v2568, %v2618
        %v2654 = vadd.f32 %v2569, %v2620
        %v2655 = vadd.f32 %v2570, %v2622
        %v2656 = vadd.f32 %v2571, %v2621
        %v2657 = vpack.c.bf16 %v2640, %v2640
        %v2658 = vpack.c.bf16 %v2641, %v2641
        %v2659 = vpack.c.bf16 %v2642, %v2642
        %v2660 = vpack.c.bf16 %v2643, %v2643
        %v2661 = vpack.c.bf16 %v2644, %v2644
        %v2662 = vpack.c.bf16 %v2645, %v2645
        %v2663 = vpack.c.bf16 %v2646, %v2646
        %v2664 = vpack.c.bf16 %v2647, %v2647
        %v2665 = vpack.c.bf16 %v2648, %v2648
        %v2666 = vpack.c.bf16 %v2649, %v2649
        %v2667 = vpack.c.bf16 %v2650, %v2650
        %v2668 = vpack.c.bf16 %v2651, %v2651
        %v2669 = vpack.c.bf16 %v2652, %v2652
        %v2670 = vpack.c.bf16 %v2653, %v2653
        %v2671 = vpack.c.bf16 %v2654, %v2654
        %v2672 = vpack.c.bf16 %v2655, %v2655
        %v2673 = vpack.c.bf16 %v2656, %v2656
        %v2674 = vld [vmem:[#allocation3 + $0x4] sm:$0x8]
        %v2675 = vld [vmem:[#allocation3 + $0x40] sm:$0xf]
        %v2676 = vld [vmem:[#allocation3 + $0x44] sm:$0xf]
        %v2677 = vunpack.c.l.bf16 %v2657
        %v2678 = vunpack.c.l.bf16 %v2658
        %v2679 = vunpack.c.l.bf16 %v2659
        %v2680 = vunpack.c.l.bf16 %v2660
        %v2681 = vunpack.c.l.bf16 %v2661
        %v2682 = vunpack.c.l.bf16 %v2662
        %v2683 = vunpack.c.l.bf16 %v2663
        %v2684 = vunpack.c.l.bf16 %v2664
        %v2685 = vunpack.c.l.bf16 %v2665
        %v2686 = vunpack.c.l.bf16 %v2666
        %v2687 = vunpack.c.l.bf16 %v2667
        %v2688 = vunpack.c.l.bf16 %v2668
        %v2689 = vunpack.c.l.bf16 %v2669
        %v2690 = vunpack.c.l.bf16 %v2670
        %v2691 = vunpack.c.l.bf16 %v2671
        %v2692 = vunpack.c.l.bf16 %v2672
        %v2693 = vunpack.c.l.bf16 %v2673
        %v2694 = vunpack.c.l.bf16 %v2674
        %v2695 = vunpack.c.l.bf16 %v2675
        %v2696 = vunpack.c.l.bf16 %v2676
        %v2700 = vrot.slane %v2694, 3
        %v2701 = vrot.slane %v2557, 3
        %v2702 = vsel %vm1983, %v2700, %v2701
        %v2703 = vrot.slane %v2558, 3
        %v2704 = vsel %vm1983, %v2701, %v2703
        %v2705 = vrot.slane %v2559, 3
        %v2706 = vsel %vm1983, %v2703, %v2705
        %v2707 = vrot.slane %v2560, 3
        %v2708 = vsel %vm1983, %v2705, %v2707
        %v2709 = vrot.slane %v2561, 3
        %v2710 = vsel %vm1983, %v2707, %v2709
        %v2711 = vrot.slane %v2562, 3
        %v2712 = vsel %vm1983, %v2709, %v2711
        %v2713 = vrot.slane %v2563, 3
        %v2714 = vsel %vm1983, %v2711, %v2713
        %v2715 = vrot.slane %v2564, 3
        %v2716 = vsel %vm1983, %v2713, %v2715
        %v2717 = vrot.slane %v2565, 3
        %v2718 = vsel %vm1983, %v2715, %v2717
        %v2719 = vrot.slane %v2566, 3
        %v2720 = vsel %vm1983, %v2717, %v2719
        %v2721 = vrot.slane %v2567, 3
        %v2722 = vsel %vm1983, %v2719, %v2721
        %v2723 = vrot.slane %v2568, 3
        %v2724 = vsel %vm1983, %v2721, %v2723
        %v2725 = vrot.slane %v2569, 3
        %v2726 = vsel %vm1983, %v2723, %v2725
        %v2727 = vrot.slane %v2570, 3
        %v2728 = vsel %vm1983, %v2725, %v2727
        %v2729 = vrot.slane %v2695, 3
        %v2730 = vsel %vm1983, %v2727, %v2729
        %v2731 = vrot.slane %v2696, 3
        %v2732 = vsel %vm1983, %v2729, %v2731
        %v2750 = vadd.f32 %v2677, %v2702
        %v2751 = vadd.f32 %v2678, %v2704
        %v2752 = vadd.f32 %v2679, %v2706
        %v2753 = vadd.f32 %v2680, %v2708
        %v2754 = vadd.f32 %v2681, %v2710
        %v2755 = vadd.f32 %v2682, %v2712
        %v2756 = vadd.f32 %v2683, %v2714
        %v2757 = vadd.f32 %v2684, %v2716
        %v2758 = vadd.f32 %v2685, %v2718
        %v2759 = vadd.f32 %v2686, %v2720
        %v2760 = vadd.f32 %v2687, %v2722
        %v2761 = vadd.f32 %v2688, %v2724
        %v2762 = vadd.f32 %v2689, %v2726
        %v2763 = vadd.f32 %v2690, %v2728
        %v2764 = vadd.f32 %v2691, %v2730
        %v2765 = vadd.f32 %v2692, %v2732
        %v2766 = vadd.f32 %v2693, %v2731
        %v2767 = vpack.c.bf16 %v2750, %v2750
        %v2768 = vpack.c.bf16 %v2751, %v2751
        %v2769 = vpack.c.bf16 %v2752, %v2752
        %v2770 = vpack.c.bf16 %v2753, %v2753
        %v2771 = vpack.c.bf16 %v2754, %v2754
        %v2772 = vpack.c.bf16 %v2755, %v2755
        %v2773 = vpack.c.bf16 %v2756, %v2756
        %v2774 = vpack.c.bf16 %v2757, %v2757
        %v2775 = vpack.c.bf16 %v2758, %v2758
        %v2776 = vpack.c.bf16 %v2759, %v2759
        %v2777 = vpack.c.bf16 %v2760, %v2760
        %v2778 = vpack.c.bf16 %v2761, %v2761
        %v2779 = vpack.c.bf16 %v2762, %v2762
        %v2780 = vpack.c.bf16 %v2763, %v2763
        %v2781 = vpack.c.bf16 %v2764, %v2764
        %v2782 = vpack.c.bf16 %v2765, %v2765
        %v2783 = vpack.c.bf16 %v2766, %v2766
        %v2784 = vunpack.c.l.bf16 %v2767
        %v2785 = vunpack.c.l.bf16 %v2768
        %v2786 = vunpack.c.l.bf16 %v2769
        %v2787 = vunpack.c.l.bf16 %v2770
        %v2788 = vunpack.c.l.bf16 %v2771
        %v2789 = vunpack.c.l.bf16 %v2772
        %v2790 = vunpack.c.l.bf16 %v2773
        %v2791 = vunpack.c.l.bf16 %v2774
        %v2792 = vunpack.c.l.bf16 %v2775
        %v2793 = vunpack.c.l.bf16 %v2776
        %v2794 = vunpack.c.l.bf16 %v2777
        %v2795 = vunpack.c.l.bf16 %v2778
        %v2796 = vunpack.c.l.bf16 %v2779
        %v2797 = vunpack.c.l.bf16 %v2780
        %v2798 = vunpack.c.l.bf16 %v2781
        %v2799 = vunpack.c.l.bf16 %v2782
        %v2800 = vunpack.c.l.bf16 %v2783
        %vm2801 = vcmask 1043456
        %v2802 = vrot.slane %v2557, 4
        %v2803 = vrot.slane %v2558, 4
        %v2804 = vsel %vm2801, %v2802, %v2803
        %v2805 = vrot.slane %v2559, 4
        %v2806 = vsel %vm2801, %v2803, %v2805
        %v2807 = vrot.slane %v2560, 4
        %v2808 = vsel %vm2801, %v2805, %v2807
        %v2809 = vrot.slane %v2561, 4
        %v2810 = vsel %vm2801, %v2807, %v2809
        %v2811 = vrot.slane %v2562, 4
        %v2812 = vsel %vm2801, %v2809, %v2811
        %v2813 = vrot.slane %v2563, 4
        %v2814 = vsel %vm2801, %v2811, %v2813
        %v2815 = vrot.slane %v2564, 4
        %v2816 = vsel %vm2801, %v2813, %v2815
        %v2817 = vrot.slane %v2565, 4
        %v2818 = vsel %vm2801, %v2815, %v2817
        %v2819 = vrot.slane %v2566, 4
        %v2820 = vsel %vm2801, %v2817, %v2819
        %v2821 = vrot.slane %v2567, 4
        %v2822 = vsel %vm2801, %v2819, %v2821
        %v2823 = vrot.slane %v2568, 4
        %v2824 = vsel %vm2801, %v2821, %v2823
        %v2825 = vrot.slane %v2569, 4
        %v2826 = vsel %vm2801, %v2823, %v2825
        %v2827 = vrot.slane %v2570, 4
        %v2828 = vsel %vm2801, %v2825, %v2827
        %v2829 = vrot.slane %v2695, 4
        %v2830 = vsel %vm2801, %v2827, %v2829
        %v2831 = vrot.slane %v2696, 4
        %v2832 = vsel %vm2801, %v2829, %v2831
        %v2850 = vadd.f32 %v2784, %v2802
        %v2851 = vadd.f32 %v2785, %v2804
        %v2852 = vadd.f32 %v2786, %v2806
        %v2853 = vadd.f32 %v2787, %v2808
        %v2854 = vadd.f32 %v2788, %v2810
        %v2855 = vadd.f32 %v2789, %v2812
        %v2856 = vadd.f32 %v2790, %v2814
        %v2857 = vadd.f32 %v2791, %v2816
        %v2858 = vadd.f32 %v2792, %v2818
        %v2859 = vadd.f32 %v2793, %v2820
        %v2860 = vadd.f32 %v2794, %v2822
        %v2861 = vadd.f32 %v2795, %v2824
        %v2862 = vadd.f32 %v2796, %v2826
        %v2863 = vadd.f32 %v2797, %v2828
        %v2864 = vadd.f32 %v2798, %v2830
        %v2865 = vadd.f32 %v2799, %v2832
        %v2866 = vadd.f32 %v2800, %v2831
        %v2867 = vpack.c.bf16 %v2850, %v2850
        %v2868 = vpack.c.bf16 %v2851, %v2851
        %v2869 = vpack.c.bf16 %v2852, %v2852
        %v2870 = vpack.c.bf16 %v2853, %v2853
        %v2871 = vpack.c.bf16 %v2854, %v2854
        %v2872 = vpack.c.bf16 %v2855, %v2855
        %v2873 = vpack.c.bf16 %v2856, %v2856
        %v2874 = vpack.c.bf16 %v2857, %v2857
        %v2875 = vpack.c.bf16 %v2858, %v2858
        %v2876 = vpack.c.bf16 %v2859, %v2859
        %v2877 = vpack.c.bf16 %v2860, %v2860
        %v2878 = vpack.c.bf16 %v2861, %v2861
        %v2879 = vpack.c.bf16 %v2862, %v2862
        %v2880 = vpack.c.bf16 %v2863, %v2863
        %v2881 = vpack.c.bf16 %v2864, %v2864
        %v2882 = vpack.c.bf16 %v2865, %v2865
        %v2883 = vpack.c.bf16 %v2866, %v2866
        %vm2901 = vcmask 1041408
        %vm2902 = vcmask 1045508
        %vm2903 = vmor %vm2901, %vm2902
        %v2904 = vrot.slane %v2867, 6
        %v2905 = vrot.slane %v2904, 4
        %v2906 = vrot.slane %v2868, 6
        %v2907 = vsel %vm2903, %v2905, %v2906
        %v2908 = vrot.slane %v2906, 4
        %v2909 = vrot.slane %v2869, 6
        %v2910 = vsel %vm2903, %v2908, %v2909
        %v2911 = vrot.slane %v2909, 4
        %v2912 = vrot.slane %v2870, 6
        %v2913 = vsel %vm2903, %v2911, %v2912
        %v2914 = vrot.slane %v2912, 4
        %v2915 = vrot.slane %v2871, 6
        %v2916 = vsel %vm2903, %v2914, %v2915
        %v2917 = vrot.slane %v2915, 4
        %v2918 = vrot.slane %v2872, 6
        %v2919 = vsel %vm2903, %v2917, %v2918
        %v2920 = vrot.slane %v2918, 4
        %v2921 = vrot.slane %v2873, 6
        %v2922 = vsel %vm2903, %v2920, %v2921
        %v2923 = vrot.slane %v2921, 4
        %v2924 = vrot.slane %v2874, 6
        %v2925 = vsel %vm2903, %v2923, %v2924
        %v2926 = vrot.slane %v2924, 4
        %v2927 = vrot.slane %v2875, 6
        %v2928 = vsel %vm2903, %v2926, %v2927
        %v2929 = vrot.slane %v2927, 4
        %v2930 = vrot.slane %v2876, 6
        %v2931 = vsel %vm2903, %v2929, %v2930
        %v2932 = vrot.slane %v2930, 4
        %v2933 = vrot.slane %v2877, 6
        %v2934 = vsel %vm2903, %v2932, %v2933
        %v2935 = vrot.slane %v2933, 4
        %v2936 = vrot.slane %v2878, 6
        %v2937 = vsel %vm2903, %v2935, %v2936
        %v2938 = vrot.slane %v2936, 4
        %v2939 = vrot.slane %v2879, 6
        %v2940 = vsel %vm2903, %v2938, %v2939
        %v2941 = vrot.slane %v2939, 4
        %v2942 = vrot.slane %v2880, 6
        %v2943 = vsel %vm2903, %v2941, %v2942
        %v2944 = vrot.slane %v2942, 4
        %v2945 = vrot.slane %v2881, 6
        %v2946 = vsel %vm2903, %v2944, %v2945
        %v2947 = vrot.slane %v2945, 4
        %v2948 = vrot.slane %v2882, 6
        %v2949 = vsel %vm2903, %v2947, %v2948
        %v2950 = vrot.slane %v2948, 4
        %v2951 = vrot.slane %v2883, 6
        %v2952 = vsel %vm2903, %v2950, %v2951
        %2969 = vst [vmem:[#allocation4 + $0x8] sm:$0xf] %v2907
        %2970 = vst [vmem:[#allocation4 + $0x20] sm:$0xf] %v2910
        %2971 = vst [vmem:[#allocation4 + $0x38] sm:$0xf] %v2913
        %2972 = vst [vmem:[#allocation4 + $0x50] sm:$0xf] %v2916
        %2973 = vst [vmem:[#allocation4 + $0x68] sm:$0xf] %v2919
        %2974 = vst [vmem:[#allocation4 + $0x80] sm:$0xf] %v2922
        %2975 = vst [vmem:[#allocation4 + $0x98] sm:$0xf] %v2925
        %2976 = vst [vmem:[#allocation4 + $0xb0] sm:$0xf] %v2928
        %2977 = vst [vmem:[#allocation4 + $0xc8] sm:$0xf] %v2931
        %2978 = vst [vmem:[#allocation4 + $0xe0] sm:$0xf] %v2934
        %2979 = vst [vmem:[#allocation4 + $0xf8] sm:$0xf] %v2937
        %2980 = vst [vmem:[#allocation4 + $0x110] sm:$0xf] %v2940
        %2981 = vst [vmem:[#allocation4 + $0x128] sm:$0xf] %v2943
        %2982 = vst [vmem:[#allocation4 + $0x140] sm:$0xf] %v2946
        %2983 = vst [vmem:[#allocation4 + $0x158] sm:$0xf] %v2949
        %2984 = vst [vmem:[#allocation4 + $0x170] sm:$0xf] %v2952
        %v2985 = vld [vmem:[#allocation3] sm:$0xe]
        %v2986 = vld [vmem:[#allocation3 + $0x4] sm:$0xf]
        %v2987 = vld [vmem:[#allocation3 + $0x8] sm:$0xf]
        %v2988 = vld [vmem:[#allocation3 + $0xc] sm:$0xf]
        %v2989 = vld [vmem:[#allocation3 + $0x10] sm:$0xf]
        %v2990 = vld [vmem:[#allocation3 + $0x14] sm:$0xf]
        %v2991 = vld [vmem:[#allocation3 + $0x18] sm:$0xf]
        %v2992 = vld [vmem:[#allocation3 + $0x1c] sm:$0xf]
        %v2993 = vld [vmem:[#allocation3 + $0x20] sm:$0xf]
        %v2994 = vld [vmem:[#allocation3 + $0x24] sm:$0xf]
        %v2995 = vld [vmem:[#allocation3 + $0x28] sm:$0xf]
        %v2996 = vld [vmem:[#allocation3 + $0x2c] sm:$0xf]
        %v2997 = vld [vmem:[#allocation3 + $0x30] sm:$0xf]
        %v2998 = vld [vmem:[#allocation3 + $0x34] sm:$0xf]
        %v2999 = vld [vmem:[#allocation3 + $0x38] sm:$0xf]
        %v3000 = vld [vmem:[#allocation3 + $0x3c] sm:$0xf]
        %v3001 = vld [vmem:[#allocation3 + $0x40] sm:$0x3]
        %v3002 = vld [vmem:[#allocation3 + $0x40] sm:$0xf]
        %v3003 = vld [vmem:[#allocation3 + $0x44] sm:$0xf]
        %v3004 = vld [vmem:[#allocation3 + $0x48] sm:$0x1]
        %v3005 = vunpack.c.l.bf16 %v2985
        %v3006 = vunpack.c.l.bf16 %v2986
        %v3007 = vunpack.c.l.bf16 %v2987
        %v3008 = vunpack.c.l.bf16 %v2988
        %v3009 = vunpack.c.l.bf16 %v2989
        %v3010 = vunpack.c.l.bf16 %v2990
        %v3011 = vunpack.c.l.bf16 %v2991
        %v3012 = vunpack.c.l.bf16 %v2992
        %v3013 = vunpack.c.l.bf16 %v2993
        %v3014 = vunpack.c.l.bf16 %v2994
        %v3015 = vunpack.c.l.bf16 %v2995
        %v3016 = vunpack.c.l.bf16 %v2996
        %v3017 = vunpack.c.l.bf16 %v2997
        %v3018 = vunpack.c.l.bf16 %v2998
        %v3019 = vunpack.c.l.bf16 %v2999
        %v3020 = vunpack.c.l.bf16 %v3000
        %v3021 = vunpack.c.l.bf16 %v3001
        %v3022 = vunpack.c.l.bf16 %v3002
        %v3023 = vunpack.c.l.bf16 %v3003
        %v3024 = vunpack.c.l.bf16 %v3004
        %v3042 = vrot.slane %v3007, 6
        %v3043 = vrot.slane %v3008, 6
        %v3044 = vsel %vm2196, %v3042, %v3043
        %v3045 = vrot.slane %v3009, 6
        %v3046 = vsel %vm2196, %v3043, %v3045
        %v3047 = vrot.slane %v3010, 6
        %v3048 = vsel %vm2196, %v3045, %v3047
        %v3049 = vrot.slane %v3011, 6
        %v3050 = vsel %vm2196, %v3047, %v3049
        %v3051 = vrot.slane %v3012, 6
        %v3052 = vsel %vm2196, %v3049, %v3051
        %v3053 = vrot.slane %v3013, 6
        %v3054 = vsel %vm2196, %v3051, %v3053
        %v3055 = vrot.slane %v3014, 6
        %v3056 = vsel %vm2196, %v3053, %v3055
        %v3057 = vrot.slane %v3015, 6
        %v3058 = vsel %vm2196, %v3055, %v3057
        %v3059 = vrot.slane %v3016, 6
        %v3060 = vsel %vm2196, %v3057, %v3059
        %v3061 = vrot.slane %v3017, 6
        %v3062 = vsel %vm2196, %v3059, %v3061
        %v3063 = vrot.slane %v3018, 6
        %v3064 = vsel %vm2196, %v3061, %v3063
        %v3065 = vrot.slane %v3019, 6
        %v3066 = vsel %vm2196, %v3063, %v3065
        %v3067 = vrot.slane %v3020, 6
        %v3068 = vsel %vm2196, %v3065, %v3067
        %v3069 = vrot.slane %v3022, 6
        %v3070 = vsel %vm2196, %v3067, %v3069
        %v3071 = vrot.slane %v3023, 6
        %v3072 = vsel %vm2196, %v3069, %v3071
        %v3073 = vrot.slane %v3024, 6
        %v3074 = vsel %vm2196, %v3071, %v3073
        %v3092 = vadd.f32 %v3005, %v3042
        %v3093 = vadd.f32 %v3006, %v3044
        %v3094 = vadd.f32 %v3007, %v3046
        %v3095 = vadd.f32 %v3008, %v3048
        %v3096 = vadd.f32 %v3009, %v3050
        %v3097 = vadd.f32 %v3010, %v3052
        %v3098 = vadd.f32 %v3011, %v3054
        %v3099 = vadd.f32 %v3012, %v3056
        %v3100 = vadd.f32 %v3013, %v3058
        %v3101 = vadd.f32 %v3014, %v3060
        %v3102 = vadd.f32 %v3015, %v3062
        %v3103 = vadd.f32 %v3016, %v3064
        %v3104 = vadd.f32 %v3017, %v3066
        %v3105 = vadd.f32 %v3018, %v3068
        %v3106 = vadd.f32 %v3019, %v3070
        %v3107 = vadd.f32 %v3020, %v3072
        %v3108 = vadd.f32 %v3021, %v3074
        %v3109 = vpack.c.bf16 %v3092, %v3092
        %v3110 = vpack.c.bf16 %v3093, %v3093
        %v3111 = vpack.c.bf16 %v3094, %v3094
        %v3112 = vpack.c.bf16 %v3095, %v3095
        %v3113 = vpack.c.bf16 %v3096, %v3096
        %v3114 = vpack.c.bf16 %v3097, %v3097
        %v3115 = vpack.c.bf16 %v3098, %v3098
        %v3116 = vpack.c.bf16 %v3099, %v3099
        %v3117 = vpack.c.bf16 %v3100, %v3100
        %v3118 = vpack.c.bf16 %v3101, %v3101
        %v3119 = vpack.c.bf16 %v3102, %v3102
        %v3120 = vpack.c.bf16 %v3103, %v3103
        %v3121 = vpack.c.bf16 %v3104, %v3104
        %v3122 = vpack.c.bf16 %v3105, %v3105
        %v3123 = vpack.c.bf16 %v3106, %v3106
        %v3124 = vpack.c.bf16 %v3107, %v3107
        %v3125 = vpack.c.bf16 %v3108, %v3108
        %vm3126 = vsmask.f32 2304
        %vm3127 = vsmask.f32 6416
        %vm3128 = vmor %vm3126, %vm3127
        %v3130 = vshrl.u32 %v3109, 16
        %v3132 = vrot.slane %v3130, 5
        %v3133 = vshll.u32 %v3109, 16
        %v3135 = vrot.slane %v3133, 6
        %v3136 = vor.u32 %v3132, %v3135
        %v3137 = vrot.slane %v3136, 4
        %v3139 = vshrl.u32 %v3110, 16
        %v3141 = vrot.slane %v3139, 5
        %v3142 = vshll.u32 %v3110, 16
        %v3144 = vrot.slane %v3142, 6
        %v3145 = vor.u32 %v3141, %v3144
        %v3146 = vsel %vm3128, %v3137, %v3145
        %v3147 = vrot.slane %v3145, 4
        %v3149 = vshrl.u32 %v3111, 16
        %v3151 = vrot.slane %v3149, 5
        %v3152 = vshll.u32 %v3111, 16
        %v3154 = vrot.slane %v3152, 6
        %v3155 = vor.u32 %v3151, %v3154
        %v3156 = vsel %vm3128, %v3147, %v3155
        %v3157 = vrot.slane %v3155, 4
        %v3159 = vshrl.u32 %v3112, 16
        %v3161 = vrot.slane %v3159, 5
        %v3162 = vshll.u32 %v3112, 16
        %v3164 = vrot.slane %v3162, 6
        %v3165 = vor.u32 %v3161, %v3164
        %v3166 = vsel %vm3128, %v3157, %v3165
        %v3167 = vrot.slane %v3165, 4
        %v3169 = vshrl.u32 %v3113, 16
        %v3171 = vrot.slane %v3169, 5
        %v3172 = vshll.u32 %v3113, 16
        %v3174 = vrot.slane %v3172, 6
        %v3175 = vor.u32 %v3171, %v3174
        %v3176 = vsel %vm3128, %v3167, %v3175
        %v3177 = vrot.slane %v3175, 4
        %v3179 = vshrl.u32 %v3114, 16
        %v3181 = vrot.slane %v3179, 5
        %v3182 = vshll.u32 %v3114, 16
        %v3184 = vrot.slane %v3182, 6
        %v3185 = vor.u32 %v3181, %v3184
        %v3186 = vsel %vm3128, %v3177, %v3185
        %v3187 = vrot.slane %v3185, 4
        %v3189 = vshrl.u32 %v3115, 16
        %v3191 = vrot.slane %v3189, 5
        %v3192 = vshll.u32 %v3115, 16
        %v3194 = vrot.slane %v3192, 6
        %v3195 = vor.u32 %v3191, %v3194
        %v3196 = vsel %vm3128, %v3187, %v3195
        %v3197 = vrot.slane %v3195, 4
        %v3199 = vshrl.u32 %v3116, 16
        %v3201 = vrot.slane %v3199, 5
        %v3202 = vshll.u32 %v3116, 16
        %v3204 = vrot.slane %v3202, 6
        %v3205 = vor.u32 %v3201, %v3204
        %v3206 = vsel %vm3128, %v3197, %v3205
        %v3207 = vrot.slane %v3205, 4
        %v3209 = vshrl.u32 %v3117, 16
        %v3211 = vrot.slane %v3209, 5
        %v3212 = vshll.u32 %v3117, 16
        %v3214 = vrot.slane %v3212, 6
        %v3215 = vor.u32 %v3211, %v3214
        %v3216 = vsel %vm3128, %v3207, %v3215
        %v3217 = vrot.slane %v3215, 4
        %v3219 = vshrl.u32 %v3118, 16
        %v3221 = vrot.slane %v3219, 5
        %v3222 = vshll.u32 %v3118, 16
        %v3224 = vrot.slane %v3222, 6
        %v3225 = vor.u32 %v3221, %v3224
        %v3226 = vsel %vm3128, %v3217, %v3225
        %v3227 = vrot.slane %v3225, 4
        %v3229 = vshrl.u32 %v3119, 16
        %v3231 = vrot.slane %v3229, 5
        %v3232 = vshll.u32 %v3119, 16
        %v3234 = vrot.slane %v3232, 6
        %v3235 = vor.u32 %v3231, %v3234
        %v3236 = vsel %vm3128, %v3227, %v3235
        %v3237 = vrot.slane %v3235, 4
        %v3239 = vshrl.u32 %v3120, 16
        %v3241 = vrot.slane %v3239, 5
        %v3242 = vshll.u32 %v3120, 16
        %v3244 = vrot.slane %v3242, 6
        %v3245 = vor.u32 %v3241, %v3244
        %v3246 = vsel %vm3128, %v3237, %v3245
        %v3247 = vrot.slane %v3245, 4
        %v3249 = vshrl.u32 %v3121, 16
        %v3251 = vrot.slane %v3249, 5
        %v3252 = vshll.u32 %v3121, 16
        %v3254 = vrot.slane %v3252, 6
        %v3255 = vor.u32 %v3251, %v3254
        %v3256 = vsel %vm3128, %v3247, %v3255
        %v3257 = vrot.slane %v3255, 4
        %v3259 = vshrl.u32 %v3122, 16
        %v3261 = vrot.slane %v3259, 5
        %v3262 = vshll.u32 %v3122, 16
        %v3264 = vrot.slane %v3262, 6
        %v3265 = vor.u32 %v3261, %v3264
        %v3266 = vsel %vm3128, %v3257, %v3265
        %v3267 = vrot.slane %v3265, 4
        %v3269 = vshrl.u32 %v3123, 16
        %v3271 = vrot.slane %v3269, 5
        %v3272 = vshll.u32 %v3123, 16
        %v3274 = vrot.slane %v3272, 6
        %v3275 = vor.u32 %v3271, %v3274
        %v3276 = vsel %vm3128, %v3267, %v3275
        %v3277 = vrot.slane %v3275, 4
        %v3279 = vshrl.u32 %v3124, 16
        %v3281 = vrot.slane %v3279, 5
        %v3282 = vshll.u32 %v3124, 16
        %v3284 = vrot.slane %v3282, 6
        %v3285 = vor.u32 %v3281, %v3284
        %v3286 = vsel %vm3128, %v3277, %v3285
        %v3287 = vrot.slane %v3285, 4
        %v3289 = vshrl.u32 %v3125, 16
        %v3291 = vrot.slane %v3289, 5
        %v3292 = vshll.u32 %v3125, 16
        %v3294 = vrot.slane %v3292, 6
        %v3295 = vor.u32 %v3291, %v3294
        %v3296 = vsel %vm3128, %v3287, %v3295
        %3313 = vst [vmem:[#allocation4 + $0xc] sm:$0xf] %v3146
        %3314 = vst [vmem:[#allocation4 + $0x24] sm:$0xf] %v3156
        %3315 = vst [vmem:[#allocation4 + $0x3c] sm:$0xf] %v3166
        %3316 = vst [vmem:[#allocation4 + $0x54] sm:$0xf] %v3176
        %3317 = vst [vmem:[#allocation4 + $0x6c] sm:$0xf] %v3186
        %3318 = vst [vmem:[#allocation4 + $0x84] sm:$0xf] %v3196
        %3319 = vst [vmem:[#allocation4 + $0x9c] sm:$0xf] %v3206
        %3320 = vst [vmem:[#allocation4 + $0xb4] sm:$0xf] %v3216
        %3321 = vst [vmem:[#allocation4 + $0xcc] sm:$0xf] %v3226
        %3322 = vst [vmem:[#allocation4 + $0xe4] sm:$0xf] %v3236
        %3323 = vst [vmem:[#allocation4 + $0xfc] sm:$0xf] %v3246
        %3324 = vst [vmem:[#allocation4 + $0x114] sm:$0xf] %v3256
        %3325 = vst [vmem:[#allocation4 + $0x12c] sm:$0xf] %v3266
        %3326 = vst [vmem:[#allocation4 + $0x144] sm:$0xf] %v3276
        %3327 = vst [vmem:[#allocation4 + $0x15c] sm:$0xf] %v3286
        %3328 = vst [vmem:[#allocation4 + $0x174] sm:$0xf] %v3296
        %v3329 = vld [vmem:[#allocation3] sm:$0xe]
        %v3330 = vld [vmem:[#allocation3 + $0x4] sm:$0xf]
        %v3331 = vld [vmem:[#allocation3 + $0x8] sm:$0xf]
        %v3332 = vld [vmem:[#allocation3 + $0xc] sm:$0xf]
        %v3333 = vld [vmem:[#allocation3 + $0x10] sm:$0xf]
        %v3334 = vld [vmem:[#allocation3 + $0x14] sm:$0xf]
        %v3335 = vld [vmem:[#allocation3 + $0x18] sm:$0xf]
        %v3336 = vld [vmem:[#allocation3 + $0x1c] sm:$0xf]
        %v3337 = vld [vmem:[#allocation3 + $0x20] sm:$0xf]
        %v3338 = vld [vmem:[#allocation3 + $0x24] sm:$0xf]
        %v3339 = vld [vmem:[#allocation3 + $0x28] sm:$0xf]
        %v3340 = vld [vmem:[#allocation3 + $0x2c] sm:$0xf]
        %v3341 = vld [vmem:[#allocation3 + $0x30] sm:$0xf]
        %v3342 = vld [vmem:[#allocation3 + $0x34] sm:$0xf]
        %v3343 = vld [vmem:[#allocation3 + $0x38] sm:$0xf]
        %v3344 = vld [vmem:[#allocation3 + $0x3c] sm:$0xf]
        %v3345 = vld [vmem:[#allocation3 + $0x40] sm:$0x1]
        %v3346 = vld [vmem:[#allocation3 + $0x8] sm:$0xe]
        %v3347 = vld [vmem:[#allocation3 + $0x40] sm:$0xf]
        %v3348 = vld [vmem:[#allocation3 + $0x44] sm:$0xf]
        %v3349 = vld [vmem:[#allocation3 + $0x48] sm:$0x1]
        %v3350 = vunpack.c.l.bf16 %v3329
        %v3351 = vunpack.c.l.bf16 %v3330
        %v3352 = vunpack.c.l.bf16 %v3331
        %v3353 = vunpack.c.l.bf16 %v3332
        %v3354 = vunpack.c.l.bf16 %v3333
        %v3355 = vunpack.c.l.bf16 %v3334
        %v3356 = vunpack.c.l.bf16 %v3335
        %v3357 = vunpack.c.l.bf16 %v3336
        %v3358 = vunpack.c.l.bf16 %v3337
        %v3359 = vunpack.c.l.bf16 %v3338
        %v3360 = vunpack.c.l.bf16 %v3339
        %v3361 = vunpack.c.l.bf16 %v3340
        %v3362 = vunpack.c.l.bf16 %v3341
        %v3363 = vunpack.c.l.bf16 %v3342
        %v3364 = vunpack.c.l.bf16 %v3343
        %v3365 = vunpack.c.l.bf16 %v3344
        %v3366 = vunpack.c.l.bf16 %v3345
        %v3367 = vunpack.c.l.bf16 %v3346
        %v3368 = vunpack.c.l.bf16 %v3347
        %v3369 = vunpack.c.l.bf16 %v3348
        %v3370 = vunpack.c.l.bf16 %v3349
        %v3371 = vadd.f32 %v3350, %v3367
        %v3372 = vadd.f32 %v3351, %v3353
        %v3373 = vadd.f32 %v3352, %v3354
        %v3374 = vadd.f32 %v3353, %v3355
        %v3375 = vadd.f32 %v3354, %v3356
        %v3376 = vadd.f32 %v3355, %v3357
        %v3377 = vadd.f32 %v3356, %v3358
        %v3378 = vadd.f32 %v3357, %v3359
        %v3379 = vadd.f32 %v3358, %v3360
        %v3380 = vadd.f32 %v3359, %v3361
        %v3381 = vadd.f32 %v3360, %v3362
        %v3382 = vadd.f32 %v3361, %v3363
        %v3383 = vadd.f32 %v3362, %v3364
        %v3384 = vadd.f32 %v3363, %v3365
        %v3385 = vadd.f32 %v3364, %v3368
        %v3386 = vadd.f32 %v3365, %v3369
        %v3387 = vadd.f32 %v3366, %v3370
        %v3388 = vpack.c.bf16 %v3371, %v3371
        %v3389 = vpack.c.bf16 %v3372, %v3372
        %v3390 = vpack.c.bf16 %v3373, %v3373
        %v3391 = vpack.c.bf16 %v3374, %v3374
        %v3392 = vpack.c.bf16 %v3375, %v3375
        %v3393 = vpack.c.bf16 %v3376, %v3376
        %v3394 = vpack.c.bf16 %v3377, %v3377
        %v3395 = vpack.c.bf16 %v3378, %v3378
        %v3396 = vpack.c.bf16 %v3379, %v3379
        %v3397 = vpack.c.bf16 %v3380, %v3380
        %v3398 = vpack.c.bf16 %v3381, %v3381
        %v3399 = vpack.c.bf16 %v3382, %v3382
        %v3400 = vpack.c.bf16 %v3383, %v3383
        %v3401 = vpack.c.bf16 %v3384, %v3384
        %v3402 = vpack.c.bf16 %v3385, %v3385
        %v3403 = vpack.c.bf16 %v3386, %v3386
        %v3404 = vpack.c.bf16 %v3387, %v3387
        %v3422 = vrot.slane %v3388, 5
        %v3423 = vrot.slane %v3422, 4
        %v3424 = vrot.slane %v3389, 5
        %v3425 = vsel %vm1643, %v3423, %v3424
        %v3426 = vrot.slane %v3424, 4
        %v3427 = vrot.slane %v3390, 5
        %v3428 = vsel %vm1643, %v3426, %v3427
        %v3429 = vrot.slane %v3427, 4
        %v3430 = vrot.slane %v3391, 5
        %v3431 = vsel %vm1643, %v3429, %v3430
        %v3432 = vrot.slane %v3430, 4
        %v3433 = vrot.slane %v3392, 5
        %v3434 = vsel %vm1643, %v3432, %v3433
        %v3435 = vrot.slane %v3433, 4
        %v3436 = vrot.slane %v3393, 5
        %v3437 = vsel %vm1643, %v3435, %v3436
        %v3438 = vrot.slane %v3436, 4
        %v3439 = vrot.slane %v3394, 5
        %v3440 = vsel %vm1643, %v3438, %v3439
        %v3441 = vrot.slane %v3439, 4
        %v3442 = vrot.slane %v3395, 5
        %v3443 = vsel %vm1643, %v3441, %v3442
        %v3444 = vrot.slane %v3442, 4
        %v3445 = vrot.slane %v3396, 5
        %v3446 = vsel %vm1643, %v3444, %v3445
        %v3447 = vrot.slane %v3445, 4
        %v3448 = vrot.slane %v3397, 5
        %v3449 = vsel %vm1643, %v3447, %v3448
        %v3450 = vrot.slane %v3448, 4
        %v3451 = vrot.slane %v3398, 5
        %v3452 = vsel %vm1643, %v3450, %v3451
        %v3453 = vrot.slane %v3451, 4
        %v3454 = vrot.slane %v3399, 5
        %v3455 = vsel %vm1643, %v3453, %v3454
        %v3456 = vrot.slane %v3454, 4
        %v3457 = vrot.slane %v3400, 5
        %v3458 = vsel %vm1643, %v3456, %v3457
        %v3459 = vrot.slane %v3457, 4
        %v3460 = vrot.slane %v3401, 5
        %v3461 = vsel %vm1643, %v3459, %v3460
        %v3462 = vrot.slane %v3460, 4
        %v3463 = vrot.slane %v3402, 5
        %v3464 = vsel %vm1643, %v3462, %v3463
        %v3465 = vrot.slane %v3463, 4
        %v3466 = vrot.slane %v3403, 5
        %v3467 = vsel %vm1643, %v3465, %v3466
        %v3468 = vrot.slane %v3466, 4
        %v3469 = vrot.slane %v3404, 5
        %v3470 = vsel %vm1643, %v3468, %v3469
        %3487 = vst [vmem:[#allocation4 + $0x10] sm:$0xf] %v3425
        %3488 = vst [vmem:[#allocation4 + $0x28] sm:$0xf] %v3428
        %3489 = vst [vmem:[#allocation4 + $0x40] sm:$0xf] %v3431
        %3490 = vst [vmem:[#allocation4 + $0x58] sm:$0xf] %v3434
        %3491 = vst [vmem:[#allocation4 + $0x70] sm:$0xf] %v3437
        %3492 = vst [vmem:[#allocation4 + $0x88] sm:$0xf] %v3440
        %3493 = vst [vmem:[#allocation4 + $0xa0] sm:$0xf] %v3443
        %3494 = vst [vmem:[#allocation4 + $0xb8] sm:$0xf] %v3446
        %3495 = vst [vmem:[#allocation4 + $0xd0] sm:$0xf] %v3449
        %3496 = vst [vmem:[#allocation4 + $0xe8] sm:$0xf] %v3452
        %3497 = vst [vmem:[#allocation4 + $0x100] sm:$0xf] %v3455
        %3498 = vst [vmem:[#allocation4 + $0x118] sm:$0xf] %v3458
        %3499 = vst [vmem:[#allocation4 + $0x130] sm:$0xf] %v3461
        %3500 = vst [vmem:[#allocation4 + $0x148] sm:$0xf] %v3464
        %3501 = vst [vmem:[#allocation4 + $0x160] sm:$0xf] %v3467
        %3502 = vst [vmem:[#allocation4 + $0x178] sm:$0xf] %v3470
        %v3503 = vld [vmem:[#allocation3] sm:$0xf]
        %v3504 = vld [vmem:[#allocation3 + $0x4] sm:$0xf]
        %v3505 = vld [vmem:[#allocation3 + $0x8] sm:$0xf]
        %v3506 = vld [vmem:[#allocation3 + $0xc] sm:$0xf]
        %v3507 = vld [vmem:[#allocation3 + $0x10] sm:$0xf]
        %v3508 = vld [vmem:[#allocation3 + $0x14] sm:$0xf]
        %v3509 = vld [vmem:[#allocation3 + $0x18] sm:$0xf]
        %v3510 = vld [vmem:[#allocation3 + $0x1c] sm:$0xf]
        %v3511 = vld [vmem:[#allocation3 + $0x20] sm:$0xf]
        %v3512 = vld [vmem:[#allocation3 + $0x24] sm:$0xf]
        %v3513 = vld [vmem:[#allocation3 + $0x28] sm:$0xf]
        %v3514 = vld [vmem:[#allocation3 + $0x2c] sm:$0xf]
        %v3515 = vld [vmem:[#allocation3 + $0x30] sm:$0xf]
        %v3516 = vld [vmem:[#allocation3 + $0x34] sm:$0xf]
        %v3517 = vld [vmem:[#allocation3 + $0x38] sm:$0xf]
        %v3518 = vld [vmem:[#allocation3 + $0x3c] sm:$0xf]
        %v3519 = vld [vmem:[#allocation3 + $0x40] sm:$0x1]
        %v3520 = vld [vmem:[#allocation3 + $0x8] sm:$0xe]
        %v3521 = vld [vmem:[#allocation3 + $0x40] sm:$0xf]
        %v3522 = vld [vmem:[#allocation3 + $0x44] sm:$0xf]
        %v3523 = vld [vmem:[#allocation3 + $0x48] sm:$0x3]
        %v3524 = vunpack.c.l.bf16 %v3503
        %v3525 = vunpack.c.l.bf16 %v3504
        %v3526 = vunpack.c.l.bf16 %v3505
        %v3527 = vunpack.c.l.bf16 %v3506
        %v3528 = vunpack.c.l.bf16 %v3507
        %v3529 = vunpack.c.l.bf16 %v3508
        %v3530 = vunpack.c.l.bf16 %v3509
        %v3531 = vunpack.c.l.bf16 %v3510
        %v3532 = vunpack.c.l.bf16 %v3511
        %v3533 = vunpack.c.l.bf16 %v3512
        %v3534 = vunpack.c.l.bf16 %v3513
        %v3535 = vunpack.c.l.bf16 %v3514
        %v3536 = vunpack.c.l.bf16 %v3515
        %v3537 = vunpack.c.l.bf16 %v3516
        %v3538 = vunpack.c.l.bf16 %v3517
        %v3539 = vunpack.c.l.bf16 %v3518
        %v3540 = vunpack.c.l.bf16 %v3519
        %v3541 = vunpack.c.l.bf16 %v3520
        %v3542 = vunpack.c.l.bf16 %v3521
        %v3543 = vunpack.c.l.bf16 %v3522
        %v3544 = vunpack.c.l.bf16 %v3523
        %v3562 = vrot.slane %v3541, 2
        %v3563 = vrot.slane %v3527, 2
        %v3564 = vsel %vm1880, %v3562, %v3563
        %v3565 = vrot.slane %v3528, 2
        %v3566 = vsel %vm1880, %v3563, %v3565
        %v3567 = vrot.slane %v3529, 2
        %v3568 = vsel %vm1880, %v3565, %v3567
        %v3569 = vrot.slane %v3530, 2
        %v3570 = vsel %vm1880, %v3567, %v3569
        %v3571 = vrot.slane %v3531, 2
        %v3572 = vsel %vm1880, %v3569, %v3571
        %v3573 = vrot.slane %v3532, 2
        %v3574 = vsel %vm1880, %v3571, %v3573
        %v3575 = vrot.slane %v3533, 2
        %v3576 = vsel %vm1880, %v3573, %v3575
        %v3577 = vrot.slane %v3534, 2
        %v3578 = vsel %vm1880, %v3575, %v3577
        %v3579 = vrot.slane %v3535, 2
        %v3580 = vsel %vm1880, %v3577, %v3579
        %v3581 = vrot.slane %v3536, 2
        %v3582 = vsel %vm1880, %v3579, %v3581
        %v3583 = vrot.slane %v3537, 2
        %v3584 = vsel %vm1880, %v3581, %v3583
        %v3585 = vrot.slane %v3538, 2
        %v3586 = vsel %vm1880, %v3583, %v3585
        %v3587 = vrot.slane %v3539, 2
        %v3588 = vsel %vm1880, %v3585, %v3587
        %v3589 = vrot.slane %v3542, 2
        %v3590 = vsel %vm1880, %v3587, %v3589
        %v3591 = vrot.slane %v3543, 2
        %v3592 = vsel %vm1880, %v3589, %v3591
        %v3593 = vrot.slane %v3544, 2
        %v3594 = vsel %vm1880, %v3591, %v3593
        %v3612 = vadd.f32 %v3524, %v3564
        %v3613 = vadd.f32 %v3525, %v3566
        %v3614 = vadd.f32 %v3526, %v3568
        %v3615 = vadd.f32 %v3527, %v3570
        %v3616 = vadd.f32 %v3528, %v3572
        %v3617 = vadd.f32 %v3529, %v3574
        %v3618 = vadd.f32 %v3530, %v3576
        %v3619 = vadd.f32 %v3531, %v3578
        %v3620 = vadd.f32 %v3532, %v3580
        %v3621 = vadd.f32 %v3533, %v3582
        %v3622 = vadd.f32 %v3534, %v3584
        %v3623 = vadd.f32 %v3535, %v3586
        %v3624 = vadd.f32 %v3536, %v3588
        %v3625 = vadd.f32 %v3537, %v3590
        %v3626 = vadd.f32 %v3538, %v3592
        %v3627 = vadd.f32 %v3539, %v3594
        %v3628 = vadd.f32 %v3540, %v3593
        %v3629 = vpack.c.bf16 %v3612, %v3612
        %v3630 = vpack.c.bf16 %v3613, %v3613
        %v3631 = vpack.c.bf16 %v3614, %v3614
        %v3632 = vpack.c.bf16 %v3615, %v3615
        %v3633 = vpack.c.bf16 %v3616, %v3616
        %v3634 = vpack.c.bf16 %v3617, %v3617
        %v3635 = vpack.c.bf16 %v3618, %v3618
        %v3636 = vpack.c.bf16 %v3619, %v3619
        %v3637 = vpack.c.bf16 %v3620, %v3620
        %v3638 = vpack.c.bf16 %v3621, %v3621
        %v3639 = vpack.c.bf16 %v3622, %v3622
        %v3640 = vpack.c.bf16 %v3623, %v3623
        %v3641 = vpack.c.bf16 %v3624, %v3624
        %v3642 = vpack.c.bf16 %v3625, %v3625
        %v3643 = vpack.c.bf16 %v3626, %v3626
        %v3644 = vpack.c.bf16 %v3627, %v3627
        %v3645 = vpack.c.bf16 %v3628, %v3628
        %vm3646 = vsmask.f32 3328
        %vm3647 = vsmask.f32 7440
        %vm3648 = vmor %vm3646, %vm3647
        %v3650 = vshrl.u32 %v3629, 16
        %v3652 = vrot.slane %v3650, 4
        %v3653 = vshll.u32 %v3629, 16
        %v3655 = vrot.slane %v3653, 5
        %v3656 = vor.u32 %v3652, %v3655
        %v3657 = vrot.slane %v3656, 4
        %v3659 = vshll.u32 %v3630, 16
        %v3661 = vrot.slane %v3659, 5
        %v3662 = vsel %vm3648, %v3657, %v3661
        %v3663 = vshrl.u32 %v3630, 16
        %v3665 = vrot.slane %v3663, 4
        %v3666 = vor.u32 %v3665, %v3661
        %v3667 = vrot.slane %v3666, 4
        %v3669 = vshll.u32 %v3631, 16
        %v3671 = vrot.slane %v3669, 5
        %v3672 = vsel %vm3648, %v3667, %v3671
        %v3673 = vshrl.u32 %v3631, 16
        %v3675 = vrot.slane %v3673, 4
        %v3676 = vor.u32 %v3675, %v3671
        %v3677 = vrot.slane %v3676, 4
        %v3679 = vshll.u32 %v3632, 16
        %v3681 = vrot.slane %v3679, 5
        %v3682 = vsel %vm3648, %v3677, %v3681
        %v3683 = vshrl.u32 %v3632, 16
        %v3685 = vrot.slane %v3683, 4
        %v3686 = vor.u32 %v3685, %v3681
        %v3687 = vrot.slane %v3686, 4
        %v3689 = vshll.u32 %v3633, 16
        %v3691 = vrot.slane %v3689, 5
        %v3692 = vsel %vm3648, %v3687, %v3691
        %v3693 = vshrl.u32 %v3633, 16
        %v3695 = vrot.slane %v3693, 4
        %v3696 = vor.u32 %v3695, %v3691
        %v3697 = vrot.slane %v3696, 4
        %v3699 = vshll.u32 %v3634, 16
        %v3701 = vrot.slane %v3699, 5
        %v3702 = vsel %vm3648, %v3697, %v3701
        %v3703 = vshrl.u32 %v3634, 16
        %v3705 = vrot.slane %v3703, 4
        %v3706 = vor.u32 %v3705, %v3701
        %v3707 = vrot.slane %v3706, 4
        %v3709 = vshll.u32 %v3635, 16
        %v3711 = vrot.slane %v3709, 5
        %v3712 = vsel %vm3648, %v3707, %v3711
        %v3713 = vshrl.u32 %v3635, 16
        %v3715 = vrot.slane %v3713, 4
        %v3716 = vor.u32 %v3715, %v3711
        %v3717 = vrot.slane %v3716, 4
        %v3719 = vshll.u32 %v3636, 16
        %v3721 = vrot.slane %v3719, 5
        %v3722 = vsel %vm3648, %v3717, %v3721
        %v3723 = vshrl.u32 %v3636, 16
        %v3725 = vrot.slane %v3723, 4
        %v3726 = vor.u32 %v3725, %v3721
        %v3727 = vrot.slane %v3726, 4
        %v3729 = vshll.u32 %v3637, 16
        %v3731 = vrot.slane %v3729, 5
        %v3732 = vsel %vm3648, %v3727, %v3731
        %v3733 = vshrl.u32 %v3637, 16
        %v3735 = vrot.slane %v3733, 4
        %v3736 = vor.u32 %v3735, %v3731
        %v3737 = vrot.slane %v3736, 4
        %v3739 = vshll.u32 %v3638, 16
        %v3741 = vrot.slane %v3739, 5
        %v3742 = vsel %vm3648, %v3737, %v3741
        %v3743 = vshrl.u32 %v3638, 16
        %v3745 = vrot.slane %v3743, 4
        %v3746 = vor.u32 %v3745, %v3741
        %v3747 = vrot.slane %v3746, 4
        %v3749 = vshll.u32 %v3639, 16
        %v3751 = vrot.slane %v3749, 5
        %v3752 = vsel %vm3648, %v3747, %v3751
        %v3753 = vshrl.u32 %v3639, 16
        %v3755 = vrot.slane %v3753, 4
        %v3756 = vor.u32 %v3755, %v3751
        %v3757 = vrot.slane %v3756, 4
        %v3759 = vshll.u32 %v3640, 16
        %v3761 = vrot.slane %v3759, 5
        %v3762 = vsel %vm3648, %v3757, %v3761
        %v3763 = vshrl.u32 %v3640, 16
        %v3765 = vrot.slane %v3763, 4
        %v3766 = vor.u32 %v3765, %v3761
        %v3767 = vrot.slane %v3766, 4
        %v3769 = vshll.u32 %v3641, 16
        %v3771 = vrot.slane %v3769, 5
        %v3772 = vsel %vm3648, %v3767, %v3771
        %v3773 = vshrl.u32 %v3641, 16
        %v3775 = vrot.slane %v3773, 4
        %v3776 = vor.u32 %v3775, %v3771
        %v3777 = vrot.slane %v3776, 4
        %v3779 = vshll.u32 %v3642, 16
        %v3781 = vrot.slane %v3779, 5
        %v3782 = vsel %vm3648, %v3777, %v3781
        %v3783 = vshrl.u32 %v3642, 16
        %v3785 = vrot.slane %v3783, 4
        %v3786 = vor.u32 %v3785, %v3781
        %v3787 = vrot.slane %v3786, 4
        %v3789 = vshll.u32 %v3643, 16
        %v3791 = vrot.slane %v3789, 5
        %v3792 = vsel %vm3648, %v3787, %v3791
        %v3793 = vshrl.u32 %v3643, 16
        %v3795 = vrot.slane %v3793, 4
        %v3796 = vor.u32 %v3795, %v3791
        %v3797 = vrot.slane %v3796, 4
        %v3799 = vshll.u32 %v3644, 16
        %v3801 = vrot.slane %v3799, 5
        %v3802 = vsel %vm3648, %v3797, %v3801
        %v3803 = vshrl.u32 %v3644, 16
        %v3805 = vrot.slane %v3803, 4
        %v3806 = vor.u32 %v3805, %v3801
        %v3807 = vrot.slane %v3806, 4
        %v3809 = vshll.u32 %v3645, 16
        %v3811 = vrot.slane %v3809, 5
        %v3812 = vsel %vm3648, %v3807, %v3811
        %3829 = vst [vmem:[#allocation4 + $0x14] sm:$0xf] %v3662
        %3830 = vst [vmem:[#allocation4 + $0x2c] sm:$0xf] %v3672
        %3831 = vst [vmem:[#allocation4 + $0x44] sm:$0xf] %v3682
        %3832 = vst [vmem:[#allocation4 + $0x5c] sm:$0xf] %v3692
        %3833 = vst [vmem:[#allocation4 + $0x74] sm:$0xf] %v3702
        %3834 = vst [vmem:[#allocation4 + $0x8c] sm:$0xf] %v3712
        %3835 = vst [vmem:[#allocation4 + $0xa4] sm:$0xf] %v3722
        %3836 = vst [vmem:[#allocation4 + $0xbc] sm:$0xf] %v3732
        %3837 = vst [vmem:[#allocation4 + $0xd4] sm:$0xf] %v3742
        %3838 = vst [vmem:[#allocation4 + $0xec] sm:$0xf] %v3752
        %3839 = vst [vmem:[#allocation4 + $0x104] sm:$0xf] %v3762
        %3840 = vst [vmem:[#allocation4 + $0x11c] sm:$0xf] %v3772
        %3841 = vst [vmem:[#allocation4 + $0x134] sm:$0xf] %v3782
        %3842 = vst [vmem:[#allocation4 + $0x14c] sm:$0xf] %v3792
        %3843 = vst [vmem:[#allocation4 + $0x164] sm:$0xf] %v3802
        %3844 = vst [vmem:[#allocation4 + $0x17c] sm:$0xf] %v3812
        %v3845 = vld [vmem:[#allocation4] sm:$0xff]
        %v3846 = vld [vmem:[#allocation4 + $0x8] sm:$0xff]
        %v3847 = vld [vmem:[#allocation4 + $0x10] sm:$0xff]
        %v3848 = vld [vmem:[#allocation4 + $0x18] sm:$0xff]
        %v3849 = vld [vmem:[#allocation4 + $0x20] sm:$0xff]
        %v3850 = vld [vmem:[#allocation4 + $0x28] sm:$0xff]
        %v3851 = vld [vmem:[#allocation4 + $0x30] sm:$0xff]
        %v3852 = vld [vmem:[#allocation4 + $0x38] sm:$0xff]
        %v3853 = vld [vmem:[#allocation4 + $0x40] sm:$0xff]
        %v3854 = vld [vmem:[#allocation4 + $0x48] sm:$0xff]
        %v3855 = vld [vmem:[#allocation4 + $0x50] sm:$0xff]
        %v3856 = vld [vmem:[#allocation4 + $0x58] sm:$0xff]
        %v3857 = vld [vmem:[#allocation4 + $0x60] sm:$0xff]
        %v3858 = vld [vmem:[#allocation4 + $0x68] sm:$0xff]
        %v3859 = vld [vmem:[#allocation4 + $0x70] sm:$0xff]
        %v3860 = vld [vmem:[#allocation4 + $0x78] sm:$0xff]
        %v3861 = vld [vmem:[#allocation4 + $0x80] sm:$0xff]
        %v3862 = vld [vmem:[#allocation4 + $0x88] sm:$0xff]
        %v3863 = vld [vmem:[#allocation4 + $0x90] sm:$0xff]
        %v3864 = vld [vmem:[#allocation4 + $0x98] sm:$0xff]
        %v3865 = vld [vmem:[#allocation4 + $0xa0] sm:$0xff]
        %v3866 = vld [vmem:[#allocation4 + $0xa8] sm:$0xff]
        %v3867 = vld [vmem:[#allocation4 + $0xb0] sm:$0xff]
        %v3868 = vld [vmem:[#allocation4 + $0xb8] sm:$0xff]
        %v3869 = vld [vmem:[#allocation4 + $0xc0] sm:$0xff]
        %v3870 = vld [vmem:[#allocation4 + $0xc8] sm:$0xff]
        %v3871 = vld [vmem:[#allocation4 + $0xd0] sm:$0xff]
        %v3872 = vld [vmem:[#allocation4 + $0xd8] sm:$0xff]
        %v3873 = vld [vmem:[#allocation4 + $0xe0] sm:$0xff]
        %v3874 = vld [vmem:[#allocation4 + $0xe8] sm:$0xff]
        %v3875 = vld [vmem:[#allocation4 + $0xf0] sm:$0xff]
        %v3876 = vld [vmem:[#allocation4 + $0xf8] sm:$0xff]
        %v3877 = vld [vmem:[#allocation4 + $0x100] sm:$0xff]
        %v3878 = vld [vmem:[#allocation4 + $0x108] sm:$0xff]
        %v3879 = vld [vmem:[#allocation4 + $0x110] sm:$0xff]
        %v3880 = vld [vmem:[#allocation4 + $0x118] sm:$0xff]
        %v3881 = vld [vmem:[#allocation4 + $0x120] sm:$0xff]
        %v3882 = vld [vmem:[#allocation4 + $0x128] sm:$0xff]
        %v3883 = vld [vmem:[#allocation4 + $0x130] sm:$0xff]
        %v3884 = vld [vmem:[#allocation4 + $0x138] sm:$0xff]
        %v3885 = vld [vmem:[#allocation4 + $0x140] sm:$0xff]
        %v3886 = vld [vmem:[#allocation4 + $0x148] sm:$0xff]
        %v3887 = vld [vmem:[#allocation4 + $0x150] sm:$0xff]
        %v3888 = vld [vmem:[#allocation4 + $0x158] sm:$0xff]
        %v3889 = vld [vmem:[#allocation4 + $0x160] sm:$0xff]
        %v3890 = vld [vmem:[#allocation4 + $0x168] sm:$0xff]
        %v3891 = vld [vmem:[#allocation4 + $0x170] sm:$0xff]
        %v3892 = vld [vmem:[#allocation4 + $0x178] sm:$0xff]
        %v3893 = vld [vmem:[#allocation17] sm:$0xf]
        %v3894 = vld [vmem:[#allocation17 + $0x4] sm:$0xf]
        %v3895 = vld [vmem:[#allocation17 + $0x8] sm:$0xf]
        %v3896 = vld [vmem:[#allocation17 + $0xc] sm:$0xf]
        %v3897 = vld [vmem:[#allocation17 + $0x10] sm:$0xf]
        %v3898 = vld [vmem:[#allocation17 + $0x14] sm:$0xf]
        %v3899 = vld [vmem:[#allocation17 + $0x18] sm:$0xf]
        %v3900 = vld [vmem:[#allocation17 + $0x1c] sm:$0xf]
        %v3901 = vld [vmem:[#allocation17 + $0x20] sm:$0xf]
        %v3902 = vld [vmem:[#allocation17 + $0x24] sm:$0xf]
        %v3903 = vld [vmem:[#allocation17 + $0x28] sm:$0xf]
        %v3904 = vld [vmem:[#allocation17 + $0x2c] sm:$0xf]
        %v3905 = vld [vmem:[#allocation17 + $0x30] sm:$0xf]
        %v3906 = vld [vmem:[#allocation17 + $0x34] sm:$0xf]
        %v3907 = vld [vmem:[#allocation17 + $0x38] sm:$0xf]
        %v3908 = vld [vmem:[#allocation17 + $0x3c] sm:$0xf]
        %v3909 = vld [vmem:[#allocation17 + $0x40] sm:$0xf]
        %v3910 = vld [vmem:[#allocation17 + $0x44] sm:$0xf]
        %v3911 = vld [vmem:[#allocation17 + $0x48] sm:$0xf]
        %v3912 = vld [vmem:[#allocation17 + $0x4c] sm:$0xf]
        %v3913 = vld [vmem:[#allocation17 + $0x50] sm:$0xf]
        %v3914 = vld [vmem:[#allocation17 + $0x54] sm:$0xf]
        %v3915 = vld [vmem:[#allocation17 + $0x58] sm:$0xf]
        %v3916 = vld [vmem:[#allocation17 + $0x5c] sm:$0xf]
        %v3917 = vld [vmem:[#allocation17 + $0x60] sm:$0xf]
        %v3918 = vld [vmem:[#allocation17 + $0x64] sm:$0xf]
        %v3919 = vld [vmem:[#allocation17 + $0x68] sm:$0xf]
        %v3920 = vld [vmem:[#allocation17 + $0x6c] sm:$0xf]
        %v3921 = vld [vmem:[#allocation17 + $0x70] sm:$0xf]
        %v3922 = vld [vmem:[#allocation17 + $0x74] sm:$0xf]
        %v3923 = vld [vmem:[#allocation17 + $0x78] sm:$0xf]
        %v3924 = vld [vmem:[#allocation17 + $0x7c] sm:$0xf]
        %v3925 = vld [vmem:[#allocation17 + $0x80] sm:$0xf]
        %v3926 = vld [vmem:[#allocation17 + $0x84] sm:$0xf]
        %v3927 = vld [vmem:[#allocation17 + $0x88] sm:$0xf]
        %v3928 = vld [vmem:[#allocation17 + $0x8c] sm:$0xf]
        %v3929 = vld [vmem:[#allocation17 + $0x90] sm:$0xf]
        %v3930 = vld [vmem:[#allocation17 + $0x94] sm:$0xf]
        %v3931 = vld [vmem:[#allocation17 + $0x98] sm:$0xf]
        %v3932 = vld [vmem:[#allocation17 + $0x9c] sm:$0xf]
        %v3933 = vld [vmem:[#allocation17 + $0xa0] sm:$0xf]
        %v3934 = vld [vmem:[#allocation17 + $0xa4] sm:$0xf]
        %v3935 = vld [vmem:[#allocation17 + $0xa8] sm:$0xf]
        %v3936 = vld [vmem:[#allocation17 + $0xac] sm:$0xf]
        %v3937 = vld [vmem:[#allocation17 + $0xb0] sm:$0xf]
        %v3938 = vld [vmem:[#allocation17 + $0xb4] sm:$0xf]
        %v3939 = vld [vmem:[#allocation17 + $0xb8] sm:$0xf]
        %v3940 = vld [vmem:[#allocation17 + $0xbc] sm:$0xf]
        %v3941 = vld [vmem:[#allocation17 + $0xc0] sm:$0xf]
        %v3942 = vld [vmem:[#allocation17 + $0xc4] sm:$0xf]
        %v3943 = vld [vmem:[#allocation17 + $0xc8] sm:$0xf]
        %v3944 = vld [vmem:[#allocation17 + $0xcc] sm:$0xf]
        %v3945 = vld [vmem:[#allocation17 + $0xd0] sm:$0xf]
        %v3946 = vld [vmem:[#allocation17 + $0xd4] sm:$0xf]
        %v3947 = vld [vmem:[#allocation17 + $0xd8] sm:$0xf]
        %v3948 = vld [vmem:[#allocation17 + $0xdc] sm:$0xf]
        %v3949 = vld [vmem:[#allocation17 + $0xe0] sm:$0xf]
        %v3950 = vld [vmem:[#allocation17 + $0xe4] sm:$0xf]
        %v3951 = vld [vmem:[#allocation17 + $0xe8] sm:$0xf]
        %v3952 = vld [vmem:[#allocation17 + $0xec] sm:$0xf]
        %v3953 = vld [vmem:[#allocation17 + $0xf0] sm:$0xf]
        %v3954 = vld [vmem:[#allocation17 + $0xf4] sm:$0xf]
        %v3955 = vld [vmem:[#allocation17 + $0xf8] sm:$0xf]
        %v3956 = vld [vmem:[#allocation17 + $0xfc] sm:$0xf]
        %v3957 = vld [vmem:[#allocation17 + $0x100] sm:$0xf]
        %v3958 = vld [vmem:[#allocation17 + $0x104] sm:$0xf]
        %v3959 = vld [vmem:[#allocation17 + $0x108] sm:$0xf]
        %v3960 = vld [vmem:[#allocation17 + $0x10c] sm:$0xf]
        %v3961 = vld [vmem:[#allocation17 + $0x110] sm:$0xf]
        %v3962 = vld [vmem:[#allocation17 + $0x114] sm:$0xf]
        %v3963 = vld [vmem:[#allocation17 + $0x118] sm:$0xf]
        %v3964 = vld [vmem:[#allocation17 + $0x11c] sm:$0xf]
        %v3965 = vld [vmem:[#allocation17 + $0x120] sm:$0xf]
        %v3966 = vld [vmem:[#allocation17 + $0x124] sm:$0xf]
        %v3967 = vld [vmem:[#allocation17 + $0x128] sm:$0xf]
        %v3968 = vld [vmem:[#allocation17 + $0x12c] sm:$0xf]
        %v3969 = vld [vmem:[#allocation17 + $0x130] sm:$0xf]
        %v3970 = vld [vmem:[#allocation17 + $0x134] sm:$0xf]
        %v3971 = vld [vmem:[#allocation17 + $0x138] sm:$0xf]
        %v3972 = vld [vmem:[#allocation17 + $0x13c] sm:$0xf]
        %v3973 = vld [vmem:[#allocation17 + $0x140] sm:$0xf]
        %v3974 = vld [vmem:[#allocation17 + $0x144] sm:$0xf]
        %v3975 = vld [vmem:[#allocation17 + $0x148] sm:$0xf]
        %v3976 = vld [vmem:[#allocation17 + $0x14c] sm:$0xf]
        %v3977 = vld [vmem:[#allocation17 + $0x150] sm:$0xf]
        %v3978 = vld [vmem:[#allocation17 + $0x154] sm:$0xf]
        %v3979 = vld [vmem:[#allocation17 + $0x158] sm:$0xf]
        %v3980 = vld [vmem:[#allocation17 + $0x15c] sm:$0xf]
        %v3981 = vld [vmem:[#allocation17 + $0x160] sm:$0xf]
        %v3982 = vld [vmem:[#allocation17 + $0x164] sm:$0xf]
        %v3983 = vld [vmem:[#allocation17 + $0x168] sm:$0xf]
        %v3984 = vld [vmem:[#allocation17 + $0x16c] sm:$0xf]
        %v3985 = vld [vmem:[#allocation17 + $0x170] sm:$0xf]
        %v3986 = vld [vmem:[#allocation17 + $0x174] sm:$0xf]
        %v3987 = vld [vmem:[#allocation17 + $0x178] sm:$0xf]
        %v3988 = vld [vmem:[#allocation17 + $0x17c] sm:$0xf]
        %v3989 = vld [vmem:[#allocation3] sm:$0xf]
        %v3990 = vld [vmem:[#allocation3 + $0x4] sm:$0xf]
        %v3991 = vld [vmem:[#allocation3 + $0x8] sm:$0xf]
        %v3992 = vld [vmem:[#allocation3 + $0xc] sm:$0xf]
        %v3993 = vld [vmem:[#allocation3 + $0x10] sm:$0xf]
        %v3994 = vld [vmem:[#allocation3 + $0x14] sm:$0xf]
        %v3995 = vld [vmem:[#allocation3 + $0x18] sm:$0xf]
        %v3996 = vld [vmem:[#allocation3 + $0x1c] sm:$0xf]
        %v3997 = vld [vmem:[#allocation3 + $0x20] sm:$0xf]
        %v3998 = vld [vmem:[#allocation3 + $0x24] sm:$0xf]
        %v3999 = vld [vmem:[#allocation3 + $0x28] sm:$0xf]
        %v4000 = vld [vmem:[#allocation3 + $0x2c] sm:$0xf]
        %v4001 = vld [vmem:[#allocation3 + $0x30] sm:$0xf]
        %v4002 = vld [vmem:[#allocation3 + $0x34] sm:$0xf]
        %v4003 = vld [vmem:[#allocation3 + $0x38] sm:$0xf]
        %v4004 = vld [vmem:[#allocation3 + $0x3c] sm:$0xf]
        %v4005 = vunpack.c.l.bf16 %v3989
        %v4006 = vunpack.c.l.bf16 %v3990
        %v4007 = vunpack.c.l.bf16 %v3991
        %v4008 = vunpack.c.l.bf16 %v3992
        %v4009 = vunpack.c.l.bf16 %v3993
        %v4010 = vunpack.c.l.bf16 %v3994
        %v4011 = vunpack.c.l.bf16 %v3995
        %v4012 = vunpack.c.l.bf16 %v3996
        %v4013 = vunpack.c.l.bf16 %v3997
        %v4014 = vunpack.c.l.bf16 %v3998
        %v4015 = vunpack.c.l.bf16 %v3999
        %v4016 = vunpack.c.l.bf16 %v4000
        %v4017 = vunpack.c.l.bf16 %v4001
        %v4018 = vunpack.c.l.bf16 %v4002
        %v4019 = vunpack.c.l.bf16 %v4003
        %v4020 = vunpack.c.l.bf16 %v4004
        %v4069 = vunpack.c.l.b16 %v3845
        %v4070 = vunpack.c.h.b16 %v3845
        %v4071 = vunpack.c.l.b16 %v3846
        %v4072 = vunpack.c.h.b16 %v3846
        %v4073 = vunpack.c.l.b16 %v3847
        %v4074 = vunpack.c.h.b16 %v3847
        %v4075 = vunpack.c.l.b16 %v3848
        %v4076 = vunpack.c.h.b16 %v3848
        %v4077 = vunpack.c.l.b16 %v3849
        %v4078 = vunpack.c.h.b16 %v3849
        %v4079 = vunpack.c.l.b16 %v3850
        %v4080 = vunpack.c.h.b16 %v3850
        %v4081 = vunpack.c.l.b16 %v3851
        %v4082 = vunpack.c.h.b16 %v3851
        %v4083 = vunpack.c.l.b16 %v3852
        %v4084 = vunpack.c.h.b16 %v3852
        %v4085 = vunpack.c.l.b16 %v3853
        %v4086 = vunpack.c.h.b16 %v3853
        %v4087 = vunpack.c.l.b16 %v3854
        %v4088 = vunpack.c.h.b16 %v3854
        %v4089 = vunpack.c.l.b16 %v3855
        %v4090 = vunpack.c.h.b16 %v3855
        %v4091 = vunpack.c.l.b16 %v3856
        %v4092 = vunpack.c.h.b16 %v3856
        %v4093 = vunpack.c.l.b16 %v3857
        %v4094 = vunpack.c.h.b16 %v3857
        %v4095 = vunpack.c.l.b16 %v3858
        %v4096 = vunpack.c.h.b16 %v3858
        %v4097 = vunpack.c.l.b16 %v3859
        %v4098 = vunpack.c.h.b16 %v3859
        %v4099 = vunpack.c.l.b16 %v3860
        %v4100 = vunpack.c.h.b16 %v3860
        %v4101 = vunpack.c.l.b16 %v3861
        %v4102 = vunpack.c.h.b16 %v3861
        %v4103 = vunpack.c.l.b16 %v3862
        %v4104 = vunpack.c.h.b16 %v3862
        %v4105 = vunpack.c.l.b16 %v3863
        %v4106 = vunpack.c.h.b16 %v3863
        %v4107 = vunpack.c.l.b16 %v3864
        %v4108 = vunpack.c.h.b16 %v3864
        %v4109 = vunpack.c.l.b16 %v3865
        %v4110 = vunpack.c.h.b16 %v3865
        %v4111 = vunpack.c.l.b16 %v3866
        %v4112 = vunpack.c.h.b16 %v3866
        %v4113 = vunpack.c.l.b16 %v3867
        %v4114 = vunpack.c.h.b16 %v3867
        %v4115 = vunpack.c.l.b16 %v3868
        %v4116 = vunpack.c.h.b16 %v3868
        %v4117 = vunpack.c.l.b16 %v3869
        %v4118 = vunpack.c.h.b16 %v3869
        %v4119 = vunpack.c.l.b16 %v3870
        %v4120 = vunpack.c.h.b16 %v3870
        %v4121 = vunpack.c.l.b16 %v3871
        %v4122 = vunpack.c.h.b16 %v3871
        %v4123 = vunpack.c.l.b16 %v3872
        %v4124 = vunpack.c.h.b16 %v3872
        %v4125 = vunpack.c.l.b16 %v3873
        %v4126 = vunpack.c.h.b16 %v3873
        %v4127 = vunpack.c.l.b16 %v3874
        %v4128 = vunpack.c.h.b16 %v3874
        %v4129 = vunpack.c.l.b16 %v3875
        %v4130 = vunpack.c.h.b16 %v3875
        %v4131 = vunpack.c.l.b16 %v3876
        %v4132 = vunpack.c.h.b16 %v3876
        %v4133 = vunpack.c.l.b16 %v3877
        %v4134 = vunpack.c.h.b16 %v3877
        %v4135 = vunpack.c.l.b16 %v3878
        %v4136 = vunpack.c.h.b16 %v3878
        %v4137 = vunpack.c.l.b16 %v3879
        %v4138 = vunpack.c.h.b16 %v3879
        %v4139 = vunpack.c.l.b16 %v3880
        %v4140 = vunpack.c.h.b16 %v3880
        %v4141 = vunpack.c.l.b16 %v3881
        %v4142 = vunpack.c.h.b16 %v3881
        %v4143 = vunpack.c.l.b16 %v3882
        %v4144 = vunpack.c.h.b16 %v3882
        %v4145 = vunpack.c.l.b16 %v3883
        %v4146 = vunpack.c.h.b16 %v3883
        %v4147 = vunpack.c.l.b16 %v3884
        %v4148 = vunpack.c.h.b16 %v3884
        %v4149 = vunpack.c.l.b16 %v3885
        %v4150 = vunpack.c.h.b16 %v3885
        %v4151 = vunpack.c.l.b16 %v3886
        %v4152 = vunpack.c.h.b16 %v3886
        %v4153 = vunpack.c.l.b16 %v3887
        %v4154 = vunpack.c.h.b16 %v3887
        %v4155 = vunpack.c.l.b16 %v3888
        %v4156 = vunpack.c.h.b16 %v3888
        %v4157 = vunpack.c.l.b16 %v3889
        %v4158 = vunpack.c.h.b16 %v3889
        %v4159 = vunpack.c.l.b16 %v3890
        %v4160 = vunpack.c.h.b16 %v3890
        %v4161 = vunpack.c.l.b16 %v3891
        %v4162 = vunpack.c.h.b16 %v3891
        %v4163 = vunpack.c.l.b16 %v3892
        %v4164 = vunpack.c.h.b16 %v3892
        %v4165 = vpack.c.b16 %v4075, %v4069
        %v4166 = vpack.c.b16 %v4076, %v4070
        %v4167 = vpack.c.b16 %v4077, %v4071
        %v4168 = vpack.c.b16 %v4078, %v4072
        %v4169 = vpack.c.b16 %v4079, %v4073
        %v4170 = vpack.c.b16 %v4080, %v4074
        %v4171 = vpack.c.b16 %v4087, %v4081
        %v4172 = vpack.c.b16 %v4088, %v4082
        %v4173 = vpack.c.b16 %v4089, %v4083
        %v4174 = vpack.c.b16 %v4090, %v4084
        %v4175 = vpack.c.b16 %v4091, %v4085
        %v4176 = vpack.c.b16 %v4092, %v4086
        %v4177 = vpack.c.b16 %v4099, %v4093
        %v4178 = vpack.c.b16 %v4100, %v4094
        %v4179 = vpack.c.b16 %v4101, %v4095
        %v4180 = vpack.c.b16 %v4102, %v4096
        %v4181 = vpack.c.b16 %v4103, %v4097
        %v4182 = vpack.c.b16 %v4104, %v4098
        %v4183 = vpack.c.b16 %v4111, %v4105
        %v4184 = vpack.c.b16 %v4112, %v4106
        %v4185 = vpack.c.b16 %v4113, %v4107
        %v4186 = vpack.c.b16 %v4114, %v4108
        %v4187 = vpack.c.b16 %v4115, %v4109
        %v4188 = vpack.c.b16 %v4116, %v4110
        %v4189 = vpack.c.b16 %v4123, %v4117
        %v4190 = vpack.c.b16 %v4124, %v4118
        %v4191 = vpack.c.b16 %v4125, %v4119
        %v4192 = vpack.c.b16 %v4126, %v4120
        %v4193 = vpack.c.b16 %v4127, %v4121
        %v4194 = vpack.c.b16 %v4128, %v4122
        %v4195 = vpack.c.b16 %v4135, %v4129
        %v4196 = vpack.c.b16 %v4136, %v4130
        %v4197 = vpack.c.b16 %v4137, %v4131
        %v4198 = vpack.c.b16 %v4138, %v4132
        %v4199 = vpack.c.b16 %v4139, %v4133
        %v4200 = vpack.c.b16 %v4140, %v4134
        %v4201 = vpack.c.b16 %v4147, %v4141
        %v4202 = vpack.c.b16 %v4148, %v4142
        %v4203 = vpack.c.b16 %v4149, %v4143
        %v4204 = vpack.c.b16 %v4150, %v4144
        %v4205 = vpack.c.b16 %v4151, %v4145
        %v4206 = vpack.c.b16 %v4152, %v4146
        %v4207 = vpack.c.b16 %v4159, %v4153
        %v4208 = vpack.c.b16 %v4160, %v4154
        %v4209 = vpack.c.b16 %v4161, %v4155
        %v4210 = vpack.c.b16 %v4162, %v4156
        %v4211 = vpack.c.b16 %v4163, %v4157
        %v4212 = vpack.c.b16 %v4164, %v4158
        %v4357 = vunpack.c.l.b16 %v3893
        %v4358 = vunpack.c.l.b16 %v3894
        %v4359 = vunpack.c.l.b16 %v3895
        %v4360 = vunpack.c.l.b16 %v3896
        %v4361 = vunpack.c.l.b16 %v3897
        %v4362 = vunpack.c.l.b16 %v3898
        %v4363 = vunpack.c.l.b16 %v3899
        %v4364 = vunpack.c.l.b16 %v3900
        %v4365 = vunpack.c.l.b16 %v3901
        %v4366 = vunpack.c.l.b16 %v3902
        %v4367 = vunpack.c.l.b16 %v3903
        %v4368 = vunpack.c.l.b16 %v3904
        %v4369 = vunpack.c.l.b16 %v3905
        %v4370 = vunpack.c.l.b16 %v3906
        %v4371 = vunpack.c.l.b16 %v3907
        %v4372 = vunpack.c.l.b16 %v3908
        %v4373 = vunpack.c.l.b16 %v3909
        %v4374 = vunpack.c.l.b16 %v3910
        %v4375 = vunpack.c.l.b16 %v3911
        %v4376 = vunpack.c.l.b16 %v3912
        %v4377 = vunpack.c.l.b16 %v3913
        %v4378 = vunpack.c.l.b16 %v3914
        %v4379 = vunpack.c.l.b16 %v3915
        %v4380 = vunpack.c.l.b16 %v3916
        %v4381 = vunpack.c.l.b16 %v3917
        %v4382 = vunpack.c.l.b16 %v3918
        %v4383 = vunpack.c.l.b16 %v3919
        %v4384 = vunpack.c.l.b16 %v3920
        %v4385 = vunpack.c.l.b16 %v3921
        %v4386 = vunpack.c.l.b16 %v3922
        %v4387 = vunpack.c.l.b16 %v3923
        %v4388 = vunpack.c.l.b16 %v3924
        %v4389 = vunpack.c.l.b16 %v3925
        %v4390 = vunpack.c.l.b16 %v3926
        %v4391 = vunpack.c.l.b16 %v3927
        %v4392 = vunpack.c.l.b16 %v3928
        %v4393 = vunpack.c.l.b16 %v3929
        %v4394 = vunpack.c.l.b16 %v3930
        %v4395 = vunpack.c.l.b16 %v3931
        %v4396 = vunpack.c.l.b16 %v3932
        %v4397 = vunpack.c.l.b16 %v3933
        %v4398 = vunpack.c.l.b16 %v3934
        %v4399 = vunpack.c.l.b16 %v3935
        %v4400 = vunpack.c.l.b16 %v3936
        %v4401 = vunpack.c.l.b16 %v3937
        %v4402 = vunpack.c.l.b16 %v3938
        %v4403 = vunpack.c.l.b16 %v3939
        %v4404 = vunpack.c.l.b16 %v3940
        %v4405 = vunpack.c.l.b16 %v3941
        %v4406 = vunpack.c.l.b16 %v3942
        %v4407 = vunpack.c.l.b16 %v3943
        %v4408 = vunpack.c.l.b16 %v3944
        %v4409 = vunpack.c.l.b16 %v3945
        %v4410 = vunpack.c.l.b16 %v3946
        %v4411 = vunpack.c.l.b16 %v3947
        %v4412 = vunpack.c.l.b16 %v3948
        %v4413 = vunpack.c.l.b16 %v3949
        %v4414 = vunpack.c.l.b16 %v3950
        %v4415 = vunpack.c.l.b16 %v3951
        %v4416 = vunpack.c.l.b16 %v3952
        %v4417 = vunpack.c.l.b16 %v3953
        %v4418 = vunpack.c.l.b16 %v3954
        %v4419 = vunpack.c.l.b16 %v3955
        %v4420 = vunpack.c.l.b16 %v3956
        %v4421 = vunpack.c.l.b16 %v3957
        %v4422 = vunpack.c.l.b16 %v3958
        %v4423 = vunpack.c.l.b16 %v3959
        %v4424 = vunpack.c.l.b16 %v3960
        %v4425 = vunpack.c.l.b16 %v3961
        %v4426 = vunpack.c.l.b16 %v3962
        %v4427 = vunpack.c.l.b16 %v3963
        %v4428 = vunpack.c.l.b16 %v3964
        %v4429 = vunpack.c.l.b16 %v3965
        %v4430 = vunpack.c.l.b16 %v3966
        %v4431 = vunpack.c.l.b16 %v3967
        %v4432 = vunpack.c.l.b16 %v3968
        %v4433 = vunpack.c.l.b16 %v3969
        %v4434 = vunpack.c.l.b16 %v3970
        %v4435 = vunpack.c.l.b16 %v3971
        %v4436 = vunpack.c.l.b16 %v3972
        %v4437 = vunpack.c.l.b16 %v3973
        %v4438 = vunpack.c.l.b16 %v3974
        %v4439 = vunpack.c.l.b16 %v3975
        %v4440 = vunpack.c.l.b16 %v3976
        %v4441 = vunpack.c.l.b16 %v3977
        %v4442 = vunpack.c.l.b16 %v3978
        %v4443 = vunpack.c.l.b16 %v3979
        %v4444 = vunpack.c.l.b16 %v3980
        %v4445 = vunpack.c.l.b16 %v3981
        %v4446 = vunpack.c.l.b16 %v3982
        %v4447 = vunpack.c.l.b16 %v3983
        %v4448 = vunpack.c.l.b16 %v3984
        %v4449 = vunpack.c.l.b16 %v3985
        %v4450 = vunpack.c.l.b16 %v3986
        %v4451 = vunpack.c.l.b16 %v3987
        %v4452 = vunpack.c.l.b16 %v3988
        %v4453 = vpack.c.b16 %v4358, %v4357
        %v4454 = vpack.c.b16 %v4360, %v4359
        %v4455 = vpack.c.b16 %v4362, %v4361
        %v4456 = vpack.c.b16 %v4364, %v4363
        %v4457 = vpack.c.b16 %v4366, %v4365
        %v4458 = vpack.c.b16 %v4368, %v4367
        %v4459 = vpack.c.b16 %v4370, %v4369
        %v4460 = vpack.c.b16 %v4372, %v4371
        %v4461 = vpack.c.b16 %v4374, %v4373
        %v4462 = vpack.c.b16 %v4376, %v4375
        %v4463 = vpack.c.b16 %v4378, %v4377
        %v4464 = vpack.c.b16 %v4380, %v4379
        %v4465 = vpack.c.b16 %v4382, %v4381
        %v4466 = vpack.c.b16 %v4384, %v4383
        %v4467 = vpack.c.b16 %v4386, %v4385
        %v4468 = vpack.c.b16 %v4388, %v4387
        %v4469 = vpack.c.b16 %v4390, %v4389
        %v4470 = vpack.c.b16 %v4392, %v4391
        %v4471 = vpack.c.b16 %v4394, %v4393
        %v4472 = vpack.c.b16 %v4396, %v4395
        %v4473 = vpack.c.b16 %v4398, %v4397
        %v4474 = vpack.c.b16 %v4400, %v4399
        %v4475 = vpack.c.b16 %v4402, %v4401
        %v4476 = vpack.c.b16 %v4404, %v4403
        %v4477 = vpack.c.b16 %v4406, %v4405
        %v4478 = vpack.c.b16 %v4408, %v4407
        %v4479 = vpack.c.b16 %v4410, %v4409
        %v4480 = vpack.c.b16 %v4412, %v4411
        %v4481 = vpack.c.b16 %v4414, %v4413
        %v4482 = vpack.c.b16 %v4416, %v4415
        %v4483 = vpack.c.b16 %v4418, %v4417
        %v4484 = vpack.c.b16 %v4420, %v4419
        %v4485 = vpack.c.b16 %v4422, %v4421
        %v4486 = vpack.c.b16 %v4424, %v4423
        %v4487 = vpack.c.b16 %v4426, %v4425
        %v4488 = vpack.c.b16 %v4428, %v4427
        %v4489 = vpack.c.b16 %v4430, %v4429
        %v4490 = vpack.c.b16 %v4432, %v4431
        %v4491 = vpack.c.b16 %v4434, %v4433
        %v4492 = vpack.c.b16 %v4436, %v4435
        %v4493 = vpack.c.b16 %v4438, %v4437
        %v4494 = vpack.c.b16 %v4440, %v4439
        %v4495 = vpack.c.b16 %v4442, %v4441
        %v4496 = vpack.c.b16 %v4444, %v4443
        %v4497 = vpack.c.b16 %v4446, %v4445
        %v4498 = vpack.c.b16 %v4448, %v4447
        %v4499 = vpack.c.b16 %v4450, %v4449
        %v4500 = vpack.c.b16 %v4452, %v4451
        %4549 = vmatpush.bf16.msra.mxu0 %v4460
        %4550 = vmatpush.bf16.msra.mxu0 %v4459
        %4551 = vmatpush.bf16.msra.mxu0 %v4458
        %4552 = vmatpush.bf16.msra.mxu0 %v4457
        %4553 = vmatpush.bf16.msra.mxu0 %v4456
        %4554 = vmatpush.bf16.msra.mxu0 %v4455
        %4555 = vmatpush.bf16.msra.mxu0 %v4454
        %4556 = vmatpush.bf16.msra.mxu0 %v4453
        %4557 = vmatmul.bf16.gmra.mxu0 %v4165
        %v4558 = vpop.f32.mrf.mxu0
        %v4559 = vadd.f32 %v4005, %v4558
        %v4560 = vpop.f32.mrf.mxu0
        %v4561 = vadd.f32 %v4006, %v4560
        %4562 = vmatmul.bf16.gmra.mxu0 %v4171
        %v4563 = vpop.f32.mrf.mxu0
        %v4564 = vadd.f32 %v4007, %v4563
        %v4565 = vpop.f32.mrf.mxu0
        %v4566 = vadd.f32 %v4008, %v4565
        %4567 = vmatmul.bf16.gmra.mxu0 %v4177
        %v4568 = vpop.f32.mrf.mxu0
        %v4569 = vadd.f32 %v4009, %v4568
        %v4570 = vpop.f32.mrf.mxu0
        %v4571 = vadd.f32 %v4010, %v4570
        %4572 = vmatmul.bf16.gmra.mxu0 %v4183
        %v4573 = vpop.f32.mrf.mxu0
        %v4574 = vadd.f32 %v4011, %v4573
        %v4575 = vpop.f32.mrf.mxu0
        %v4576 = vadd.f32 %v4012, %v4575
        %4577 = vmatmul.bf16.gmra.mxu0 %v4189
        %v4578 = vpop.f32.mrf.mxu0
        %v4579 = vadd.f32 %v4013, %v4578
        %v4580 = vpop.f32.mrf.mxu0
        %v4581 = vadd.f32 %v4014, %v4580
        %4582 = vmatmul.bf16.gmra.mxu0 %v4195
        %v4583 = vpop.f32.mrf.mxu0
        %v4584 = vadd.f32 %v4015, %v4583
        %v4585 = vpop.f32.mrf.mxu0
        %v4586 = vadd.f32 %v4016, %v4585
        %4587 = vmatmul.bf16.gmra.mxu0 %v4201
        %v4588 = vpop.f32.mrf.mxu0
        %v4589 = vadd.f32 %v4017, %v4588
        %v4590 = vpop.f32.mrf.mxu0
        %v4591 = vadd.f32 %v4018, %v4590
        %4592 = vmatmul.bf16.gmra.mxu0 %v4207
        %v4593 = vpop.f32.mrf.mxu0
        %v4594 = vadd.f32 %v4019, %v4593
        %v4595 = vpop.f32.mrf.mxu0
        %v4596 = vadd.f32 %v4020, %v4595
        %4597 = vdwg.mxu0
        %4598 = vmatpush.bf16.msra.mxu0 %v4468
        %4599 = vmatpush.bf16.msra.mxu0 %v4467
        %4600 = vmatpush.bf16.msra.mxu0 %v4466
        %4601 = vmatpush.bf16.msra.mxu0 %v4465
        %4602 = vmatpush.bf16.msra.mxu0 %v4464
        %4603 = vmatpush.bf16.msra.mxu0 %v4463
        %4604 = vmatpush.bf16.msra.mxu0 %v4462
        %4605 = vmatpush.bf16.msra.mxu0 %v4461
        %4606 = vmatmul.bf16.gmra.mxu0 %v4166
        %v4607 = vpop.f32.mrf.mxu0
        %v4608 = vadd.f32 %v4559, %v4607
        %v4609 = vpop.f32.mrf.mxu0
        %v4610 = vadd.f32 %v4561, %v4609
        %4611 = vmatmul.bf16.gmra.mxu0 %v4172
        %v4612 = vpop.f32.mrf.mxu0
        %v4613 = vadd.f32 %v4564, %v4612
        %v4614 = vpop.f32.mrf.mxu0
        %v4615 = vadd.f32 %v4566, %v4614
        %4616 = vmatmul.bf16.gmra.mxu0 %v4178
        %v4617 = vpop.f32.mrf.mxu0
        %v4618 = vadd.f32 %v4569, %v4617
        %v4619 = vpop.f32.mrf.mxu0
        %v4620 = vadd.f32 %v4571, %v4619
        %4621 = vmatmul.bf16.gmra.mxu0 %v4184
        %v4622 = vpop.f32.mrf.mxu0
        %v4623 = vadd.f32 %v4574, %v4622
        %v4624 = vpop.f32.mrf.mxu0
        %v4625 = vadd.f32 %v4576, %v4624
        %4626 = vmatmul.bf16.gmra.mxu0 %v4190
        %v4627 = vpop.f32.mrf.mxu0
        %v4628 = vadd.f32 %v4579, %v4627
        %v4629 = vpop.f32.mrf.mxu0
        %v4630 = vadd.f32 %v4581, %v4629
        %4631 = vmatmul.bf16.gmra.mxu0 %v4196
        %v4632 = vpop.f32.mrf.mxu0
        %v4633 = vadd.f32 %v4584, %v4632
        %v4634 = vpop.f32.mrf.mxu0
        %v4635 = vadd.f32 %v4586, %v4634
        %4636 = vmatmul.bf16.gmra.mxu0 %v4202
        %v4637 = vpop.f32.mrf.mxu0
        %v4638 = vadd.f32 %v4589, %v4637
        %v4639 = vpop.f32.mrf.mxu0
        %v4640 = vadd.f32 %v4591, %v4639
        %4641 = vmatmul.bf16.gmra.mxu0 %v4208
        %v4642 = vpop.f32.mrf.mxu0
        %v4643 = vadd.f32 %v4594, %v4642
        %v4644 = vpop.f32.mrf.mxu0
        %v4645 = vadd.f32 %v4596, %v4644
        %4646 = vdwg.mxu0
        %4647 = vmatpush.bf16.msra.mxu0 %v4476
        %4648 = vmatpush.bf16.msra.mxu0 %v4475
        %4649 = vmatpush.bf16.msra.mxu0 %v4474
        %4650 = vmatpush.bf16.msra.mxu0 %v4473
        %4651 = vmatpush.bf16.msra.mxu0 %v4472
        %4652 = vmatpush.bf16.msra.mxu0 %v4471
        %4653 = vmatpush.bf16.msra.mxu0 %v4470
        %4654 = vmatpush.bf16.msra.mxu0 %v4469
        %4655 = vmatmul.bf16.gmra.mxu0 %v4167
        %v4656 = vpop.f32.mrf.mxu0
        %v4657 = vadd.f32 %v4608, %v4656
        %v4658 = vpop.f32.mrf.mxu0
        %v4659 = vadd.f32 %v4610, %v4658
        %4660 = vmatmul.bf16.gmra.mxu0 %v4173
        %v4661 = vpop.f32.mrf.mxu0
        %v4662 = vadd.f32 %v4613, %v4661
        %v4663 = vpop.f32.mrf.mxu0
        %v4664 = vadd.f32 %v4615, %v4663
        %4665 = vmatmul.bf16.gmra.mxu0 %v4179
        %v4666 = vpop.f32.mrf.mxu0
        %v4667 = vadd.f32 %v4618, %v4666
        %v4668 = vpop.f32.mrf.mxu0
        %v4669 = vadd.f32 %v4620, %v4668
        %4670 = vmatmul.bf16.gmra.mxu0 %v4185
        %v4671 = vpop.f32.mrf.mxu0
        %v4672 = vadd.f32 %v4623, %v4671
        %v4673 = vpop.f32.mrf.mxu0
        %v4674 = vadd.f32 %v4625, %v4673
        %4675 = vmatmul.bf16.gmra.mxu0 %v4191
        %v4676 = vpop.f32.mrf.mxu0
        %v4677 = vadd.f32 %v4628, %v4676
        %v4678 = vpop.f32.mrf.mxu0
        %v4679 = vadd.f32 %v4630, %v4678
        %4680 = vmatmul.bf16.gmra.mxu0 %v4197
        %v4681 = vpop.f32.mrf.mxu0
        %v4682 = vadd.f32 %v4633, %v4681
        %v4683 = vpop.f32.mrf.mxu0
        %v4684 = vadd.f32 %v4635, %v4683
        %4685 = vmatmul.bf16.gmra.mxu0 %v4203
        %v4686 = vpop.f32.mrf.mxu0
        %v4687 = vadd.f32 %v4638, %v4686
        %v4688 = vpop.f32.mrf.mxu0
        %v4689 = vadd.f32 %v4640, %v4688
        %4690 = vmatmul.bf16.gmra.mxu0 %v4209
        %v4691 = vpop.f32.mrf.mxu0
        %v4692 = vadd.f32 %v4643, %v4691
        %v4693 = vpop.f32.mrf.mxu0
        %v4694 = vadd.f32 %v4645, %v4693
        %4695 = vdwg.mxu0
        %4696 = vmatpush.bf16.msra.mxu0 %v4484
        %4697 = vmatpush.bf16.msra.mxu0 %v4483
        %4698 = vmatpush.bf16.msra.mxu0 %v4482
        %4699 = vmatpush.bf16.msra.mxu0 %v4481
        %4700 = vmatpush.bf16.msra.mxu0 %v4480
        %4701 = vmatpush.bf16.msra.mxu0 %v4479
        %4702 = vmatpush.bf16.msra.mxu0 %v4478
        %4703 = vmatpush.bf16.msra.mxu0 %v4477
        %4704 = vmatmul.bf16.gmra.mxu0 %v4168
        %v4705 = vpop.f32.mrf.mxu0
        %v4706 = vadd.f32 %v4657, %v4705
        %v4707 = vpop.f32.mrf.mxu0
        %v4708 = vadd.f32 %v4659, %v4707
        %4709 = vmatmul.bf16.gmra.mxu0 %v4174
        %v4710 = vpop.f32.mrf.mxu0
        %v4711 = vadd.f32 %v4662, %v4710
        %v4712 = vpop.f32.mrf.mxu0
        %v4713 = vadd.f32 %v4664, %v4712
        %4714 = vmatmul.bf16.gmra.mxu0 %v4180
        %v4715 = vpop.f32.mrf.mxu0
        %v4716 = vadd.f32 %v4667, %v4715
        %v4717 = vpop.f32.mrf.mxu0
        %v4718 = vadd.f32 %v4669, %v4717
        %4719 = vmatmul.bf16.gmra.mxu0 %v4186
        %v4720 = vpop.f32.mrf.mxu0
        %v4721 = vadd.f32 %v4672, %v4720
        %v4722 = vpop.f32.mrf.mxu0
        %v4723 = vadd.f32 %v4674, %v4722
        %4724 = vmatmul.bf16.gmra.mxu0 %v4192
        %v4725 = vpop.f32.mrf.mxu0
        %v4726 = vadd.f32 %v4677, %v4725
        %v4727 = vpop.f32.mrf.mxu0
        %v4728 = vadd.f32 %v4679, %v4727
        %4729 = vmatmul.bf16.gmra.mxu0 %v4198
        %v4730 = vpop.f32.mrf.mxu0
        %v4731 = vadd.f32 %v4682, %v4730
        %v4732 = vpop.f32.mrf.mxu0
        %v4733 = vadd.f32 %v4684, %v4732
        %4734 = vmatmul.bf16.gmra.mxu0 %v4204
        %v4735 = vpop.f32.mrf.mxu0
        %v4736 = vadd.f32 %v4687, %v4735
        %v4737 = vpop.f32.mrf.mxu0
        %v4738 = vadd.f32 %v4689, %v4737
        %4739 = vmatmul.bf16.gmra.mxu0 %v4210
        %v4740 = vpop.f32.mrf.mxu0
        %v4741 = vadd.f32 %v4692, %v4740
        %v4742 = vpop.f32.mrf.mxu0
        %v4743 = vadd.f32 %v4694, %v4742
        %4744 = vdwg.mxu0
        %4745 = vmatpush.bf16.msra.mxu0 %v4492
        %4746 = vmatpush.bf16.msra.mxu0 %v4491
        %4747 = vmatpush.bf16.msra.mxu0 %v4490
        %4748 = vmatpush.bf16.msra.mxu0 %v4489
        %4749 = vmatpush.bf16.msra.mxu0 %v4488
        %4750 = vmatpush.bf16.msra.mxu0 %v4487
        %4751 = vmatpush.bf16.msra.mxu0 %v4486
        %4752 = vmatpush.bf16.msra.mxu0 %v4485
        %4753 = vmatmul.bf16.gmra.mxu0 %v4169
        %v4754 = vpop.f32.mrf.mxu0
        %v4755 = vadd.f32 %v4706, %v4754
        %v4756 = vpop.f32.mrf.mxu0
        %v4757 = vadd.f32 %v4708, %v4756
        %4758 = vmatmul.bf16.gmra.mxu0 %v4175
        %v4759 = vpop.f32.mrf.mxu0
        %v4760 = vadd.f32 %v4711, %v4759
        %v4761 = vpop.f32.mrf.mxu0
        %v4762 = vadd.f32 %v4713, %v4761
        %4763 = vmatmul.bf16.gmra.mxu0 %v4181
        %v4764 = vpop.f32.mrf.mxu0
        %v4765 = vadd.f32 %v4716, %v4764
        %v4766 = vpop.f32.mrf.mxu0
        %v4767 = vadd.f32 %v4718, %v4766
        %4768 = vmatmul.bf16.gmra.mxu0 %v4187
        %v4769 = vpop.f32.mrf.mxu0
        %v4770 = vadd.f32 %v4721, %v4769
        %v4771 = vpop.f32.mrf.mxu0
        %v4772 = vadd.f32 %v4723, %v4771
        %4773 = vmatmul.bf16.gmra.mxu0 %v4193
        %v4774 = vpop.f32.mrf.mxu0
        %v4775 = vadd.f32 %v4726, %v4774
        %v4776 = vpop.f32.mrf.mxu0
        %v4777 = vadd.f32 %v4728, %v4776
        %4778 = vmatmul.bf16.gmra.mxu0 %v4199
        %v4779 = vpop.f32.mrf.mxu0
        %v4780 = vadd.f32 %v4731, %v4779
        %v4781 = vpop.f32.mrf.mxu0
        %v4782 = vadd.f32 %v4733, %v4781
        %4783 = vmatmul.bf16.gmra.mxu0 %v4205
        %v4784 = vpop.f32.mrf.mxu0
        %v4785 = vadd.f32 %v4736, %v4784
        %v4786 = vpop.f32.mrf.mxu0
        %v4787 = vadd.f32 %v4738, %v4786
        %4788 = vmatmul.bf16.gmra.mxu0 %v4211
        %v4789 = vpop.f32.mrf.mxu0
        %v4790 = vadd.f32 %v4741, %v4789
        %v4791 = vpop.f32.mrf.mxu0
        %v4792 = vadd.f32 %v4743, %v4791
        %4793 = vdwg.mxu0
        %4794 = vmatpush.bf16.msra.mxu0 %v4500
        %4795 = vmatpush.bf16.msra.mxu0 %v4499
        %4796 = vmatpush.bf16.msra.mxu0 %v4498
        %4797 = vmatpush.bf16.msra.mxu0 %v4497
        %4798 = vmatpush.bf16.msra.mxu0 %v4496
        %4799 = vmatpush.bf16.msra.mxu0 %v4495
        %4800 = vmatpush.bf16.msra.mxu0 %v4494
        %4801 = vmatpush.bf16.msra.mxu0 %v4493
        %4802 = vmatmul.bf16.gmra.mxu0 %v4170
        %v4803 = vpop.f32.mrf.mxu0
        %v4804 = vadd.f32 %v4755, %v4803
        %v4805 = vpop.f32.mrf.mxu0
        %v4806 = vadd.f32 %v4757, %v4805
        %4807 = vmatmul.bf16.gmra.mxu0 %v4176
        %v4808 = vpop.f32.mrf.mxu0
        %v4809 = vadd.f32 %v4760, %v4808
        %v4810 = vpop.f32.mrf.mxu0
        %v4811 = vadd.f32 %v4762, %v4810
        %4812 = vmatmul.bf16.gmra.mxu0 %v4182
        %v4813 = vpop.f32.mrf.mxu0
        %v4814 = vadd.f32 %v4765, %v4813
        %v4815 = vpop.f32.mrf.mxu0
        %v4816 = vadd.f32 %v4767, %v4815
        %4817 = vmatmul.bf16.gmra.mxu0 %v4188
        %v4818 = vpop.f32.mrf.mxu0
        %v4819 = vadd.f32 %v4770, %v4818
        %v4820 = vpop.f32.mrf.mxu0
        %v4821 = vadd.f32 %v4772, %v4820
        %4822 = vmatmul.bf16.gmra.mxu0 %v4194
        %v4823 = vpop.f32.mrf.mxu0
        %v4824 = vadd.f32 %v4775, %v4823
        %v4825 = vpop.f32.mrf.mxu0
        %v4826 = vadd.f32 %v4777, %v4825
        %4827 = vmatmul.bf16.gmra.mxu0 %v4200
        %v4828 = vpop.f32.mrf.mxu0
        %v4829 = vadd.f32 %v4780, %v4828
        %v4830 = vpop.f32.mrf.mxu0
        %v4831 = vadd.f32 %v4782, %v4830
        %4832 = vmatmul.bf16.gmra.mxu0 %v4206
        %v4833 = vpop.f32.mrf.mxu0
        %v4834 = vadd.f32 %v4785, %v4833
        %v4835 = vpop.f32.mrf.mxu0
        %v4836 = vadd.f32 %v4787, %v4835
        %4837 = vmatmul.bf16.gmra.mxu0 %v4212
        %v4838 = vpop.f32.mrf.mxu0
        %v4839 = vadd.f32 %v4790, %v4838
        %v4840 = vpop.f32.mrf.mxu0
        %v4841 = vadd.f32 %v4792, %v4840
        %4842 = vdwg.mxu0
        %v4843 = vld [vmem:[#allocation3 + $0x8] sm:$0xc]
        %v4844 = vld [vmem:[#allocation3 + $0xc] sm:$0xf]
        %v4845 = vld [vmem:[#allocation3 + $0x10] sm:$0xf]
        %v4846 = vld [vmem:[#allocation3 + $0x14] sm:$0xf]
        %v4847 = vld [vmem:[#allocation3 + $0x18] sm:$0xf]
        %v4848 = vld [vmem:[#allocation3 + $0x1c] sm:$0xf]
        %v4849 = vld [vmem:[#allocation3 + $0x20] sm:$0xf]
        %v4850 = vld [vmem:[#allocation3 + $0x24] sm:$0xf]
        %v4851 = vld [vmem:[#allocation3 + $0x28] sm:$0xf]
        %v4852 = vld [vmem:[#allocation3 + $0x2c] sm:$0xf]
        %v4853 = vld [vmem:[#allocation3 + $0x30] sm:$0xf]
        %v4854 = vld [vmem:[#allocation3 + $0x34] sm:$0xf]
        %v4855 = vld [vmem:[#allocation3 + $0x38] sm:$0xf]
        %v4856 = vld [vmem:[#allocation3 + $0x3c] sm:$0xf]
        %v4857 = vld [vmem:[#allocation3 + $0x40] sm:$0xf]
        %v4858 = vld [vmem:[#allocation3 + $0x44] sm:$0xf]
        %v4859 = vld [vmem:[#allocation3 + $0x48] sm:$0x3]
        %v4860 = vunpack.c.l.bf16 %v4843
        %v4861 = vunpack.c.l.bf16 %v4844
        %v4862 = vunpack.c.l.bf16 %v4845
        %v4863 = vunpack.c.l.bf16 %v4846
        %v4864 = vunpack.c.l.bf16 %v4847
        %v4865 = vunpack.c.l.bf16 %v4848
        %v4866 = vunpack.c.l.bf16 %v4849
        %v4867 = vunpack.c.l.bf16 %v4850
        %v4868 = vunpack.c.l.bf16 %v4851
        %v4869 = vunpack.c.l.bf16 %v4852
        %v4870 = vunpack.c.l.bf16 %v4853
        %v4871 = vunpack.c.l.bf16 %v4854
        %v4872 = vunpack.c.l.bf16 %v4855
        %v4873 = vunpack.c.l.bf16 %v4856
        %v4874 = vunpack.c.l.bf16 %v4857
        %v4875 = vunpack.c.l.bf16 %v4858
        %v4876 = vunpack.c.l.bf16 %v4859
        %v4894 = vrot.slane %v4860, 4
        %v4895 = vrot.slane %v4861, 4
        %v4896 = vsel %vm2801, %v4894, %v4895
        %v4897 = vrot.slane %v4862, 4
        %v4898 = vsel %vm2801, %v4895, %v4897
        %v4899 = vrot.slane %v4863, 4
        %v4900 = vsel %vm2801, %v4897, %v4899
        %v4901 = vrot.slane %v4864, 4
        %v4902 = vsel %vm2801, %v4899, %v4901
        %v4903 = vrot.slane %v4865, 4
        %v4904 = vsel %vm2801, %v4901, %v4903
        %v4905 = vrot.slane %v4866, 4
        %v4906 = vsel %vm2801, %v4903, %v4905
        %v4907 = vrot.slane %v4867, 4
        %v4908 = vsel %vm2801, %v4905, %v4907
        %v4909 = vrot.slane %v4868, 4
        %v4910 = vsel %vm2801, %v4907, %v4909
        %v4911 = vrot.slane %v4869, 4
        %v4912 = vsel %vm2801, %v4909, %v4911
        %v4913 = vrot.slane %v4870, 4
        %v4914 = vsel %vm2801, %v4911, %v4913
        %v4915 = vrot.slane %v4871, 4
        %v4916 = vsel %vm2801, %v4913, %v4915
        %v4917 = vrot.slane %v4872, 4
        %v4918 = vsel %vm2801, %v4915, %v4917
        %v4919 = vrot.slane %v4873, 4
        %v4920 = vsel %vm2801, %v4917, %v4919
        %v4921 = vrot.slane %v4874, 4
        %v4922 = vsel %vm2801, %v4919, %v4921
        %v4923 = vrot.slane %v4875, 4
        %v4924 = vsel %vm2801, %v4921, %v4923
        %v4925 = vrot.slane %v4876, 4
        %v4926 = vsel %vm2801, %v4923, %v4925
        %v4943 = vadd.f32 %v4804, %v4896
        %v4944 = vadd.f32 %v4806, %v4898
        %v4945 = vadd.f32 %v4809, %v4900
        %v4946 = vadd.f32 %v4811, %v4902
        %v4947 = vadd.f32 %v4814, %v4904
        %v4948 = vadd.f32 %v4816, %v4906
        %v4949 = vadd.f32 %v4819, %v4908
        %v4950 = vadd.f32 %v4821, %v4910
        %v4951 = vadd.f32 %v4824, %v4912
        %v4952 = vadd.f32 %v4826, %v4914
        %v4953 = vadd.f32 %v4829, %v4916
        %v4954 = vadd.f32 %v4831, %v4918
        %v4955 = vadd.f32 %v4834, %v4920
        %v4956 = vadd.f32 %v4836, %v4922
        %v4957 = vadd.f32 %v4839, %v4924
        %v4958 = vadd.f32 %v4841, %v4926
        %v4959 = vmax.f32 %v4943, 0.0
        %v4960 = vmax.f32 %v4944, 0.0
        %v4961 = vmax.f32 %v4945, 0.0
        %v4962 = vmax.f32 %v4946, 0.0
        %v4963 = vmax.f32 %v4947, 0.0
        %v4964 = vmax.f32 %v4948, 0.0
        %v4965 = vmax.f32 %v4949, 0.0
        %v4966 = vmax.f32 %v4950, 0.0
        %v4967 = vmax.f32 %v4951, 0.0
        %v4968 = vmax.f32 %v4952, 0.0
        %v4969 = vmax.f32 %v4953, 0.0
        %v4970 = vmax.f32 %v4954, 0.0
        %v4971 = vmax.f32 %v4955, 0.0
        %v4972 = vmax.f32 %v4956, 0.0
        %v4973 = vmax.f32 %v4957, 0.0
        %v4974 = vmax.f32 %v4958, 0.0
        %v4975 = vmin.f32 %v4959, 1.0
        %v4976 = vmin.f32 %v4960, 1.0
        %v4977 = vmin.f32 %v4961, 1.0
        %v4978 = vmin.f32 %v4962, 1.0
        %v4979 = vmin.f32 %v4963, 1.0
        %v4980 = vmin.f32 %v4964, 1.0
        %v4981 = vmin.f32 %v4965, 1.0
        %v4982 = vmin.f32 %v4966, 1.0
        %v4983 = vmin.f32 %v4967, 1.0
        %v4984 = vmin.f32 %v4968, 1.0
        %v4985 = vmin.f32 %v4969, 1.0
        %v4986 = vmin.f32 %v4970, 1.0
        %v4987 = vmin.f32 %v4971, 1.0
        %v4988 = vmin.f32 %v4972, 1.0
        %v4989 = vmin.f32 %v4973, 1.0
        %v4990 = vmin.f32 %v4974, 1.0
        %v4991 = vsub.f32 1.0, %v4975
        %v4992 = vsub.f32 1.0, %v4976
        %v4993 = vsub.f32 1.0, %v4977
        %v4994 = vsub.f32 1.0, %v4978
        %v4995 = vsub.f32 1.0, %v4979
        %v4996 = vsub.f32 1.0, %v4980
        %v4997 = vsub.f32 1.0, %v4981
        %v4998 = vsub.f32 1.0, %v4982
        %v4999 = vsub.f32 1.0, %v4983
        %v5000 = vsub.f32 1.0, %v4984
        %v5001 = vsub.f32 1.0, %v4985
        %v5002 = vsub.f32 1.0, %v4986
        %v5003 = vsub.f32 1.0, %v4987
        %v5004 = vsub.f32 1.0, %v4988
        %v5005 = vsub.f32 1.0, %v4989
        %v5006 = vsub.f32 1.0, %v4990
        %v5007 = vpack.c.bf16 %v4992, %v4991
        %v5008 = vpack.c.bf16 %v4994, %v4993
        %v5009 = vpack.c.bf16 %v4996, %v4995
        %v5010 = vpack.c.bf16 %v4998, %v4997
        %v5011 = vpack.c.bf16 %v5000, %v4999
        %v5012 = vpack.c.bf16 %v5002, %v5001
        %v5013 = vpack.c.bf16 %v5004, %v5003
        %v5014 = vpack.c.bf16 %v5006, %v5005
        %v5031 = vunpack.c.l.b16 %v517
        %v5032 = vunpack.c.l.b16 %v518
        %v5033 = vunpack.c.l.b16 %v519
        %v5034 = vunpack.c.l.b16 %v520
        %v5035 = vunpack.c.l.b16 %v521
        %v5036 = vunpack.c.l.b16 %v522
        %v5037 = vunpack.c.l.b16 %v523
        %v5038 = vunpack.c.l.b16 %v524
        %v5039 = vunpack.c.l.b16 %v525
        %v5040 = vunpack.c.l.b16 %v526
        %v5041 = vunpack.c.l.b16 %v527
        %v5042 = vunpack.c.l.b16 %v528
        %v5043 = vunpack.c.l.b16 %v529
        %v5044 = vunpack.c.l.b16 %v530
        %v5045 = vunpack.c.l.b16 %v531
        %v5046 = vunpack.c.l.b16 %v532
        %v5047 = vpack.c.b16 %v5032, %v5031
        %v5048 = vpack.c.b16 %v5034, %v5033
        %v5049 = vpack.c.b16 %v5036, %v5035
        %v5050 = vpack.c.b16 %v5038, %v5037
        %v5051 = vpack.c.b16 %v5040, %v5039
        %v5052 = vpack.c.b16 %v5042, %v5041
        %v5053 = vpack.c.b16 %v5044, %v5043
        %v5054 = vpack.c.b16 %v5046, %v5045
        %5063 = vmatpush.bf16.msra.mxu0 %v5014
        %5064 = vmatpush.bf16.msra.mxu0 %v5013
        %5065 = vmatpush.bf16.msra.mxu0 %v5012
        %5066 = vmatpush.bf16.msra.mxu0 %v5011
        %5067 = vmatpush.bf16.msra.mxu0 %v5010
        %5068 = vmatpush.bf16.msra.mxu0 %v5009
        %5069 = vmatpush.bf16.msra.mxu0 %v5008
        %5070 = vmatpush.bf16.msra.mxu0 %v5007
        %5071 = vmatmul.bf16.gmra.mxu0 %v5047
        %v5072 = vpop.f32.mrf.mxu0
        %v5073 = vadd.f32 0.0, %v5072
        %v5074 = vpop.f32.mrf.mxu0
        %v5075 = vadd.f32 0.0, %v5074
        %5076 = vmatmul.bf16.gmra.mxu0 %v5048
        %v5077 = vpop.f32.mrf.mxu0
        %v5078 = vadd.f32 0.0, %v5077
        %v5079 = vpop.f32.mrf.mxu0
        %v5080 = vadd.f32 0.0, %v5079
        %5081 = vmatmul.bf16.gmra.mxu0 %v5049
        %v5082 = vpop.f32.mrf.mxu0
        %v5083 = vadd.f32 0.0, %v5082
        %v5084 = vpop.f32.mrf.mxu0
        %v5085 = vadd.f32 0.0, %v5084
        %5086 = vmatmul.bf16.gmra.mxu0 %v5050
        %v5087 = vpop.f32.mrf.mxu0
        %v5088 = vadd.f32 0.0, %v5087
        %v5089 = vpop.f32.mrf.mxu0
        %v5090 = vadd.f32 0.0, %v5089
        %5091 = vmatmul.bf16.gmra.mxu0 %v5051
        %v5092 = vpop.f32.mrf.mxu0
        %v5093 = vadd.f32 0.0, %v5092
        %v5094 = vpop.f32.mrf.mxu0
        %v5095 = vadd.f32 0.0, %v5094
        %5096 = vmatmul.bf16.gmra.mxu0 %v5052
        %v5097 = vpop.f32.mrf.mxu0
        %v5098 = vadd.f32 0.0, %v5097
        %v5099 = vpop.f32.mrf.mxu0
        %v5100 = vadd.f32 0.0, %v5099
        %5101 = vmatmul.bf16.gmra.mxu0 %v5053
        %v5102 = vpop.f32.mrf.mxu0
        %v5103 = vadd.f32 0.0, %v5102
        %v5104 = vpop.f32.mrf.mxu0
        %v5105 = vadd.f32 0.0, %v5104
        %5106 = vmatmul.bf16.gmra.mxu0 %v5054
        %v5107 = vpop.f32.mrf.mxu0
        %v5108 = vadd.f32 0.0, %v5107
        %v5109 = vpop.f32.mrf.mxu0
        %v5110 = vadd.f32 0.0, %v5109
        %5111 = vdwg.mxu0
        %v5112 = vadd.f32 %v4991, %v5073
        %v5113 = vadd.f32 %v4992, %v5075
        %v5114 = vadd.f32 %v4993, %v5078
        %v5115 = vadd.f32 %v4994, %v5080
        %v5116 = vadd.f32 %v4995, %v5083
        %v5117 = vadd.f32 %v4996, %v5085
        %v5118 = vadd.f32 %v4997, %v5088
        %v5119 = vadd.f32 %v4998, %v5090
        %v5120 = vadd.f32 %v4999, %v5093
        %v5121 = vadd.f32 %v5000, %v5095
        %v5122 = vadd.f32 %v5001, %v5098
        %v5123 = vadd.f32 %v5002, %v5100
        %v5124 = vadd.f32 %v5003, %v5103
        %v5125 = vadd.f32 %v5004, %v5105
        %v5126 = vadd.f32 %v5005, %v5108
        %v5127 = vadd.f32 %v5006, %v5110
        %5128 = vmatpush.bf16.msra.mxu0 %v5054
        %5129 = vmatpush.bf16.msra.mxu0 %v5053
        %5130 = vmatpush.bf16.msra.mxu0 %v5052
        %5131 = vmatpush.bf16.msra.mxu0 %v5051
        %5132 = vmatpush.bf16.msra.mxu0 %v5050
        %5133 = vmatpush.bf16.msra.mxu0 %v5049
        %5134 = vmatpush.bf16.msra.mxu0 %v5048
        %5135 = vmatpush.bf16.msra.mxu0 %v5047
        %5136 = vmatmul.bf16.gmra.mxu0 %v5007
        %v5137 = vpop.f32.mrf.mxu0
        %v5138 = vadd.f32 0.0, %v5137
        %v5139 = vpop.f32.mrf.mxu0
        %v5140 = vadd.f32 0.0, %v5139
        %5141 = vmatmul.bf16.gmra.mxu0 %v5008
        %v5142 = vpop.f32.mrf.mxu0
        %v5143 = vadd.f32 0.0, %v5142
        %v5144 = vpop.f32.mrf.mxu0
        %v5145 = vadd.f32 0.0, %v5144
        %5146 = vmatmul.bf16.gmra.mxu0 %v5009
        %v5147 = vpop.f32.mrf.mxu0
        %v5148 = vadd.f32 0.0, %v5147
        %v5149 = vpop.f32.mrf.mxu0
        %v5150 = vadd.f32 0.0, %v5149
        %5151 = vmatmul.bf16.gmra.mxu0 %v5010
        %v5152 = vpop.f32.mrf.mxu0
        %v5153 = vadd.f32 0.0, %v5152
        %v5154 = vpop.f32.mrf.mxu0
        %v5155 = vadd.f32 0.0, %v5154
        %5156 = vmatmul.bf16.gmra.mxu0 %v5011
        %v5157 = vpop.f32.mrf.mxu0
        %v5158 = vadd.f32 0.0, %v5157
        %v5159 = vpop.f32.mrf.mxu0
        %v5160 = vadd.f32 0.0, %v5159
        %5161 = vmatmul.bf16.gmra.mxu0 %v5012
        %v5162 = vpop.f32.mrf.mxu0
        %v5163 = vadd.f32 0.0, %v5162
        %v5164 = vpop.f32.mrf.mxu0
        %v5165 = vadd.f32 0.0, %v5164
        %5166 = vmatmul.bf16.gmra.mxu0 %v5013
        %v5167 = vpop.f32.mrf.mxu0
        %v5168 = vadd.f32 0.0, %v5167
        %v5169 = vpop.f32.mrf.mxu0
        %v5170 = vadd.f32 0.0, %v5169
        %5171 = vmatmul.bf16.gmra.mxu0 %v5014
        %v5172 = vpop.f32.mrf.mxu0
        %v5173 = vadd.f32 0.0, %v5172
        %v5174 = vpop.f32.mrf.mxu0
        %v5175 = vadd.f32 0.0, %v5174
        %5176 = vdwg.mxu0
        %v5177 = vadd.f32 %v5112, %v5138
        %v5178 = vadd.f32 %v5113, %v5140
        %v5179 = vadd.f32 %v5114, %v5143
        %v5180 = vadd.f32 %v5115, %v5145
        %v5181 = vadd.f32 %v5116, %v5148
        %v5182 = vadd.f32 %v5117, %v5150
        %v5183 = vadd.f32 %v5118, %v5153
        %v5184 = vadd.f32 %v5119, %v5155
        %v5185 = vadd.f32 %v5120, %v5158
        %v5186 = vadd.f32 %v5121, %v5160
        %v5187 = vadd.f32 %v5122, %v5163
        %v5188 = vadd.f32 %v5123, %v5165
        %v5189 = vadd.f32 %v5124, %v5168
        %v5190 = vadd.f32 %v5125, %v5170
        %v5191 = vadd.f32 %v5126, %v5173
        %v5192 = vadd.f32 %v5127, %v5175
        %v5193 = vmax.f32 %v5177, 0.0
        %v5194 = vmax.f32 %v5178, 0.0
        %v5195 = vmax.f32 %v5179, 0.0
        %v5196 = vmax.f32 %v5180, 0.0
        %v5197 = vmax.f32 %v5181, 0.0
        %v5198 = vmax.f32 %v5182, 0.0
        %v5199 = vmax.f32 %v5183, 0.0
        %v5200 = vmax.f32 %v5184, 0.0
        %v5201 = vmax.f32 %v5185, 0.0
        %v5202 = vmax.f32 %v5186, 0.0
        %v5203 = vmax.f32 %v5187, 0.0
        %v5204 = vmax.f32 %v5188, 0.0
        %v5205 = vmax.f32 %v5189, 0.0
        %v5206 = vmax.f32 %v5190, 0.0
        %v5207 = vmax.f32 %v5191, 0.0
        %v5208 = vmax.f32 %v5192, 0.0
        %v5209 = vmin.f32 %v5193, 1.0
        %v5210 = vmin.f32 %v5194, 1.0
        %v5211 = vmin.f32 %v5195, 1.0
        %v5212 = vmin.f32 %v5196, 1.0
        %v5213 = vmin.f32 %v5197, 1.0
        %v5214 = vmin.f32 %v5198, 1.0
        %v5215 = vmin.f32 %v5199, 1.0
        %v5216 = vmin.f32 %v5200, 1.0
        %v5217 = vmin.f32 %v5201, 1.0
        %v5218 = vmin.f32 %v5202, 1.0
        %v5219 = vmin.f32 %v5203, 1.0
        %v5220 = vmin.f32 %v5204, 1.0
        %v5221 = vmin.f32 %v5205, 1.0
        %v5222 = vmin.f32 %v5206, 1.0
        %v5223 = vmin.f32 %v5207, 1.0
        %v5224 = vmin.f32 %v5208, 1.0
        %v5225 = vsub.f32 %v5209, %v4991
        %v5226 = vsub.f32 %v5210, %v4992
        %v5227 = vsub.f32 %v5211, %v4993
        %v5228 = vsub.f32 %v5212, %v4994
        %v5229 = vsub.f32 %v5213, %v4995
        %v5230 = vsub.f32 %v5214, %v4996
        %v5231 = vsub.f32 %v5215, %v4997
        %v5232 = vsub.f32 %v5216, %v4998
        %v5233 = vsub.f32 %v5217, %v4999
        %v5234 = vsub.f32 %v5218, %v5000
        %v5235 = vsub.f32 %v5219, %v5001
        %v5236 = vsub.f32 %v5220, %v5002
        %v5237 = vsub.f32 %v5221, %v5003
        %v5238 = vsub.f32 %v5222, %v5004
        %v5239 = vsub.f32 %v5223, %v5005
        %v5240 = vsub.f32 %v5224, %v5006
        %vm5241 = vcmp.gt.f32.partialorder %v1422, 0.0
        %v5242 = vsel %vm5241, %v1354, %v5225
        %v5243 = vsel %vm5241, %v1355, %v5226
        %v5244 = vsel %vm5241, %v1356, %v5227
        %v5245 = vsel %vm5241, %v1357, %v5228
        %v5246 = vsel %vm5241, %v1358, %v5229
        %v5247 = vsel %vm5241, %v1359, %v5230
        %v5248 = vsel %vm5241, %v1360, %v5231
        %v5249 = vsel %vm5241, %v1361, %v5232
        %v5250 = vsel %vm5241, %v1362, %v5233
        %v5251 = vsel %vm5241, %v1363, %v5234
        %v5252 = vsel %vm5241, %v1364, %v5235
        %v5253 = vsel %vm5241, %v1365, %v5236
        %v5254 = vsel %vm5241, %v1366, %v5237
        %v5255 = vsel %vm5241, %v1367, %v5238
        %v5256 = vsel %vm5241, %v1368, %v5239
        %v5257 = vsel %vm5241, %v1369, %v5240
        %5258 = vst [vmem:[%s504] sm:$0xff] %v5242
        %5259 = vst [vmem:[%s504 + $0x8] sm:$0xff] %v5243
        %5260 = vst [vmem:[%s504 + $0x10] sm:$0xff] %v5244
        %5261 = vst [vmem:[%s504 + $0x18] sm:$0xff] %v5245
        %5262 = vst [vmem:[%s504 + $0x20] sm:$0xff] %v5246
        %5263 = vst [vmem:[%s504 + $0x28] sm:$0xff] %v5247
        %5264 = vst [vmem:[%s504 + $0x30] sm:$0xff] %v5248
        %5265 = vst [vmem:[%s504 + $0x38] sm:$0xff] %v5249
        %5266 = vst [vmem:[%s504 + $0x40] sm:$0xff] %v5250
        %5267 = vst [vmem:[%s504 + $0x48] sm:$0xff] %v5251
        %5268 = vst [vmem:[%s504 + $0x50] sm:$0xff] %v5252
        %5269 = vst [vmem:[%s504 + $0x58] sm:$0xff] %v5253
        %5270 = vst [vmem:[%s504 + $0x60] sm:$0xff] %v5254
        %5271 = vst [vmem:[%s504 + $0x68] sm:$0xff] %v5255
        %5272 = vst [vmem:[%s504 + $0x70] sm:$0xff] %v5256
        %5273 = vst [vmem:[%s504 + $0x78] sm:$0xff] %v5257
        %5274 = vst [vmem:[%s510] sm:$0x1] %v1422
        %s5275 = sand.u32 %s224, 1
        %s5276 = scalar_lea.sflag [#allocation11], %s5275
        %s5277 = sand.u32 %s224, 1
        %s5278 = smul.addr %s5277, 128
        %s5279 = scalar_lea.vmem [#allocation20], %s5278
        %s5280 = sand.u32 %s250, 1
        %s5281 = scalar_lea.sflag [#allocation22], %s5280
        %s5282 = sand.u32 %s250, 1
        %s5283 = scalar_lea.vmem [#allocation21], %s5282
        // Predicated region
        $region73: #{tpu_custom_call.1} parent=43 // pred_check
          %p5284 = pneg %p234
        $region74: #{tpu_custom_call.1} parent=43 // pred_check_branch
          %5286 = sbr.rel (%p5284) target = $region76
        $region75: #{tpu_custom_call.1} parent=43 // pred_region
          %5288 = vsyncadd %s5276, 0
          %s5289 = smul.addr %s56, 16
          %s5290 = smul.addr %s5289, 8
          %s5291 = scalar_lea.hbm %s9, %s5290
          %s5292 = sshll.u32 %s5279, 4
          %s5293 = int_to_ptr.vmem [resolvable:$true] %s5292
          %s5294 = sshll.u32 %s5291, 4
          %s5295 = int_to_ptr.hbm [resolvable:$true] %s5294
          %5300 = dma.vmem_to_hbm [thread:$0]  %s5293, 2048, %s5295, %s5276, 128, 128, 8
        $region76: #{tpu_custom_call.1} parent=43 // pred_fallthru
          _
        // Predicated region
        $region77: #{tpu_custom_call.1} parent=43 // pred_check
          %p5301 = pneg %p260
        $region78: #{tpu_custom_call.1} parent=43 // pred_check_branch
          %5303 = sbr.rel (%p5301) target = $region80
        $region79: #{tpu_custom_call.1} parent=43 // pred_region
          %5305 = vsyncadd %s5281, 0
          %s5306 = scalar_lea.hbm %s10, %s56
          %s5308 = sshll.u32 %s5283, 4
          %s5309 = int_to_ptr.vmem [resolvable:$true] %s5308
          %s5310 = sshll.u32 %s5306, 4
          %s5311 = int_to_ptr.hbm [resolvable:$true] %s5310
          %5313 = dma.vmem_to_hbm [thread:$0]  %s5309, 16, %s5311, %s5281
        $region80: #{tpu_custom_call.1} parent=43 // pred_fallthru
          _
      $region44: #{tpu_custom_call.1} parent=5 // pred_fallthru
        _
      %p5314 = scmp.le.s32.totalorder 2, %s51
      // Predicated region
      $region81: #{tpu_custom_call.1} parent=5 // pred_check
        %p5315 = pneg %p5314
      $region82: #{tpu_custom_call.1} parent=5 // pred_check_branch
        %5317 = sbr.rel (%p5315) target = $region84
      $region83: #{tpu_custom_call.1} parent=5 // pred_region
        %s5318 = ssub.s32 %s51, 2
        // Predicated region
        $region85: #{tpu_custom_call.1} parent=83 // pred_check
          %p5319 = pneg %p240
        $region86: #{tpu_custom_call.1} parent=83 // pred_check_branch
          %5321 = sbr.rel (%p5319) target = $region88
        $region87: #{tpu_custom_call.1} parent=83 // pred_region
          %s5322 = sand.u32 %s225, 1
          %s5323 = scalar_lea.sflag [#allocation11], %s5322
          %s5324 = sand.u32 %s225, 1
          %s5325 = smul.addr %s5324, 128
          %s5326 = scalar_lea.vmem [#allocation20], %s5325
          %5328 = dma.done %s5323, 2048
        $region88: #{tpu_custom_call.1} parent=83 // pred_fallthru
          _
        // Predicated region
        $region89: #{tpu_custom_call.1} parent=83 // pred_check
          %p5329 = pneg %p266
        $region90: #{tpu_custom_call.1} parent=83 // pred_check_branch
          %5331 = sbr.rel (%p5329) target = $region92
        $region91: #{tpu_custom_call.1} parent=83 // pred_region
          %s5332 = sand.u32 %s251, 1
          %s5333 = scalar_lea.sflag [#allocation22], %s5332
          %s5334 = sand.u32 %s251, 1
          %s5335 = scalar_lea.vmem [#allocation21], %s5334
          %5337 = dma.done %s5333, 16
        $region92: #{tpu_custom_call.1} parent=83 // pred_fallthru
          _
      $region84: #{tpu_custom_call.1} parent=5 // pred_fallthru
        _
    $region6: #{tpu_custom_call.1} parent=1 // loop_footer
      %s55 = sadd.s32 1, %s51
    $region7: #{tpu_custom_call.1} parent=1 // loop_footer_branch
      %50 = sbr.rel target = $region3
    $region8: #{tpu_custom_call.1} parent=1 // loop_exit
      _
    %5338 = vsyncpa [#allocation10], 1
    %s5339 = scalar_lea.sflag [#allocation10], 1
    %5340 = vsyncpa %s5339, 1
    %5341 = vsyncpa [#allocation13], 1
    %s5342 = scalar_lea.sflag [#allocation13], 1
    %5343 = vsyncpa %s5342, 1
    %5344 = vsyncpa [#allocation16], 1
    %s5345 = scalar_lea.sflag [#allocation16], 1
    %5346 = vsyncpa %s5345, 1
    %5347 = vsyncpa [#allocation19], 1
    %5348 = vsyncpa [#allocation11], 1
    %s5349 = scalar_lea.sflag [#allocation11], 1
    %5350 = vsyncpa %s5349, 1
    %5351 = vsyncpa [#allocation22], 1
    %s5352 = scalar_lea.sflag [#allocation22], 1
    %5353 = vsyncpa %s5352, 1

</llo_original>
